<compile_context>
chip_gen: v5e
topology: v5e:2x2
jax: 0.10.0
libtpu: 0.0.40
codegen_flags: <defaults>
</compile_context>

<pallas_src>
import numpy as np

import jax
import jax.numpy as jnp
from jax import lax
from jax.experimental import pallas as pl
from jax.experimental.pallas import tpu as pltpu

# ----------------------- small synthetic CLIP-ViT config -----------------------
BATCH = 2
CHANNELS = 3
IMAGE = 16
PATCH = 8
HIDDEN = 32
HEADS = 4
HEAD_DIM = HIDDEN // HEADS
INTER = 64
LAYERS = 2
PROJ = 16
EPS = 1e-5
LOGIT_SCALE_INIT = 2.6592

GRID_SIDE = IMAGE // PATCH
NUM_PATCHES = GRID_SIDE * GRID_SIDE
SEQ = NUM_PATCHES + 1                      # +1 class token
BS = BATCH * SEQ                           # flattened (batch, seq) rows
CPP = CHANNELS * PATCH * PATCH             # flattened patch features
NUM_TOWERS = 2                             # screen, sketch

# Static host-side constants (become jit constants):
#   ATTN_BIAS: block-diagonal additive mask so flattened-row attention never crosses batches.
#   SEL:       CLS-row selection matrix (pooling via matmul).
_row_batch = np.arange(BS) // SEQ
ATTN_BIAS = jnp.asarray(
    np.where(_row_batch[:, None] == _row_batch[None, :], 0.0, -1e9), dtype=jnp.float32)
SEL = jnp.asarray(
    (np.arange(BS)[None, :] == (np.arange(BATCH) * SEQ)[:, None]).astype(np.float32))


# --------------------------------- kernels -------------------------------------
def _layernorm(x, g, b):
    mean = jnp.mean(x, axis=-1, keepdims=True)
    xc = x - mean
    var = jnp.mean(xc * xc, axis=-1, keepdims=True)
    return xc * lax.rsqrt(var + EPS) * g + b


def _tower_kernel(patches_ref, pos_cls_ref, attn_bias_ref, sel_ref,
                  patch_w_ref, pre_g_ref, pre_b_ref,
                  ln1_g_ref, ln1_b_ref, qkv_w_ref, qkv_b_ref, o_w_ref, o_b_ref,
                  ln2_g_ref, ln2_b_ref, fc1_w_ref, fc1_b_ref, fc2_w_ref, fc2_b_ref,
                  post_g_ref, post_b_ref, proj_w_ref,
                  emb_ref):
    """Whole CLIPVisionModelWithProjection forward for one tower (one grid step)."""
    scale = float(HEAD_DIM) ** -0.5
    bias = attn_bias_ref[...]                          # (BS, BS), hoisted out of the loop

    # patch-embed conv as matmul (CLS rows are zero-padded patches) + pos/CLS table
    x = jnp.dot(patches_ref[0], patch_w_ref[0], preferred_element_type=jnp.float32)
    h = x + pos_cls_ref[0]                             # (BS, HIDDEN)
    h = _layernorm(h, pre_g_ref[0], pre_b_ref[0])      # pre_layrnorm

    for l in range(LAYERS):
        # ---------------- self-attention block ----------------
        res = h
        y = _layernorm(h, ln1_g_ref[0, l], ln1_b_ref[0, l])
        o_w = o_w_ref[0, l]                            # (HIDDEN, HIDDEN)
        base = l * 3 * HEADS
        attn = None
        for hd in range(HEADS):
            q = (jnp.dot(y, qkv_w_ref[0, base + hd],
                         preferred_element_type=jnp.float32)
                 + qkv_b_ref[0, base + hd]) * scale                       # (BS, HD)
            k = (jnp.dot(y, qkv_w_ref[0, base + HEADS + hd],
                         preferred_element_type=jnp.float32)
                 + qkv_b_ref[0, base + HEADS + hd])                       # (BS, HD)
            v = (jnp.dot(y, qkv_w_ref[0, base + 2 * HEADS + hd],
                         preferred_element_type=jnp.float32)
                 + qkv_b_ref[0, base + 2 * HEADS + hd])                   # (BS, HD)

            s = jnp.dot(q, k.T, preferred_element_type=jnp.float32) + bias   # (BS, BS)
            m = jnp.max(s, axis=-1, keepdims=True)
            p = jnp.exp(s - m)
            p = p * pl.reciprocal(jnp.sum(p, axis=-1, keepdims=True), approx=True)
            o_h = jnp.dot(p, v, preferred_element_type=jnp.float32)          # (BS, HD)

            # fold head-merge + out_proj: concat_h(o_h) @ o_w == sum_h o_h @ o_w[hD:(h+1)D]
            contrib = jnp.dot(o_h, o_w[hd * HEAD_DIM:(hd + 1) * HEAD_DIM, :],
                              preferred_element_type=jnp.float32)            # (BS, HIDDEN)
            attn = contrib if attn is None else attn + contrib
        h = res + attn + o_b_ref[0, l]

        # ---------------------- MLP block ----------------------
        res = h
        y = _layernorm(h, ln2_g_ref[0, l], ln2_b_ref[0, l])
        y = jnp.dot(y, fc1_w_ref[0, l], preferred_element_type=jnp.float32) + fc1_b_ref[0, l]
        y = y * jax.nn.sigmoid(1.702 * y)               # QuickGELU
        y = jnp.dot(y, fc2_w_ref[0, l], preferred_element_type=jnp.float32) + fc2_b_ref[0, l]
        h = res + y

    # CLS pooling (selection matmul), post layernorm, visual projection (no bias)
    pooled = jnp.dot(sel_ref[...], h, preferred_element_type=jnp.float32)    # (B, HIDDEN)
    pooled = _layernorm(pooled, post_g_ref[0], post_b_ref[0])
    emb_ref[0] = jnp.dot(pooled, proj_w_ref[0], preferred_element_type=jnp.float32)


def _clip_head_kernel(emb_ref, scale_ref, loss_ref, scr_n_ref, skt_n_ref):
    scr = emb_ref[0].astype(jnp.float32)               # (B, PROJ)
    skt = emb_ref[1].astype(jnp.float32)
    scr_n = scr * lax.rsqrt(jnp.sum(scr * scr, axis=-1, keepdims=True))
    skt_n = skt * lax.rsqrt(jnp.sum(skt * skt, axis=-1, keepdims=True))
    scr_n_ref[...] = scr_n
    skt_n_ref[...] = skt_n

    logits = jnp.dot(scr_n, skt_n.T, preferred_element_type=jnp.float32) * jnp.exp(scale_ref[...])
    b = logits.shape[0]
    row = lax.broadcasted_iota(jnp.int32, (b, b), 0)
    col = lax.broadcasted_iota(jnp.int32, (b, b), 1)
    diag_mask = row == col

    # caption loss: cross_entropy(logits, arange(b)), reduction='mean'
    diag_r = jnp.sum(jnp.where(diag_mask, logits, 0.0), axis=1, keepdims=True)   # (b,1)
    m_r = jnp.max(logits, axis=1, keepdims=True)
    lse_r = m_r + jnp.log(jnp.sum(jnp.exp(logits - m_r), axis=1, keepdims=True))
    caption = jnp.sum(lse_r - diag_r, axis=0, keepdims=True) / b                 # (1,1)

    # image loss: cross_entropy(logits.T, arange(b))
    diag_c = jnp.sum(jnp.where(diag_mask, logits, 0.0), axis=0, keepdims=True)   # (1,b)
    m_c = jnp.max(logits, axis=0, keepdims=True)
    lse_c = m_c + jnp.log(jnp.sum(jnp.exp(logits - m_c), axis=0, keepdims=True))
    image = jnp.sum(lse_c - diag_c, axis=1, keepdims=True) / b                   # (1,1)

    loss_ref[...] = (caption + image) * 0.5


# ------------------------------ pallas wrappers ---------------------------------
def _tower_spec(shape):
    """BlockSpec selecting the tower slice of a (NUM_TOWERS, ...) stacked array."""
    ndim = len(shape)

    def idx(t):
        return (t,) + (0,) * (ndim - 1)

    return pl.BlockSpec((1,) + tuple(shape[1:]), idx)


def _shared_spec(shape):
    """BlockSpec for a tower-independent constant (same block every grid step)."""
    ndim = len(shape)

    def idx(t):
        return (0,) * ndim

    return pl.BlockSpec(tuple(shape), idx)


# Order must match _tower_kernel's argument list after (patches, pos_cls, attn_bias, sel).
TOWER_KEYS = ("patch_w", "pre_g", "pre_b",
              "ln1_g", "ln1_b", "qkv_w", "qkv_b", "o_w", "o_b",
              "ln2_g", "ln2_b", "fc1_w", "fc1_b", "fc2_w", "fc2_b",
              "post_g", "post_b", "proj_w")


def pallas_towers(patches, tw):
    """Run both CLIP vision towers in a single pallas_call (grid=(2,), parallel)."""
    weight_args = [tw[k] for k in TOWER_KEYS]
    in_specs = [_tower_spec(patches.shape),
                _tower_spec(tw["pos_cls"].shape),
                _shared_spec(ATTN_BIAS.shape),
                _shared_spec(SEL.shape)]
    in_specs += [_tower_spec(a.shape) for a in weight_args]

    return pl.pallas_call(
        _tower_kernel,
        out_shape=jax.ShapeDtypeStruct((NUM_TOWERS, BATCH, PROJ), jnp.float32),
        grid=(NUM_TOWERS,),
        in_specs=in_specs,
        out_specs=pl.BlockSpec((1, BATCH, PROJ), lambda t: (t, 0, 0)),
        compiler_params=pltpu.CompilerParams(dimension_semantics=("parallel",)),
    )(patches, tw["pos_cls"], ATTN_BIAS, SEL, *weight_args)


def pallas_clip_head(embeds, logit_scale):
    loss, scr_n, skt_n = pl.pallas_call(
        _clip_head_kernel,
        out_shape=(
            jax.ShapeDtypeStruct((1, 1), jnp.float32),
            jax.ShapeDtypeStruct((BATCH, PROJ), jnp.float32),
            jax.ShapeDtypeStruct((BATCH, PROJ), jnp.float32),
        ),
        in_specs=[
            pl.BlockSpec(memory_space=pltpu.MemorySpace.VMEM),
            pl.BlockSpec(memory_space=pltpu.MemorySpace.VMEM),
        ],
        out_specs=(
            pl.BlockSpec(memory_space=pltpu.MemorySpace.VMEM),
            pl.BlockSpec(memory_space=pltpu.MemorySpace.VMEM),
            pl.BlockSpec(memory_space=pltpu.MemorySpace.VMEM),
        ),
    )(embeds, logit_scale.reshape(1, 1).astype(jnp.float32))
    return loss, scr_n, skt_n


# --------------------------------- glue (JAX) -----------------------------------
def _extract_padded_patches(pixel_values):
    """NCHW -> (B*SEQ, C*P*P) patch rows; sequence position 0 of each batch is a
    zero row (the CLS slot) so patch-embed + pos/CLS add needs no in-kernel concat."""
    b = pixel_values.shape[0]
    g = GRID_SIDE
    p = pixel_values.reshape(b, CHANNELS, g, PATCH, g, PATCH)
    p = p.transpose(0, 2, 4, 1, 3, 5).reshape(b, NUM_PATCHES, CPP)
    p = jnp.pad(p, ((0, 0), (1, 0), (0, 0)))          # CLS slot -> zeros
    return p.reshape(b * SEQ, CPP)


# --------------------------------- parameters -----------------------------------
def _pack_qkv(q_w, k_w, v_w, q_b, k_b, v_b):
    """Pack per-layer q/k/v weights head-major: (L*3*HEADS, HIDDEN, HEAD_DIM)."""
    w = jnp.stack([q_w, k_w, v_w], axis=1)                          # (L, 3, H, H)
    w = w.reshape(LAYERS, 3, HIDDEN, HEADS, HEAD_DIM)
    w = jnp.transpose(w, (0, 1, 3, 2, 4))                           # (L, 3, HEADS, H, HD)
    w = w.reshape(LAYERS * 3 * HEADS, HIDDEN, HEAD_DIM)
    b = jnp.stack([q_b, k_b, v_b], axis=1)                          # (L, 3, H)
    b = b.reshape(LAYERS * 3 * HEADS, 1, HEAD_DIM)
    return w, b


def _init_tower_params(key):
    def nrm(k, shape, std=0.02):
        return (std * jax.random.normal(k, shape)).astype(jnp.float32)

    keys = jax.random.split(key, 4 + 6 * LAYERS)
    patch_w = nrm(keys[0], (CPP, HIDDEN))
    class_emb = nrm(keys[1], (HIDDEN,))
    pos_emb = nrm(keys[2], (SEQ, HIDDEN))
    proj_w = nrm(keys[3], (HIDDEN, PROJ))

    q_w, k_w, v_w, o_w, fc1_w, fc2_w = [], [], [], [], [], []
    for l in range(LAYERS):
        lk = keys[4 + 6 * l: 4 + 6 * (l + 1)]
        q_w.append(nrm(lk[0], (HIDDEN, HIDDEN)))
        k_w.append(nrm(lk[1], (HIDDEN, HIDDEN)))
        v_w.append(nrm(lk[2], (HIDDEN, HIDDEN)))
        o_w.append(nrm(lk[3], (HIDDEN, HIDDEN)))
        fc1_w.append(nrm(lk[4], (HIDDEN, INTER)))
        fc2_w.append(nrm(lk[5], (INTER, HIDDEN)))
    q_w, k_w, v_w = jnp.stack(q_w), jnp.stack(k_w), jnp.stack(v_w)
    o_w, fc1_w, fc2_w = jnp.stack(o_w), jnp.stack(fc1_w), jnp.stack(fc2_w)

    zeros_b = jnp.zeros((LAYERS, HIDDEN), jnp.float32)
    qkv_w, qkv_b = _pack_qkv(q_w, k_w, v_w, zeros_b, zeros_b, zeros_b)

    # class embedding folded into position row 0, tiled over the batch (static BATCH)
    pos_cls = pos_emb.at[0].add(class_emb)
    pos_cls = jnp.tile(pos_cls, (BATCH, 1))                         # (BS, HIDDEN)

    return {
        "patch_w": patch_w,                                         # (CPP, H)
        "pos_cls": pos_cls,                                         # (BS, H)
        "pre_g": jnp.ones((1, HIDDEN), jnp.float32),
        "pre_b": jnp.zeros((1, HIDDEN), jnp.float32),
        "ln1_g": jnp.ones((LAYERS, 1, HIDDEN), jnp.float32),
        "ln1_b": jnp.zeros((LAYERS, 1, HIDDEN), jnp.float32),
        "qkv_w": qkv_w,                                             # (L*3*HEADS, H, HD)
        "qkv_b": qkv_b,                                             # (L*3*HEADS, 1, HD)
        "o_w": o_w,                                                 # (L, H, H)
        "o_b": jnp.zeros((LAYERS, 1, HIDDEN), jnp.float32),
        "ln2_g": jnp.ones((LAYERS, 1, HIDDEN), jnp.float32),
        "ln2_b": jnp.zeros((LAYERS, 1, HIDDEN), jnp.float32),
        "fc1_w": fc1_w,                                             # (L, H, INTER)
        "fc1_b": jnp.zeros((LAYERS, 1, INTER), jnp.float32),
        "fc2_w": fc2_w,                                             # (L, INTER, H)
        "fc2_b": jnp.zeros((LAYERS, 1, HIDDEN), jnp.float32),
        "post_g": jnp.ones((1, HIDDEN), jnp.float32),
        "post_b": jnp.zeros((1, HIDDEN), jnp.float32),
        "proj_w": proj_w,                                           # (H, PROJ)
    }


def init_params(key):
    k_screen, k_sketch = jax.random.split(key)
    screen = _init_tower_params(k_screen)   # frozen in torch (requires_grad=False) — fwd identical
    sketch = _init_tower_params(k_sketch)
    towers = jax.tree_util.tree_map(lambda a, b: jnp.stack([a, b], axis=0), screen, sketch)
    return {"towers": towers,
            "logit_scale": jnp.asarray(LOGIT_SCALE_INIT, jnp.float32)}


# ----------------------------------- forward ------------------------------------
@jax.jit
def vit_for_sketch_matching(screen_pixel_values, sketch_pixel_values, params):
    patches = jnp.stack([_extract_padded_patches(screen_pixel_values),
                         _extract_padded_patches(sketch_pixel_values)], axis=0)  # (2, BS, CPP)
    embeds = pallas_towers(patches, params["towers"])                            # (2, B, PROJ)
    loss, scr_n, skt_n = pallas_clip_head(embeds, params["logit_scale"])
    # key name 'scree_embeds' intentionally mirrors the PyTorch module's typo
    return {"loss": loss[0, 0], "scree_embeds": scr_n, "sketch_embeds": skt_n}


if __name__ == "__main__":
    root = jax.random.PRNGKey(0)
    k_params, k_screen, k_sketch = jax.random.split(root, 3)
    params = init_params(k_params)

    screen_pixel_values = jax.random.normal(k_screen, (BATCH, CHANNELS, IMAGE, IMAGE), jnp.float32)
    sketch_pixel_values = jax.random.normal(k_sketch, (BATCH, CHANNELS, IMAGE, IMAGE), jnp.float32)

    out = vit_for_sketch_matching(screen_pixel_values, sketch_pixel_values, params)
    out = jax.block_until_ready(out)

    assert out["scree_embeds"].shape == (BATCH, PROJ)
    assert out["sketch_embeds"].shape == (BATCH, PROJ)
    assert bool(jnp.isfinite(out["loss"]))
    print("KERNEL_OK")
</pallas_src>

<mosaic_0001>
module attributes {stable_mosaic.version = 11 : i64} {
  func.func @_clip_head_kernel(%arg0: memref<2x2x16xf32, #tpu.memory_space<vmem>>, %arg1: memref<1x1xf32, #tpu.memory_space<vmem>>, %arg2: memref<1x1xf32, #tpu.memory_space<vmem>>, %arg3: memref<2x16xf32, #tpu.memory_space<vmem>>, %arg4: memref<2x16xf32, #tpu.memory_space<vmem>>) attributes {dimension_semantics = [], scalar_prefetch = 0 : i64, scratch_operands = 0 : i64, tpu.core_type = #tpu.core_type<tc>} {
    %c0 = arith.constant 0 : index
    %c0_0 = arith.constant 0 : index
    %c0_1 = arith.constant 0 : index
    %0 = vector.load %arg0[%c0, %c0_0, %c0_1] : memref<2x2x16xf32, #tpu.memory_space<vmem>>, vector<1x2x16xf32>
    %1 = vector.shape_cast %0 : vector<1x2x16xf32> to vector<2x16xf32>
    %c1 = arith.constant 1 : index
    %c0_2 = arith.constant 0 : index
    %c0_3 = arith.constant 0 : index
    %2 = vector.load %arg0[%c1, %c0_2, %c0_3] : memref<2x2x16xf32, #tpu.memory_space<vmem>>, vector<1x2x16xf32>
    %3 = vector.shape_cast %2 : vector<1x2x16xf32> to vector<2x16xf32>
    %4 = arith.mulf %1, %1 : vector<2x16xf32>
    %cst = arith.constant dense<0.000000e+00> : vector<2xf32>
    %5 = vector.multi_reduction <add>, %4, %cst [1] : vector<2x16xf32> to vector<2xf32>
    %6 = vector.shape_cast %5 : vector<2xf32> to vector<2x1xf32>
    %7 = math.rsqrt %6 : vector<2x1xf32>
    %8 = vector.broadcast %7 : vector<2x1xf32> to vector<2x16xf32>
    %9 = arith.mulf %1, %8 : vector<2x16xf32>
    %10 = arith.mulf %3, %3 : vector<2x16xf32>
    %cst_4 = arith.constant dense<0.000000e+00> : vector<2xf32>
    %11 = vector.multi_reduction <add>, %10, %cst_4 [1] : vector<2x16xf32> to vector<2xf32>
    %12 = vector.shape_cast %11 : vector<2xf32> to vector<2x1xf32>
    %13 = math.rsqrt %12 : vector<2x1xf32>
    %14 = vector.broadcast %13 : vector<2x1xf32> to vector<2x16xf32>
    %15 = arith.mulf %3, %14 : vector<2x16xf32>
    %c0_5 = arith.constant 0 : index
    %c0_6 = arith.constant 0 : index
    %16 = vector.load %arg3[%c0_5, %c0_6] : memref<2x16xf32, #tpu.memory_space<vmem>>, vector<2x16xf32>
    tpu.vector_store %arg3[%c0_5, %c0_6], %9 {strides = array<i32>} : memref<2x16xf32, #tpu.memory_space<vmem>>, vector<2x16xf32>,
    %c0_7 = arith.constant 0 : index
    %c0_8 = arith.constant 0 : index
    %17 = vector.load %arg4[%c0_7, %c0_8] : memref<2x16xf32, #tpu.memory_space<vmem>>, vector<2x16xf32>
    tpu.vector_store %arg4[%c0_7, %c0_8], %15 {strides = array<i32>} : memref<2x16xf32, #tpu.memory_space<vmem>>, vector<2x16xf32>,
    %18 = tpu.transpose %15, [1, 0] : vector<2x16xf32> -> vector<16x2xf32>
    %cst_9 = arith.constant dense<0.000000e+00> : vector<2x2xf32>
    %19 = tpu.matmul %9, %18, %cst_9 {dimension_numbers = #tpu.dot_dimension_numbers<[1], [0], [0], [1], [0, 0, 1, 1], [], []>} : vector<2x16xf32>, vector<16x2xf32>, vector<2x2xf32> -> vector<2x2xf32>
    %c0_10 = arith.constant 0 : index
    %c0_11 = arith.constant 0 : index
    %20 = vector.load %arg1[%c0_10, %c0_11] : memref<1x1xf32, #tpu.memory_space<vmem>>, vector<1x1xf32>
    %21 = math.exp %20 : vector<1x1xf32>
    %22 = vector.broadcast %21 : vector<1x1xf32> to vector<2x2xf32>
    %23 = arith.mulf %19, %22 : vector<2x2xf32>
    %24 = tpu.iota {dimensions = array<i32: 0>} : vector<2x2xi32>
    %25 = tpu.iota {dimensions = array<i32: 1>} : vector<2x2xi32>
    %26 = arith.cmpi eq, %24, %25 : vector<2x2xi32>
    %cst_12 = arith.constant 0.000000e+00 : f32
    %27 = vector.broadcast %cst_12 : f32 to vector<2x2xf32>
    %28 = arith.select %26, %23, %27 : vector<2x2xi1>, vector<2x2xf32>
    %cst_13 = arith.constant dense<0.000000e+00> : vector<2xf32>
    %29 = vector.multi_reduction <add>, %28, %cst_13 [1] : vector<2x2xf32> to vector<2xf32>
    %30 = vector.shape_cast %29 : vector<2xf32> to vector<2x1xf32>
    %cst_14 = arith.constant dense<0xFF800000> : vector<2xf32>
    %31 = vector.multi_reduction <maximumf>, %23, %cst_14 [1] : vector<2x2xf32> to vector<2xf32>
    %32 = vector.shape_cast %31 : vector<2xf32> to vector<2x1xf32>
    %33 = vector.broadcast %32 : vector<2x1xf32> to vector<2x2xf32>
    %34 = arith.subf %23, %33 : vector<2x2xf32>
    %35 = math.exp %34 : vector<2x2xf32>
    %cst_15 = arith.constant dense<0.000000e+00> : vector<2xf32>
    %36 = vector.multi_reduction <add>, %35, %cst_15 [1] : vector<2x2xf32> to vector<2xf32>
    %37 = vector.shape_cast %36 : vector<2xf32> to vector<2x1xf32>
    %38 = math.log %37 : vector<2x1xf32>
    %39 = arith.addf %32, %38 : vector<2x1xf32>
    %40 = arith.subf %39, %30 : vector<2x1xf32>
    %cst_16 = arith.constant dense<0.000000e+00> : vector<1xf32>
    %41 = vector.multi_reduction <add>, %40, %cst_16 [0] : vector<2x1xf32> to vector<1xf32>
    %42 = vector.shape_cast %41 : vector<1xf32> to vector<1x1xf32>
    %cst_17 = arith.constant 2.000000e+00 : f32
    %43 = vector.broadcast %cst_17 : f32 to vector<1x1xf32>
    %44 = arith.divf %42, %43 : vector<1x1xf32>
    %cst_18 = arith.constant 0.000000e+00 : f32
    %45 = vector.broadcast %cst_18 : f32 to vector<2x2xf32>
    %46 = arith.select %26, %23, %45 : vector<2x2xi1>, vector<2x2xf32>
    %cst_19 = arith.constant dense<0.000000e+00> : vector<2xf32>
    %47 = vector.multi_reduction <add>, %46, %cst_19 [0] : vector<2x2xf32> to vector<2xf32>
    %48 = vector.shape_cast %47 : vector<2xf32> to vector<1x2xf32>
    %cst_20 = arith.constant dense<0xFF800000> : vector<2xf32>
    %49 = vector.multi_reduction <maximumf>, %23, %cst_20 [0] : vector<2x2xf32> to vector<2xf32>
    %50 = vector.shape_cast %49 : vector<2xf32> to vector<1x2xf32>
    %51 = vector.broadcast %50 : vector<1x2xf32> to vector<2x2xf32>
    %52 = arith.subf %23, %51 : vector<2x2xf32>
    %53 = math.exp %52 : vector<2x2xf32>
    %cst_21 = arith.constant dense<0.000000e+00> : vector<2xf32>
    %54 = vector.multi_reduction <add>, %53, %cst_21 [0] : vector<2x2xf32> to vector<2xf32>
    %55 = vector.shape_cast %54 : vector<2xf32> to vector<1x2xf32>
    %56 = math.log %55 : vector<1x2xf32>
    %57 = arith.addf %50, %56 : vector<1x2xf32>
    %58 = arith.subf %57, %48 : vector<1x2xf32>
    %cst_22 = arith.constant dense<0.000000e+00> : vector<1xf32>
    %59 = vector.multi_reduction <add>, %58, %cst_22 [1] : vector<1x2xf32> to vector<1xf32>
    %60 = vector.shape_cast %59 : vector<1xf32> to vector<1x1xf32>
    %cst_23 = arith.constant 2.000000e+00 : f32
    %61 = vector.broadcast %cst_23 : f32 to vector<1x1xf32>
    %62 = arith.divf %60, %61 : vector<1x1xf32>
    %63 = arith.addf %44, %62 : vector<1x1xf32>
    %cst_24 = arith.constant 5.000000e-01 : f32
    %64 = vector.broadcast %cst_24 : f32 to vector<1x1xf32>
    %65 = arith.mulf %63, %64 : vector<1x1xf32>
    %c0_25 = arith.constant 0 : index
    %c0_26 = arith.constant 0 : index
    %66 = vector.load %arg2[%c0_25, %c0_26] : memref<1x1xf32, #tpu.memory_space<vmem>>, vector<1x1xf32>
    tpu.vector_store %arg2[%c0_25, %c0_26], %65 {strides = array<i32>} : memref<1x1xf32, #tpu.memory_space<vmem>>, vector<1x1xf32>,
    return
  }
}

module attributes {stable_mosaic.version = 11 : i64} {
  func.func @_tower_kernel(%arg0: i32, %arg1: memref<1x10x192xf32, #tpu.memory_space<vmem>>, %arg2: memref<1x10x32xf32, #tpu.memory_space<vmem>>, %arg3: memref<10x10xf32, #tpu.memory_space<vmem>>, %arg4: memref<2x10xf32, #tpu.memory_space<vmem>>, %arg5: memref<1x192x32xf32, #tpu.memory_space<vmem>>, %arg6: memref<1x1x32xf32, #tpu.memory_space<vmem>>, %arg7: memref<1x1x32xf32, #tpu.memory_space<vmem>>, %arg8: memref<1x2x1x32xf32, #tpu.memory_space<vmem>>, %arg9: memref<1x2x1x32xf32, #tpu.memory_space<vmem>>, %arg10: memref<1x24x32x8xf32, #tpu.memory_space<vmem>>, %arg11: memref<1x24x1x8xf32, #tpu.memory_space<vmem>>, %arg12: memref<1x2x32x32xf32, #tpu.memory_space<vmem>>, %arg13: memref<1x2x1x32xf32, #tpu.memory_space<vmem>>, %arg14: memref<1x2x1x32xf32, #tpu.memory_space<vmem>>, %arg15: memref<1x2x1x32xf32, #tpu.memory_space<vmem>>, %arg16: memref<1x2x32x64xf32, #tpu.memory_space<vmem>>, %arg17: memref<1x2x1x64xf32, #tpu.memory_space<vmem>>, %arg18: memref<1x2x64x32xf32, #tpu.memory_space<vmem>>, %arg19: memref<1x2x1x32xf32, #tpu.memory_space<vmem>>, %arg20: memref<1x1x32xf32, #tpu.memory_space<vmem>>, %arg21: memref<1x1x32xf32, #tpu.memory_space<vmem>>, %arg22: memref<1x32x16xf32, #tpu.memory_space<vmem>>, %arg23: memref<1x2x16xf32, #tpu.memory_space<vmem>>) attributes {dimension_semantics = [#tpu.dimension_semantics<parallel>], iteration_bounds = array<i64: 2>, scalar_prefetch = 0 : i64, scratch_operands = 0 : i64, tpu.core_type = #tpu.core_type<tc>, window_params = [{transform_indices = @transform_0, window_bounds = array<i64: 1, 10, 192>}, {transform_indices = @transform_1, window_bounds = array<i64: 1, 10, 32>}, {pipeline_mode = #tpu.pipeline_mode<synchronous>, transform_indices = @transform_2, window_bounds = array<i64: 10, 10>}, {pipeline_mode = #tpu.pipeline_mode<synchronous>, transform_indices = @transform_3, window_bounds = array<i64: 2, 10>}, {transform_indices = @transform_4, window_bounds = array<i64: 1, 192, 32>}, {transform_indices = @transform_5, window_bounds = array<i64: 1, 1, 32>}, {transform_indices = @transform_6, window_bounds = array<i64: 1, 1, 32>}, {transform_indices = @transform_7, window_bounds = array<i64: 1, 2, 1, 32>}, {transform_indices = @transform_8, window_bounds = array<i64: 1, 2, 1, 32>}, {transform_indices = @transform_9, window_bounds = array<i64: 1, 24, 32, 8>}, {transform_indices = @transform_10, window_bounds = array<i64: 1, 24, 1, 8>}, {transform_indices = @transform_11, window_bounds = array<i64: 1, 2, 32, 32>}, {transform_indices = @transform_12, window_bounds = array<i64: 1, 2, 1, 32>}, {transform_indices = @transform_13, window_bounds = array<i64: 1, 2, 1, 32>}, {transform_indices = @transform_14, window_bounds = array<i64: 1, 2, 1, 32>}, {transform_indices = @transform_15, window_bounds = array<i64: 1, 2, 32, 64>}, {transform_indices = @transform_16, window_bounds = array<i64: 1, 2, 1, 64>}, {transform_indices = @transform_17, window_bounds = array<i64: 1, 2, 64, 32>}, {transform_indices = @transform_18, window_bounds = array<i64: 1, 2, 1, 32>}, {transform_indices = @transform_19, window_bounds = array<i64: 1, 1, 32>}, {transform_indices = @transform_20, window_bounds = array<i64: 1, 1, 32>}, {transform_indices = @transform_21, window_bounds = array<i64: 1, 32, 16>}, {transform_indices = @transform_22, window_bounds = array<i64: 1, 2, 16>}]} {
    %c0 = arith.constant 0 : index
    %c0_0 = arith.constant 0 : index
    %0 = vector.load %arg3[%c0, %c0_0] : memref<10x10xf32, #tpu.memory_space<vmem>>, vector<10x10xf32>
    %c0_1 = arith.constant 0 : index
    %c0_2 = arith.constant 0 : index
    %c0_3 = arith.constant 0 : index
    %1 = vector.load %arg1[%c0_1, %c0_2, %c0_3] : memref<1x10x192xf32, #tpu.memory_space<vmem>>, vector<1x10x192xf32>
    %2 = vector.shape_cast %1 : vector<1x10x192xf32> to vector<10x192xf32>
    %c0_4 = arith.constant 0 : index
    %c0_5 = arith.constant 0 : index
    %c0_6 = arith.constant 0 : index
    %3 = vector.load %arg5[%c0_4, %c0_5, %c0_6] : memref<1x192x32xf32, #tpu.memory_space<vmem>>, vector<1x192x32xf32>
    %4 = vector.shape_cast %3 : vector<1x192x32xf32> to vector<192x32xf32>
    %cst = arith.constant dense<0.000000e+00> : vector<10x32xf32>
    %5 = tpu.matmul %2, %4, %cst {dimension_numbers = #tpu.dot_dimension_numbers<[1], [0], [0], [1], [0, 0, 1, 1], [], []>} : vector<10x192xf32>, vector<192x32xf32>, vector<10x32xf32> -> vector<10x32xf32>
    %c0_7 = arith.constant 0 : index
    %c0_8 = arith.constant 0 : index
    %c0_9 = arith.constant 0 : index
    %6 = vector.load %arg2[%c0_7, %c0_8, %c0_9] : memref<1x10x32xf32, #tpu.memory_space<vmem>>, vector<1x10x32xf32>
    %7 = vector.shape_cast %6 : vector<1x10x32xf32> to vector<10x32xf32>
    %8 = arith.addf %5, %7 : vector<10x32xf32>
    %c0_10 = arith.constant 0 : index
    %c0_11 = arith.constant 0 : index
    %c0_12 = arith.constant 0 : index
    %9 = vector.load %arg6[%c0_10, %c0_11, %c0_12] : memref<1x1x32xf32, #tpu.memory_space<vmem>>, vector<1x1x32xf32>
    %10 = vector.shape_cast %9 : vector<1x1x32xf32> to vector<1x32xf32>
    %c0_13 = arith.constant 0 : index
    %c0_14 = arith.constant 0 : index
    %c0_15 = arith.constant 0 : index
    %11 = vector.load %arg7[%c0_13, %c0_14, %c0_15] : memref<1x1x32xf32, #tpu.memory_space<vmem>>, vector<1x1x32xf32>
    %12 = vector.shape_cast %11 : vector<1x1x32xf32> to vector<1x32xf32>
    %cst_16 = arith.constant dense<0.000000e+00> : vector<10xf32>
    %13 = vector.multi_reduction <add>, %8, %cst_16 [1] : vector<10x32xf32> to vector<10xf32>
    %14 = vector.shape_cast %13 : vector<10xf32> to vector<10x1xf32>
    %cst_17 = arith.constant 3.200000e+01 : f32
    %15 = vector.broadcast %cst_17 : f32 to vector<10x1xf32>
    %16 = arith.divf %14, %15 : vector<10x1xf32>
    %17 = vector.broadcast %16 : vector<10x1xf32> to vector<10x32xf32>
    %18 = arith.subf %8, %17 : vector<10x32xf32>
    %19 = arith.mulf %18, %18 : vector<10x32xf32>
    %cst_18 = arith.constant dense<0.000000e+00> : vector<10xf32>
    %20 = vector.multi_reduction <add>, %19, %cst_18 [1] : vector<10x32xf32> to vector<10xf32>
    %21 = vector.shape_cast %20 : vector<10xf32> to vector<10x1xf32>
    %cst_19 = arith.constant 3.200000e+01 : f32
    %22 = vector.broadcast %cst_19 : f32 to vector<10x1xf32>
    %23 = arith.divf %21, %22 : vector<10x1xf32>
    %cst_20 = arith.constant 9.99999974E-6 : f32
    %24 = vector.broadcast %cst_20 : f32 to vector<10x1xf32>
    %25 = arith.addf %23, %24 : vector<10x1xf32>
    %26 = math.rsqrt %25 : vector<10x1xf32>
    %27 = vector.broadcast %26 : vector<10x1xf32> to vector<10x32xf32>
    %28 = arith.mulf %18, %27 : vector<10x32xf32>
    %29 = vector.broadcast %10 : vector<1x32xf32> to vector<10x32xf32>
    %30 = arith.mulf %28, %29 : vector<10x32xf32>
    %31 = vector.broadcast %12 : vector<1x32xf32> to vector<10x32xf32>
    %32 = arith.addf %30, %31 : vector<10x32xf32>
    %c0_21 = arith.constant 0 : index
    %c0_22 = arith.constant 0 : index
    %c0_23 = arith.constant 0 : index
    %c0_24 = arith.constant 0 : index
    %33 = vector.load %arg8[%c0_21, %c0_22, %c0_23, %c0_24] : memref<1x2x1x32xf32, #tpu.memory_space<vmem>>, vector<1x1x1x32xf32>
    %34 = vector.shape_cast %33 : vector<1x1x1x32xf32> to vector<1x32xf32>
    %c0_25 = arith.constant 0 : index
    %c0_26 = arith.constant 0 : index
    %c0_27 = arith.constant 0 : index
    %c0_28 = arith.constant 0 : index
    %35 = vector.load %arg9[%c0_25, %c0_26, %c0_27, %c0_28] : memref<1x2x1x32xf32, #tpu.memory_space<vmem>>, vector<1x1x1x32xf32>
    %36 = vector.shape_cast %35 : vector<1x1x1x32xf32> to vector<1x32xf32>
    %cst_29 = arith.constant dense<0.000000e+00> : vector<10xf32>
    %37 = vector.multi_reduction <add>, %32, %cst_29 [1] : vector<10x32xf32> to vector<10xf32>
    %38 = vector.shape_cast %37 : vector<10xf32> to vector<10x1xf32>
    %cst_30 = arith.constant 3.200000e+01 : f32
    %39 = vector.broadcast %cst_30 : f32 to vector<10x1xf32>
    %40 = arith.divf %38, %39 : vector<10x1xf32>
    %41 = vector.broadcast %40 : vector<10x1xf32> to vector<10x32xf32>
    %42 = arith.subf %32, %41 : vector<10x32xf32>
    %43 = arith.mulf %42, %42 : vector<10x32xf32>
    %cst_31 = arith.constant dense<0.000000e+00> : vector<10xf32>
    %44 = vector.multi_reduction <add>, %43, %cst_31 [1] : vector<10x32xf32> to vector<10xf32>
    %45 = vector.shape_cast %44 : vector<10xf32> to vector<10x1xf32>
    %cst_32 = arith.constant 3.200000e+01 : f32
    %46 = vector.broadcast %cst_32 : f32 to vector<10x1xf32>
    %47 = arith.divf %45, %46 : vector<10x1xf32>
    %cst_33 = arith.constant 9.99999974E-6 : f32
    %48 = vector.broadcast %cst_33 : f32 to vector<10x1xf32>
    %49 = arith.addf %47, %48 : vector<10x1xf32>
    %50 = math.rsqrt %49 : vector<10x1xf32>
    %51 = vector.broadcast %50 : vector<10x1xf32> to vector<10x32xf32>
    %52 = arith.mulf %42, %51 : vector<10x32xf32>
    %53 = vector.broadcast %34 : vector<1x32xf32> to vector<10x32xf32>
    %54 = arith.mulf %52, %53 : vector<10x32xf32>
    %55 = vector.broadcast %36 : vector<1x32xf32> to vector<10x32xf32>
    %56 = arith.addf %54, %55 : vector<10x32xf32>
    %c0_34 = arith.constant 0 : index
    %c0_35 = arith.constant 0 : index
    %c0_36 = arith.constant 0 : index
    %c0_37 = arith.constant 0 : index
    %57 = vector.load %arg12[%c0_34, %c0_35, %c0_36, %c0_37] : memref<1x2x32x32xf32, #tpu.memory_space<vmem>>, vector<1x1x32x32xf32>
    %58 = vector.shape_cast %57 : vector<1x1x32x32xf32> to vector<32x32xf32>
    %c0_38 = arith.constant 0 : index
    %c0_39 = arith.constant 0 : index
    %c0_40 = arith.constant 0 : index
    %c0_41 = arith.constant 0 : index
    %59 = vector.load %arg10[%c0_38, %c0_39, %c0_40, %c0_41] : memref<1x24x32x8xf32, #tpu.memory_space<vmem>>, vector<1x1x32x8xf32>
    %60 = vector.shape_cast %59 : vector<1x1x32x8xf32> to vector<32x8xf32>
    %cst_42 = arith.constant dense<0.000000e+00> : vector<10x8xf32>
    %61 = tpu.matmul %56, %60, %cst_42 {dimension_numbers = #tpu.dot_dimension_numbers<[1], [0], [0], [1], [0, 0, 1, 1], [], []>} : vector<10x32xf32>, vector<32x8xf32>, vector<10x8xf32> -> vector<10x8xf32>
    %c0_43 = arith.constant 0 : index
    %c0_44 = arith.constant 0 : index
    %c0_45 = arith.constant 0 : index
    %c0_46 = arith.constant 0 : index
    %62 = vector.load %arg11[%c0_43, %c0_44, %c0_45, %c0_46] : memref<1x24x1x8xf32, #tpu.memory_space<vmem>>, vector<1x1x1x8xf32>
    %63 = vector.shape_cast %62 : vector<1x1x1x8xf32> to vector<1x8xf32>
    %64 = vector.broadcast %63 : vector<1x8xf32> to vector<10x8xf32>
    %65 = arith.addf %61, %64 : vector<10x8xf32>
    %cst_47 = arith.constant 0.353553385 : f32
    %66 = vector.broadcast %cst_47 : f32 to vector<10x8xf32>
    %67 = arith.mulf %65, %66 : vector<10x8xf32>
    %c0_48 = arith.constant 0 : index
    %c4 = arith.constant 4 : index
    %c0_49 = arith.constant 0 : index
    %c0_50 = arith.constant 0 : index
    %68 = vector.load %arg10[%c0_48, %c4, %c0_49, %c0_50] : memref<1x24x32x8xf32, #tpu.memory_space<vmem>>, vector<1x1x32x8xf32>
    %69 = vector.shape_cast %68 : vector<1x1x32x8xf32> to vector<32x8xf32>
    %cst_51 = arith.constant dense<0.000000e+00> : vector<10x8xf32>
    %70 = tpu.matmul %56, %69, %cst_51 {dimension_numbers = #tpu.dot_dimension_numbers<[1], [0], [0], [1], [0, 0, 1, 1], [], []>} : vector<10x32xf32>, vector<32x8xf32>, vector<10x8xf32> -> vector<10x8xf32>
    %c0_52 = arith.constant 0 : index
    %c4_53 = arith.constant 4 : index
    %c0_54 = arith.constant 0 : index
    %c0_55 = arith.constant 0 : index
    %71 = vector.load %arg11[%c0_52, %c4_53, %c0_54, %c0_55] : memref<1x24x1x8xf32, #tpu.memory_space<vmem>>, vector<1x1x1x8xf32>
    %72 = vector.shape_cast %71 : vector<1x1x1x8xf32> to vector<1x8xf32>
    %73 = vector.broadcast %72 : vector<1x8xf32> to vector<10x8xf32>
    %74 = arith.addf %70, %73 : vector<10x8xf32>
    %c0_56 = arith.constant 0 : index
    %c8 = arith.constant 8 : index
    %c0_57 = arith.constant 0 : index
    %c0_58 = arith.constant 0 : index
    %75 = vector.load %arg10[%c0_56, %c8, %c0_57, %c0_58] : memref<1x24x32x8xf32, #tpu.memory_space<vmem>>, vector<1x1x32x8xf32>
    %76 = vector.shape_cast %75 : vector<1x1x32x8xf32> to vector<32x8xf32>
    %cst_59 = arith.constant dense<0.000000e+00> : vector<10x8xf32>
    %77 = tpu.matmul %56, %76, %cst_59 {dimension_numbers = #tpu.dot_dimension_numbers<[1], [0], [0], [1], [0, 0, 1, 1], [], []>} : vector<10x32xf32>, vector<32x8xf32>, vector<10x8xf32> -> vector<10x8xf32>
    %c0_60 = arith.constant 0 : index
    %c8_61 = arith.constant 8 : index
    %c0_62 = arith.constant 0 : index
    %c0_63 = arith.constant 0 : index
    %78 = vector.load %arg11[%c0_60, %c8_61, %c0_62, %c0_63] : memref<1x24x1x8xf32, #tpu.memory_space<vmem>>, vector<1x1x1x8xf32>
    %79 = vector.shape_cast %78 : vector<1x1x1x8xf32> to vector<1x8xf32>
    %80 = vector.broadcast %79 : vector<1x8xf32> to vector<10x8xf32>
    %81 = arith.addf %77, %80 : vector<10x8xf32>
    %82 = tpu.transpose %74, [1, 0] : vector<10x8xf32> -> vector<8x10xf32>
    %cst_64 = arith.constant dense<0.000000e+00> : vector<10x10xf32>
    %83 = tpu.matmul %67, %82, %cst_64 {dimension_numbers = #tpu.dot_dimension_numbers<[1], [0], [0], [1], [0, 0, 1, 1], [], []>} : vector<10x8xf32>, vector<8x10xf32>, vector<10x10xf32> -> vector<10x10xf32>
    %84 = arith.addf %83, %0 : vector<10x10xf32>
    %cst_65 = arith.constant dense<0xFF800000> : vector<10xf32>
    %85 = vector.multi_reduction <maximumf>, %84, %cst_65 [1] : vector<10x10xf32> to vector<10xf32>
    %86 = vector.shape_cast %85 : vector<10xf32> to vector<10x1xf32>
    %87 = vector.broadcast %86 : vector<10x1xf32> to vector<10x10xf32>
    %88 = arith.subf %84, %87 : vector<10x10xf32>
    %89 = math.exp %88 : vector<10x10xf32>
    %cst_66 = arith.constant dense<0.000000e+00> : vector<10xf32>
    %90 = vector.multi_reduction <add>, %89, %cst_66 [1] : vector<10x10xf32> to vector<10xf32>
    %91 = vector.shape_cast %90 : vector<10xf32> to vector<10x1xf32>
    %92 = tpu.reciprocal %91 {approx = true} : vector<10x1xf32> -> vector<10x1xf32>
    %93 = vector.broadcast %92 : vector<10x1xf32> to vector<10x10xf32>
    %94 = arith.mulf %89, %93 : vector<10x10xf32>
    %cst_67 = arith.constant dense<0.000000e+00> : vector<10x8xf32>
    %95 = tpu.matmul %94, %81, %cst_67 {dimension_numbers = #tpu.dot_dimension_numbers<[1], [0], [0], [1], [0, 0, 1, 1], [], []>} : vector<10x10xf32>, vector<10x8xf32>, vector<10x8xf32> -> vector<10x8xf32>
    %96 = vector.extract_strided_slice %58 {offsets = [0, 0], sizes = [8, 32], strides = [1, 1]} : vector<32x32xf32> to vector<8x32xf32>
    %cst_68 = arith.constant dense<0.000000e+00> : vector<10x32xf32>
    %97 = tpu.matmul %95, %96, %cst_68 {dimension_numbers = #tpu.dot_dimension_numbers<[1], [0], [0], [1], [0, 0, 1, 1], [], []>} : vector<10x8xf32>, vector<8x32xf32>, vector<10x32xf32> -> vector<10x32xf32>
    %c0_69 = arith.constant 0 : index
    %c1 = arith.constant 1 : index
    %c0_70 = arith.constant 0 : index
    %c0_71 = arith.constant 0 : index
    %98 = vector.load %arg10[%c0_69, %c1, %c0_70, %c0_71] : memref<1x24x32x8xf32, #tpu.memory_space<vmem>>, vector<1x1x32x8xf32>
    %99 = vector.shape_cast %98 : vector<1x1x32x8xf32> to vector<32x8xf32>
    %cst_72 = arith.constant dense<0.000000e+00> : vector<10x8xf32>
    %100 = tpu.matmul %56, %99, %cst_72 {dimension_numbers = #tpu.dot_dimension_numbers<[1], [0], [0], [1], [0, 0, 1, 1], [], []>} : vector<10x32xf32>, vector<32x8xf32>, vector<10x8xf32> -> vector<10x8xf32>
    %c0_73 = arith.constant 0 : index
    %c1_74 = arith.constant 1 : index
    %c0_75 = arith.constant 0 : index
    %c0_76 = arith.constant 0 : index
    %101 = vector.load %arg11[%c0_73, %c1_74, %c0_75, %c0_76] : memref<1x24x1x8xf32, #tpu.memory_space<vmem>>, vector<1x1x1x8xf32>
    %102 = vector.shape_cast %101 : vector<1x1x1x8xf32> to vector<1x8xf32>
    %103 = vector.broadcast %102 : vector<1x8xf32> to vector<10x8xf32>
    %104 = arith.addf %100, %103 : vector<10x8xf32>
    %cst_77 = arith.constant 0.353553385 : f32
    %105 = vector.broadcast %cst_77 : f32 to vector<10x8xf32>
    %106 = arith.mulf %104, %105 : vector<10x8xf32>
    %c0_78 = arith.constant 0 : index
    %c5 = arith.constant 5 : index
    %c0_79 = arith.constant 0 : index
    %c0_80 = arith.constant 0 : index
    %107 = vector.load %arg10[%c0_78, %c5, %c0_79, %c0_80] : memref<1x24x32x8xf32, #tpu.memory_space<vmem>>, vector<1x1x32x8xf32>
    %108 = vector.shape_cast %107 : vector<1x1x32x8xf32> to vector<32x8xf32>
    %cst_81 = arith.constant dense<0.000000e+00> : vector<10x8xf32>
    %109 = tpu.matmul %56, %108, %cst_81 {dimension_numbers = #tpu.dot_dimension_numbers<[1], [0], [0], [1], [0, 0, 1, 1], [], []>} : vector<10x32xf32>, vector<32x8xf32>, vector<10x8xf32> -> vector<10x8xf32>
    %c0_82 = arith.constant 0 : index
    %c5_83 = arith.constant 5 : index
    %c0_84 = arith.constant 0 : index
    %c0_85 = arith.constant 0 : index
    %110 = vector.load %arg11[%c0_82, %c5_83, %c0_84, %c0_85] : memref<1x24x1x8xf32, #tpu.memory_space<vmem>>, vector<1x1x1x8xf32>
    %111 = vector.shape_cast %110 : vector<1x1x1x8xf32> to vector<1x8xf32>
    %112 = vector.broadcast %111 : vector<1x8xf32> to vector<10x8xf32>
    %113 = arith.addf %109, %112 : vector<10x8xf32>
    %c0_86 = arith.constant 0 : index
    %c9 = arith.constant 9 : index
    %c0_87 = arith.constant 0 : index
    %c0_88 = arith.constant 0 : index
    %114 = vector.load %arg10[%c0_86, %c9, %c0_87, %c0_88] : memref<1x24x32x8xf32, #tpu.memory_space<vmem>>, vector<1x1x32x8xf32>
    %115 = vector.shape_cast %114 : vector<1x1x32x8xf32> to vector<32x8xf32>
    %cst_89 = arith.constant dense<0.000000e+00> : vector<10x8xf32>
    %116 = tpu.matmul %56, %115, %cst_89 {dimension_numbers = #tpu.dot_dimension_numbers<[1], [0], [0], [1], [0, 0, 1, 1], [], []>} : vector<10x32xf32>, vector<32x8xf32>, vector<10x8xf32> -> vector<10x8xf32>
    %c0_90 = arith.constant 0 : index
    %c9_91 = arith.constant 9 : index
    %c0_92 = arith.constant 0 : index
    %c0_93 = arith.constant 0 : index
    %117 = vector.load %arg11[%c0_90, %c9_91, %c0_92, %c0_93] : memref<1x24x1x8xf32, #tpu.memory_space<vmem>>, vector<1x1x1x8xf32>
    %118 = vector.shape_cast %117 : vector<1x1x1x8xf32> to vector<1x8xf32>
    %119 = vector.broadcast %118 : vector<1x8xf32> to vector<10x8xf32>
    %120 = arith.addf %116, %119 : vector<10x8xf32>
    %121 = tpu.transpose %113, [1, 0] : vector<10x8xf32> -> vector<8x10xf32>
    %cst_94 = arith.constant dense<0.000000e+00> : vector<10x10xf32>
    %122 = tpu.matmul %106, %121, %cst_94 {dimension_numbers = #tpu.dot_dimension_numbers<[1], [0], [0], [1], [0, 0, 1, 1], [], []>} : vector<10x8xf32>, vector<8x10xf32>, vector<10x10xf32> -> vector<10x10xf32>
    %123 = arith.addf %122, %0 : vector<10x10xf32>
    %cst_95 = arith.constant dense<0xFF800000> : vector<10xf32>
    %124 = vector.multi_reduction <maximumf>, %123, %cst_95 [1] : vector<10x10xf32> to vector<10xf32>
    %125 = vector.shape_cast %124 : vector<10xf32> to vector<10x1xf32>
    %126 = vector.broadcast %125 : vector<10x1xf32> to vector<10x10xf32>
    %127 = arith.subf %123, %126 : vector<10x10xf32>
    %128 = math.exp %127 : vector<10x10xf32>
    %cst_96 = arith.constant dense<0.000000e+00> : vector<10xf32>
    %129 = vector.multi_reduction <add>, %128, %cst_96 [1] : vector<10x10xf32> to vector<10xf32>
    %130 = vector.shape_cast %129 : vector<10xf32> to vector<10x1xf32>
    %131 = tpu.reciprocal %130 {approx = true} : vector<10x1xf32> -> vector<10x1xf32>
    %132 = vector.broadcast %131 : vector<10x1xf32> to vector<10x10xf32>
    %133 = arith.mulf %128, %132 : vector<10x10xf32>
    %cst_97 = arith.constant dense<0.000000e+00> : vector<10x8xf32>
    %134 = tpu.matmul %133, %120, %cst_97 {dimension_numbers = #tpu.dot_dimension_numbers<[1], [0], [0], [1], [0, 0, 1, 1], [], []>} : vector<10x10xf32>, vector<10x8xf32>, vector<10x8xf32> -> vector<10x8xf32>
    %135 = vector.extract_strided_slice %58 {offsets = [8, 0], sizes = [8, 32], strides = [1, 1]} : vector<32x32xf32> to vector<8x32xf32>
    %cst_98 = arith.constant dense<0.000000e+00> : vector<10x32xf32>
    %136 = tpu.matmul %134, %135, %cst_98 {dimension_numbers = #tpu.dot_dimension_numbers<[1], [0], [0], [1], [0, 0, 1, 1], [], []>} : vector<10x8xf32>, vector<8x32xf32>, vector<10x32xf32> -> vector<10x32xf32>
    %137 = arith.addf %97, %136 : vector<10x32xf32>
    %c0_99 = arith.constant 0 : index
    %c2 = arith.constant 2 : index
    %c0_100 = arith.constant 0 : index
    %c0_101 = arith.constant 0 : index
    %138 = vector.load %arg10[%c0_99, %c2, %c0_100, %c0_101] : memref<1x24x32x8xf32, #tpu.memory_space<vmem>>, vector<1x1x32x8xf32>
    %139 = vector.shape_cast %138 : vector<1x1x32x8xf32> to vector<32x8xf32>
    %cst_102 = arith.constant dense<0.000000e+00> : vector<10x8xf32>
    %140 = tpu.matmul %56, %139, %cst_102 {dimension_numbers = #tpu.dot_dimension_numbers<[1], [0], [0], [1], [0, 0, 1, 1], [], []>} : vector<10x32xf32>, vector<32x8xf32>, vector<10x8xf32> -> vector<10x8xf32>
    %c0_103 = arith.constant 0 : index
    %c2_104 = arith.constant 2 : index
    %c0_105 = arith.constant 0 : index
    %c0_106 = arith.constant 0 : index
    %141 = vector.load %arg11[%c0_103, %c2_104, %c0_105, %c0_106] : memref<1x24x1x8xf32, #tpu.memory_space<vmem>>, vector<1x1x1x8xf32>
    %142 = vector.shape_cast %141 : vector<1x1x1x8xf32> to vector<1x8xf32>
    %143 = vector.broadcast %142 : vector<1x8xf32> to vector<10x8xf32>
    %144 = arith.addf %140, %143 : vector<10x8xf32>
    %cst_107 = arith.constant 0.353553385 : f32
    %145 = vector.broadcast %cst_107 : f32 to vector<10x8xf32>
    %146 = arith.mulf %144, %145 : vector<10x8xf32>
    %c0_108 = arith.constant 0 : index
    %c6 = arith.constant 6 : index
    %c0_109 = arith.constant 0 : index
    %c0_110 = arith.constant 0 : index
    %147 = vector.load %arg10[%c0_108, %c6, %c0_109, %c0_110] : memref<1x24x32x8xf32, #tpu.memory_space<vmem>>, vector<1x1x32x8xf32>
    %148 = vector.shape_cast %147 : vector<1x1x32x8xf32> to vector<32x8xf32>
    %cst_111 = arith.constant dense<0.000000e+00> : vector<10x8xf32>
    %149 = tpu.matmul %56, %148, %cst_111 {dimension_numbers = #tpu.dot_dimension_numbers<[1], [0], [0], [1], [0, 0, 1, 1], [], []>} : vector<10x32xf32>, vector<32x8xf32>, vector<10x8xf32> -> vector<10x8xf32>
    %c0_112 = arith.constant 0 : index
    %c6_113 = arith.constant 6 : index
    %c0_114 = arith.constant 0 : index
    %c0_115 = arith.constant 0 : index
    %150 = vector.load %arg11[%c0_112, %c6_113, %c0_114, %c0_115] : memref<1x24x1x8xf32, #tpu.memory_space<vmem>>, vector<1x1x1x8xf32>
    %151 = vector.shape_cast %150 : vector<1x1x1x8xf32> to vector<1x8xf32>
    %152 = vector.broadcast %151 : vector<1x8xf32> to vector<10x8xf32>
    %153 = arith.addf %149, %152 : vector<10x8xf32>
    %c0_116 = arith.constant 0 : index
    %c10 = arith.constant 10 : index
    %c0_117 = arith.constant 0 : index
    %c0_118 = arith.constant 0 : index
    %154 = vector.load %arg10[%c0_116, %c10, %c0_117, %c0_118] : memref<1x24x32x8xf32, #tpu.memory_space<vmem>>, vector<1x1x32x8xf32>
    %155 = vector.shape_cast %154 : vector<1x1x32x8xf32> to vector<32x8xf32>
    %cst_119 = arith.constant dense<0.000000e+00> : vector<10x8xf32>
    %156 = tpu.matmul %56, %155, %cst_119 {dimension_numbers = #tpu.dot_dimension_numbers<[1], [0], [0], [1], [0, 0, 1, 1], [], []>} : vector<10x32xf32>, vector<32x8xf32>, vector<10x8xf32> -> vector<10x8xf32>
    %c0_120 = arith.constant 0 : index
    %c10_121 = arith.constant 10 : index
    %c0_122 = arith.constant 0 : index
    %c0_123 = arith.constant 0 : index
    %157 = vector.load %arg11[%c0_120, %c10_121, %c0_122, %c0_123] : memref<1x24x1x8xf32, #tpu.memory_space<vmem>>, vector<1x1x1x8xf32>
    %158 = vector.shape_cast %157 : vector<1x1x1x8xf32> to vector<1x8xf32>
    %159 = vector.broadcast %158 : vector<1x8xf32> to vector<10x8xf32>
    %160 = arith.addf %156, %159 : vector<10x8xf32>
    %161 = tpu.transpose %153, [1, 0] : vector<10x8xf32> -> vector<8x10xf32>
    %cst_124 = arith.constant dense<0.000000e+00> : vector<10x10xf32>
    %162 = tpu.matmul %146, %161, %cst_124 {dimension_numbers = #tpu.dot_dimension_numbers<[1], [0], [0], [1], [0, 0, 1, 1], [], []>} : vector<10x8xf32>, vector<8x10xf32>, vector<10x10xf32> -> vector<10x10xf32>
    %163 = arith.addf %162, %0 : vector<10x10xf32>
    %cst_125 = arith.constant dense<0xFF800000> : vector<10xf32>
    %164 = vector.multi_reduction <maximumf>, %163, %cst_125 [1] : vector<10x10xf32> to vector<10xf32>
    %165 = vector.shape_cast %164 : vector<10xf32> to vector<10x1xf32>
    %166 = vector.broadcast %165 : vector<10x1xf32> to vector<10x10xf32>
    %167 = arith.subf %163, %166 : vector<10x10xf32>
    %168 = math.exp %167 : vector<10x10xf32>
    %cst_126 = arith.constant dense<0.000000e+00> : vector<10xf32>
    %169 = vector.multi_reduction <add>, %168, %cst_126 [1] : vector<10x10xf32> to vector<10xf32>
    %170 = vector.shape_cast %169 : vector<10xf32> to vector<10x1xf32>
    %171 = tpu.reciprocal %170 {approx = true} : vector<10x1xf32> -> vector<10x1xf32>
    %172 = vector.broadcast %171 : vector<10x1xf32> to vector<10x10xf32>
    %173 = arith.mulf %168, %172 : vector<10x10xf32>
    %cst_127 = arith.constant dense<0.000000e+00> : vector<10x8xf32>
    %174 = tpu.matmul %173, %160, %cst_127 {dimension_numbers = #tpu.dot_dimension_numbers<[1], [0], [0], [1], [0, 0, 1, 1], [], []>} : vector<10x10xf32>, vector<10x8xf32>, vector<10x8xf32> -> vector<10x8xf32>
    %175 = vector.extract_strided_slice %58 {offsets = [16, 0], sizes = [8, 32], strides = [1, 1]} : vector<32x32xf32> to vector<8x32xf32>
    %cst_128 = arith.constant dense<0.000000e+00> : vector<10x32xf32>
    %176 = tpu.matmul %174, %175, %cst_128 {dimension_numbers = #tpu.dot_dimension_numbers<[1], [0], [0], [1], [0, 0, 1, 1], [], []>} : vector<10x8xf32>, vector<8x32xf32>, vector<10x32xf32> -> vector<10x32xf32>
    %177 = arith.addf %137, %176 : vector<10x32xf32>
    %c0_129 = arith.constant 0 : index
    %c3 = arith.constant 3 : index
    %c0_130 = arith.constant 0 : index
    %c0_131 = arith.constant 0 : index
    %178 = vector.load %arg10[%c0_129, %c3, %c0_130, %c0_131] : memref<1x24x32x8xf32, #tpu.memory_space<vmem>>, vector<1x1x32x8xf32>
    %179 = vector.shape_cast %178 : vector<1x1x32x8xf32> to vector<32x8xf32>
    %cst_132 = arith.constant dense<0.000000e+00> : vector<10x8xf32>
    %180 = tpu.matmul %56, %179, %cst_132 {dimension_numbers = #tpu.dot_dimension_numbers<[1], [0], [0], [1], [0, 0, 1, 1], [], []>} : vector<10x32xf32>, vector<32x8xf32>, vector<10x8xf32> -> vector<10x8xf32>
    %c0_133 = arith.constant 0 : index
    %c3_134 = arith.constant 3 : index
    %c0_135 = arith.constant 0 : index
    %c0_136 = arith.constant 0 : index
    %181 = vector.load %arg11[%c0_133, %c3_134, %c0_135, %c0_136] : memref<1x24x1x8xf32, #tpu.memory_space<vmem>>, vector<1x1x1x8xf32>
    %182 = vector.shape_cast %181 : vector<1x1x1x8xf32> to vector<1x8xf32>
    %183 = vector.broadcast %182 : vector<1x8xf32> to vector<10x8xf32>
    %184 = arith.addf %180, %183 : vector<10x8xf32>
    %cst_137 = arith.constant 0.353553385 : f32
    %185 = vector.broadcast %cst_137 : f32 to vector<10x8xf32>
    %186 = arith.mulf %184, %185 : vector<10x8xf32>
    %c0_138 = arith.constant 0 : index
    %c7 = arith.constant 7 : index
    %c0_139 = arith.constant 0 : index
    %c0_140 = arith.constant 0 : index
    %187 = vector.load %arg10[%c0_138, %c7, %c0_139, %c0_140] : memref<1x24x32x8xf32, #tpu.memory_space<vmem>>, vector<1x1x32x8xf32>
    %188 = vector.shape_cast %187 : vector<1x1x32x8xf32> to vector<32x8xf32>
    %cst_141 = arith.constant dense<0.000000e+00> : vector<10x8xf32>
    %189 = tpu.matmul %56, %188, %cst_141 {dimension_numbers = #tpu.dot_dimension_numbers<[1], [0], [0], [1], [0, 0, 1, 1], [], []>} : vector<10x32xf32>, vector<32x8xf32>, vector<10x8xf32> -> vector<10x8xf32>
    %c0_142 = arith.constant 0 : index
    %c7_143 = arith.constant 7 : index
    %c0_144 = arith.constant 0 : index
    %c0_145 = arith.constant 0 : index
    %190 = vector.load %arg11[%c0_142, %c7_143, %c0_144, %c0_145] : memref<1x24x1x8xf32, #tpu.memory_space<vmem>>, vector<1x1x1x8xf32>
    %191 = vector.shape_cast %190 : vector<1x1x1x8xf32> to vector<1x8xf32>
    %192 = vector.broadcast %191 : vector<1x8xf32> to vector<10x8xf32>
    %193 = arith.addf %189, %192 : vector<10x8xf32>
    %c0_146 = arith.constant 0 : index
    %c11 = arith.constant 11 : index
    %c0_147 = arith.constant 0 : index
    %c0_148 = arith.constant 0 : index
    %194 = vector.load %arg10[%c0_146, %c11, %c0_147, %c0_148] : memref<1x24x32x8xf32, #tpu.memory_space<vmem>>, vector<1x1x32x8xf32>
    %195 = vector.shape_cast %194 : vector<1x1x32x8xf32> to vector<32x8xf32>
    %cst_149 = arith.constant dense<0.000000e+00> : vector<10x8xf32>
    %196 = tpu.matmul %56, %195, %cst_149 {dimension_numbers = #tpu.dot_dimension_numbers<[1], [0], [0], [1], [0, 0, 1, 1], [], []>} : vector<10x32xf32>, vector<32x8xf32>, vector<10x8xf32> -> vector<10x8xf32>
    %c0_150 = arith.constant 0 : index
    %c11_151 = arith.constant 11 : index
    %c0_152 = arith.constant 0 : index
    %c0_153 = arith.constant 0 : index
    %197 = vector.load %arg11[%c0_150, %c11_151, %c0_152, %c0_153] : memref<1x24x1x8xf32, #tpu.memory_space<vmem>>, vector<1x1x1x8xf32>
    %198 = vector.shape_cast %197 : vector<1x1x1x8xf32> to vector<1x8xf32>
    %199 = vector.broadcast %198 : vector<1x8xf32> to vector<10x8xf32>
    %200 = arith.addf %196, %199 : vector<10x8xf32>
    %201 = tpu.transpose %193, [1, 0] : vector<10x8xf32> -> vector<8x10xf32>
    %cst_154 = arith.constant dense<0.000000e+00> : vector<10x10xf32>
    %202 = tpu.matmul %186, %201, %cst_154 {dimension_numbers = #tpu.dot_dimension_numbers<[1], [0], [0], [1], [0, 0, 1, 1], [], []>} : vector<10x8xf32>, vector<8x10xf32>, vector<10x10xf32> -> vector<10x10xf32>
    %203 = arith.addf %202, %0 : vector<10x10xf32>
    %cst_155 = arith.constant dense<0xFF800000> : vector<10xf32>
    %204 = vector.multi_reduction <maximumf>, %203, %cst_155 [1] : vector<10x10xf32> to vector<10xf32>
    %205 = vector.shape_cast %204 : vector<10xf32> to vector<10x1xf32>
    %206 = vector.broadcast %205 : vector<10x1xf32> to vector<10x10xf32>
    %207 = arith.subf %203, %206 : vector<10x10xf32>
    %208 = math.exp %207 : vector<10x10xf32>
    %cst_156 = arith.constant dense<0.000000e+00> : vector<10xf32>
    %209 = vector.multi_reduction <add>, %208, %cst_156 [1] : vector<10x10xf32> to vector<10xf32>
    %210 = vector.shape_cast %209 : vector<10xf32> to vector<10x1xf32>
    %211 = tpu.reciprocal %210 {approx = true} : vector<10x1xf32> -> vector<10x1xf32>
    %212 = vector.broadcast %211 : vector<10x1xf32> to vector<10x10xf32>
    %213 = arith.mulf %208, %212 : vector<10x10xf32>
    %cst_157 = arith.constant dense<0.000000e+00> : vector<10x8xf32>
    %214 = tpu.matmul %213, %200, %cst_157 {dimension_numbers = #tpu.dot_dimension_numbers<[1], [0], [0], [1], [0, 0, 1, 1], [], []>} : vector<10x10xf32>, vector<10x8xf32>, vector<10x8xf32> -> vector<10x8xf32>
    %215 = vector.extract_strided_slice %58 {offsets = [24, 0], sizes = [8, 32], strides = [1, 1]} : vector<32x32xf32> to vector<8x32xf32>
    %cst_158 = arith.constant dense<0.000000e+00> : vector<10x32xf32>
    %216 = tpu.matmul %214, %215, %cst_158 {dimension_numbers = #tpu.dot_dimension_numbers<[1], [0], [0], [1], [0, 0, 1, 1], [], []>} : vector<10x8xf32>, vector<8x32xf32>, vector<10x32xf32> -> vector<10x32xf32>
    %217 = arith.addf %177, %216 : vector<10x32xf32>
    %218 = arith.addf %32, %217 : vector<10x32xf32>
    %c0_159 = arith.constant 0 : index
    %c0_160 = arith.constant 0 : index
    %c0_161 = arith.constant 0 : index
    %c0_162 = arith.constant 0 : index
    %219 = vector.load %arg13[%c0_159, %c0_160, %c0_161, %c0_162] : memref<1x2x1x32xf32, #tpu.memory_space<vmem>>, vector<1x1x1x32xf32>
    %220 = vector.shape_cast %219 : vector<1x1x1x32xf32> to vector<1x32xf32>
    %221 = vector.broadcast %220 : vector<1x32xf32> to vector<10x32xf32>
    %222 = arith.addf %218, %221 : vector<10x32xf32>
    %c0_163 = arith.constant 0 : index
    %c0_164 = arith.constant 0 : index
    %c0_165 = arith.constant 0 : index
    %c0_166 = arith.constant 0 : index
    %223 = vector.load %arg14[%c0_163, %c0_164, %c0_165, %c0_166] : memref<1x2x1x32xf32, #tpu.memory_space<vmem>>, vector<1x1x1x32xf32>
    %224 = vector.shape_cast %223 : vector<1x1x1x32xf32> to vector<1x32xf32>
    %c0_167 = arith.constant 0 : index
    %c0_168 = arith.constant 0 : index
    %c0_169 = arith.constant 0 : index
    %c0_170 = arith.constant 0 : index
    %225 = vector.load %arg15[%c0_167, %c0_168, %c0_169, %c0_170] : memref<1x2x1x32xf32, #tpu.memory_space<vmem>>, vector<1x1x1x32xf32>
    %226 = vector.shape_cast %225 : vector<1x1x1x32xf32> to vector<1x32xf32>
    %cst_171 = arith.constant dense<0.000000e+00> : vector<10xf32>
    %227 = vector.multi_reduction <add>, %222, %cst_171 [1] : vector<10x32xf32> to vector<10xf32>
    %228 = vector.shape_cast %227 : vector<10xf32> to vector<10x1xf32>
    %cst_172 = arith.constant 3.200000e+01 : f32
    %229 = vector.broadcast %cst_172 : f32 to vector<10x1xf32>
    %230 = arith.divf %228, %229 : vector<10x1xf32>
    %231 = vector.broadcast %230 : vector<10x1xf32> to vector<10x32xf32>
    %232 = arith.subf %222, %231 : vector<10x32xf32>
    %233 = arith.mulf %232, %232 : vector<10x32xf32>
    %cst_173 = arith.constant dense<0.000000e+00> : vector<10xf32>
    %234 = vector.multi_reduction <add>, %233, %cst_173 [1] : vector<10x32xf32> to vector<10xf32>
    %235 = vector.shape_cast %234 : vector<10xf32> to vector<10x1xf32>
    %cst_174 = arith.constant 3.200000e+01 : f32
    %236 = vector.broadcast %cst_174 : f32 to vector<10x1xf32>
    %237 = arith.divf %235, %236 : vector<10x1xf32>
    %cst_175 = arith.constant 9.99999974E-6 : f32
    %238 = vector.broadcast %cst_175 : f32 to vector<10x1xf32>
    %239 = arith.addf %237, %238 : vector<10x1xf32>
    %240 = math.rsqrt %239 : vector<10x1xf32>
    %241 = vector.broadcast %240 : vector<10x1xf32> to vector<10x32xf32>
    %242 = arith.mulf %232, %241 : vector<10x32xf32>
    %243 = vector.broadcast %224 : vector<1x32xf32> to vector<10x32xf32>
    %244 = arith.mulf %242, %243 : vector<10x32xf32>
    %245 = vector.broadcast %226 : vector<1x32xf32> to vector<10x32xf32>
    %246 = arith.addf %244, %245 : vector<10x32xf32>
    %c0_176 = arith.constant 0 : index
    %c0_177 = arith.constant 0 : index
    %c0_178 = arith.constant 0 : index
    %c0_179 = arith.constant 0 : index
    %247 = vector.load %arg16[%c0_176, %c0_177, %c0_178, %c0_179] : memref<1x2x32x64xf32, #tpu.memory_space<vmem>>, vector<1x1x32x64xf32>
    %248 = vector.shape_cast %247 : vector<1x1x32x64xf32> to vector<32x64xf32>
    %cst_180 = arith.constant dense<0.000000e+00> : vector<10x64xf32>
    %249 = tpu.matmul %246, %248, %cst_180 {dimension_numbers = #tpu.dot_dimension_numbers<[1], [0], [0], [1], [0, 0, 1, 1], [], []>} : vector<10x32xf32>, vector<32x64xf32>, vector<10x64xf32> -> vector<10x64xf32>
    %c0_181 = arith.constant 0 : index
    %c0_182 = arith.constant 0 : index
    %c0_183 = arith.constant 0 : index
    %c0_184 = arith.constant 0 : index
    %250 = vector.load %arg17[%c0_181, %c0_182, %c0_183, %c0_184] : memref<1x2x1x64xf32, #tpu.memory_space<vmem>>, vector<1x1x1x64xf32>
    %251 = vector.shape_cast %250 : vector<1x1x1x64xf32> to vector<1x64xf32>
    %252 = vector.broadcast %251 : vector<1x64xf32> to vector<10x64xf32>
    %253 = arith.addf %249, %252 : vector<10x64xf32>
    %cst_185 = arith.constant 1.702000e+00 : f32
    %254 = vector.broadcast %cst_185 : f32 to vector<10x64xf32>
    %255 = arith.mulf %254, %253 : vector<10x64xf32>
    %256 = arith.negf %255 : vector<10x64xf32>
    %257 = math.exp %256 : vector<10x64xf32>
    %cst_186 = arith.constant 1.000000e+00 : f32
    %258 = vector.broadcast %cst_186 : f32 to vector<10x64xf32>
    %259 = arith.addf %258, %257 : vector<10x64xf32>
    %260 = arith.divf %258, %259 : vector<10x64xf32>
    %261 = arith.mulf %253, %260 : vector<10x64xf32>
    %c0_187 = arith.constant 0 : index
    %c0_188 = arith.constant 0 : index
    %c0_189 = arith.constant 0 : index
    %c0_190 = arith.constant 0 : index
    %262 = vector.load %arg18[%c0_187, %c0_188, %c0_189, %c0_190] : memref<1x2x64x32xf32, #tpu.memory_space<vmem>>, vector<1x1x64x32xf32>
    %263 = vector.shape_cast %262 : vector<1x1x64x32xf32> to vector<64x32xf32>
    %cst_191 = arith.constant dense<0.000000e+00> : vector<10x32xf32>
    %264 = tpu.matmul %261, %263, %cst_191 {dimension_numbers = #tpu.dot_dimension_numbers<[1], [0], [0], [1], [0, 0, 1, 1], [], []>} : vector<10x64xf32>, vector<64x32xf32>, vector<10x32xf32> -> vector<10x32xf32>
    %c0_192 = arith.constant 0 : index
    %c0_193 = arith.constant 0 : index
    %c0_194 = arith.constant 0 : index
    %c0_195 = arith.constant 0 : index
    %265 = vector.load %arg19[%c0_192, %c0_193, %c0_194, %c0_195] : memref<1x2x1x32xf32, #tpu.memory_space<vmem>>, vector<1x1x1x32xf32>
    %266 = vector.shape_cast %265 : vector<1x1x1x32xf32> to vector<1x32xf32>
    %267 = vector.broadcast %266 : vector<1x32xf32> to vector<10x32xf32>
    %268 = arith.addf %264, %267 : vector<10x32xf32>
    %269 = arith.addf %222, %268 : vector<10x32xf32>
    %c0_196 = arith.constant 0 : index
    %c1_197 = arith.constant 1 : index
    %c0_198 = arith.constant 0 : index
    %c0_199 = arith.constant 0 : index
    %270 = vector.load %arg8[%c0_196, %c1_197, %c0_198, %c0_199] : memref<1x2x1x32xf32, #tpu.memory_space<vmem>>, vector<1x1x1x32xf32>
    %271 = vector.shape_cast %270 : vector<1x1x1x32xf32> to vector<1x32xf32>
    %c0_200 = arith.constant 0 : index
    %c1_201 = arith.constant 1 : index
    %c0_202 = arith.constant 0 : index
    %c0_203 = arith.constant 0 : index
    %272 = vector.load %arg9[%c0_200, %c1_201, %c0_202, %c0_203] : memref<1x2x1x32xf32, #tpu.memory_space<vmem>>, vector<1x1x1x32xf32>
    %273 = vector.shape_cast %272 : vector<1x1x1x32xf32> to vector<1x32xf32>
    %cst_204 = arith.constant dense<0.000000e+00> : vector<10xf32>
    %274 = vector.multi_reduction <add>, %269, %cst_204 [1] : vector<10x32xf32> to vector<10xf32>
    %275 = vector.shape_cast %274 : vector<10xf32> to vector<10x1xf32>
    %cst_205 = arith.constant 3.200000e+01 : f32
    %276 = vector.broadcast %cst_205 : f32 to vector<10x1xf32>
    %277 = arith.divf %275, %276 : vector<10x1xf32>
    %278 = vector.broadcast %277 : vector<10x1xf32> to vector<10x32xf32>
    %279 = arith.subf %269, %278 : vector<10x32xf32>
    %280 = arith.mulf %279, %279 : vector<10x32xf32>
    %cst_206 = arith.constant dense<0.000000e+00> : vector<10xf32>
    %281 = vector.multi_reduction <add>, %280, %cst_206 [1] : vector<10x32xf32> to vector<10xf32>
    %282 = vector.shape_cast %281 : vector<10xf32> to vector<10x1xf32>
    %cst_207 = arith.constant 3.200000e+01 : f32
    %283 = vector.broadcast %cst_207 : f32 to vector<10x1xf32>
    %284 = arith.divf %282, %283 : vector<10x1xf32>
    %cst_208 = arith.constant 9.99999974E-6 : f32
    %285 = vector.broadcast %cst_208 : f32 to vector<10x1xf32>
    %286 = arith.addf %284, %285 : vector<10x1xf32>
    %287 = math.rsqrt %286 : vector<10x1xf32>
    %288 = vector.broadcast %287 : vector<10x1xf32> to vector<10x32xf32>
    %289 = arith.mulf %279, %288 : vector<10x32xf32>
    %290 = vector.broadcast %271 : vector<1x32xf32> to vector<10x32xf32>
    %291 = arith.mulf %289, %290 : vector<10x32xf32>
    %292 = vector.broadcast %273 : vector<1x32xf32> to vector<10x32xf32>
    %293 = arith.addf %291, %292 : vector<10x32xf32>
    %c0_209 = arith.constant 0 : index
    %c1_210 = arith.constant 1 : index
    %c0_211 = arith.constant 0 : index
    %c0_212 = arith.constant 0 : index
    %294 = vector.load %arg12[%c0_209, %c1_210, %c0_211, %c0_212] : memref<1x2x32x32xf32, #tpu.memory_space<vmem>>, vector<1x1x32x32xf32>
    %295 = vector.shape_cast %294 : vector<1x1x32x32xf32> to vector<32x32xf32>
    %c0_213 = arith.constant 0 : index
    %c12 = arith.constant 12 : index
    %c0_214 = arith.constant 0 : index
    %c0_215 = arith.constant 0 : index
    %296 = vector.load %arg10[%c0_213, %c12, %c0_214, %c0_215] : memref<1x24x32x8xf32, #tpu.memory_space<vmem>>, vector<1x1x32x8xf32>
    %297 = vector.shape_cast %296 : vector<1x1x32x8xf32> to vector<32x8xf32>
    %cst_216 = arith.constant dense<0.000000e+00> : vector<10x8xf32>
    %298 = tpu.matmul %293, %297, %cst_216 {dimension_numbers = #tpu.dot_dimension_numbers<[1], [0], [0], [1], [0, 0, 1, 1], [], []>} : vector<10x32xf32>, vector<32x8xf32>, vector<10x8xf32> -> vector<10x8xf32>
    %c0_217 = arith.constant 0 : index
    %c12_218 = arith.constant 12 : index
    %c0_219 = arith.constant 0 : index
    %c0_220 = arith.constant 0 : index
    %299 = vector.load %arg11[%c0_217, %c12_218, %c0_219, %c0_220] : memref<1x24x1x8xf32, #tpu.memory_space<vmem>>, vector<1x1x1x8xf32>
    %300 = vector.shape_cast %299 : vector<1x1x1x8xf32> to vector<1x8xf32>
    %301 = vector.broadcast %300 : vector<1x8xf32> to vector<10x8xf32>
    %302 = arith.addf %298, %301 : vector<10x8xf32>
    %cst_221 = arith.constant 0.353553385 : f32
    %303 = vector.broadcast %cst_221 : f32 to vector<10x8xf32>
    %304 = arith.mulf %302, %303 : vector<10x8xf32>
    %c0_222 = arith.constant 0 : index
    %c16 = arith.constant 16 : index
    %c0_223 = arith.constant 0 : index
    %c0_224 = arith.constant 0 : index
    %305 = vector.load %arg10[%c0_222, %c16, %c0_223, %c0_224] : memref<1x24x32x8xf32, #tpu.memory_space<vmem>>, vector<1x1x32x8xf32>
    %306 = vector.shape_cast %305 : vector<1x1x32x8xf32> to vector<32x8xf32>
    %cst_225 = arith.constant dense<0.000000e+00> : vector<10x8xf32>
    %307 = tpu.matmul %293, %306, %cst_225 {dimension_numbers = #tpu.dot_dimension_numbers<[1], [0], [0], [1], [0, 0, 1, 1], [], []>} : vector<10x32xf32>, vector<32x8xf32>, vector<10x8xf32> -> vector<10x8xf32>
    %c0_226 = arith.constant 0 : index
    %c16_227 = arith.constant 16 : index
    %c0_228 = arith.constant 0 : index
    %c0_229 = arith.constant 0 : index
    %308 = vector.load %arg11[%c0_226, %c16_227, %c0_228, %c0_229] : memref<1x24x1x8xf32, #tpu.memory_space<vmem>>, vector<1x1x1x8xf32>
    %309 = vector.shape_cast %308 : vector<1x1x1x8xf32> to vector<1x8xf32>
    %310 = vector.broadcast %309 : vector<1x8xf32> to vector<10x8xf32>
    %311 = arith.addf %307, %310 : vector<10x8xf32>
    %c0_230 = arith.constant 0 : index
    %c20 = arith.constant 20 : index
    %c0_231 = arith.constant 0 : index
    %c0_232 = arith.constant 0 : index
    %312 = vector.load %arg10[%c0_230, %c20, %c0_231, %c0_232] : memref<1x24x32x8xf32, #tpu.memory_space<vmem>>, vector<1x1x32x8xf32>
    %313 = vector.shape_cast %312 : vector<1x1x32x8xf32> to vector<32x8xf32>
    %cst_233 = arith.constant dense<0.000000e+00> : vector<10x8xf32>
    %314 = tpu.matmul %293, %313, %cst_233 {dimension_numbers = #tpu.dot_dimension_numbers<[1], [0], [0], [1], [0, 0, 1, 1], [], []>} : vector<10x32xf32>, vector<32x8xf32>, vector<10x8xf32> -> vector<10x8xf32>
    %c0_234 = arith.constant 0 : index
    %c20_235 = arith.constant 20 : index
    %c0_236 = arith.constant 0 : index
    %c0_237 = arith.constant 0 : index
    %315 = vector.load %arg11[%c0_234, %c20_235, %c0_236, %c0_237] : memref<1x24x1x8xf32, #tpu.memory_space<vmem>>, vector<1x1x1x8xf32>
    %316 = vector.shape_cast %315 : vector<1x1x1x8xf32> to vector<1x8xf32>
    %317 = vector.broadcast %316 : vector<1x8xf32> to vector<10x8xf32>
    %318 = arith.addf %314, %317 : vector<10x8xf32>
    %319 = tpu.transpose %311, [1, 0] : vector<10x8xf32> -> vector<8x10xf32>
    %cst_238 = arith.constant dense<0.000000e+00> : vector<10x10xf32>
    %320 = tpu.matmul %304, %319, %cst_238 {dimension_numbers = #tpu.dot_dimension_numbers<[1], [0], [0], [1], [0, 0, 1, 1], [], []>} : vector<10x8xf32>, vector<8x10xf32>, vector<10x10xf32> -> vector<10x10xf32>
    %321 = arith.addf %320, %0 : vector<10x10xf32>
    %cst_239 = arith.constant dense<0xFF800000> : vector<10xf32>
    %322 = vector.multi_reduction <maximumf>, %321, %cst_239 [1] : vector<10x10xf32> to vector<10xf32>
    %323 = vector.shape_cast %322 : vector<10xf32> to vector<10x1xf32>
    %324 = vector.broadcast %323 : vector<10x1xf32> to vector<10x10xf32>
    %325 = arith.subf %321, %324 : vector<10x10xf32>
    %326 = math.exp %325 : vector<10x10xf32>
    %cst_240 = arith.constant dense<0.000000e+00> : vector<10xf32>
    %327 = vector.multi_reduction <add>, %326, %cst_240 [1] : vector<10x10xf32> to vector<10xf32>
    %328 = vector.shape_cast %327 : vector<10xf32> to vector<10x1xf32>
    %329 = tpu.reciprocal %328 {approx = true} : vector<10x1xf32> -> vector<10x1xf32>
    %330 = vector.broadcast %329 : vector<10x1xf32> to vector<10x10xf32>
    %331 = arith.mulf %326, %330 : vector<10x10xf32>
    %cst_241 = arith.constant dense<0.000000e+00> : vector<10x8xf32>
    %332 = tpu.matmul %331, %318, %cst_241 {dimension_numbers = #tpu.dot_dimension_numbers<[1], [0], [0], [1], [0, 0, 1, 1], [], []>} : vector<10x10xf32>, vector<10x8xf32>, vector<10x8xf32> -> vector<10x8xf32>
    %333 = vector.extract_strided_slice %295 {offsets = [0, 0], sizes = [8, 32], strides = [1, 1]} : vector<32x32xf32> to vector<8x32xf32>
    %cst_242 = arith.constant dense<0.000000e+00> : vector<10x32xf32>
    %334 = tpu.matmul %332, %333, %cst_242 {dimension_numbers = #tpu.dot_dimension_numbers<[1], [0], [0], [1], [0, 0, 1, 1], [], []>} : vector<10x8xf32>, vector<8x32xf32>, vector<10x32xf32> -> vector<10x32xf32>
    %c0_243 = arith.constant 0 : index
    %c13 = arith.constant 13 : index
    %c0_244 = arith.constant 0 : index
    %c0_245 = arith.constant 0 : index
    %335 = vector.load %arg10[%c0_243, %c13, %c0_244, %c0_245] : memref<1x24x32x8xf32, #tpu.memory_space<vmem>>, vector<1x1x32x8xf32>
    %336 = vector.shape_cast %335 : vector<1x1x32x8xf32> to vector<32x8xf32>
    %cst_246 = arith.constant dense<0.000000e+00> : vector<10x8xf32>
    %337 = tpu.matmul %293, %336, %cst_246 {dimension_numbers = #tpu.dot_dimension_numbers<[1], [0], [0], [1], [0, 0, 1, 1], [], []>} : vector<10x32xf32>, vector<32x8xf32>, vector<10x8xf32> -> vector<10x8xf32>
    %c0_247 = arith.constant 0 : index
    %c13_248 = arith.constant 13 : index
    %c0_249 = arith.constant 0 : index
    %c0_250 = arith.constant 0 : index
    %338 = vector.load %arg11[%c0_247, %c13_248, %c0_249, %c0_250] : memref<1x24x1x8xf32, #tpu.memory_space<vmem>>, vector<1x1x1x8xf32>
    %339 = vector.shape_cast %338 : vector<1x1x1x8xf32> to vector<1x8xf32>
    %340 = vector.broadcast %339 : vector<1x8xf32> to vector<10x8xf32>
    %341 = arith.addf %337, %340 : vector<10x8xf32>
    %cst_251 = arith.constant 0.353553385 : f32
    %342 = vector.broadcast %cst_251 : f32 to vector<10x8xf32>
    %343 = arith.mulf %341, %342 : vector<10x8xf32>
    %c0_252 = arith.constant 0 : index
    %c17 = arith.constant 17 : index
    %c0_253 = arith.constant 0 : index
    %c0_254 = arith.constant 0 : index
    %344 = vector.load %arg10[%c0_252, %c17, %c0_253, %c0_254] : memref<1x24x32x8xf32, #tpu.memory_space<vmem>>, vector<1x1x32x8xf32>
    %345 = vector.shape_cast %344 : vector<1x1x32x8xf32> to vector<32x8xf32>
    %cst_255 = arith.constant dense<0.000000e+00> : vector<10x8xf32>
    %346 = tpu.matmul %293, %345, %cst_255 {dimension_numbers = #tpu.dot_dimension_numbers<[1], [0], [0], [1], [0, 0, 1, 1], [], []>} : vector<10x32xf32>, vector<32x8xf32>, vector<10x8xf32> -> vector<10x8xf32>
    %c0_256 = arith.constant 0 : index
    %c17_257 = arith.constant 17 : index
    %c0_258 = arith.constant 0 : index
    %c0_259 = arith.constant 0 : index
    %347 = vector.load %arg11[%c0_256, %c17_257, %c0_258, %c0_259] : memref<1x24x1x8xf32, #tpu.memory_space<vmem>>, vector<1x1x1x8xf32>
    %348 = vector.shape_cast %347 : vector<1x1x1x8xf32> to vector<1x8xf32>
    %349 = vector.broadcast %348 : vector<1x8xf32> to vector<10x8xf32>
    %350 = arith.addf %346, %349 : vector<10x8xf32>
    %c0_260 = arith.constant 0 : index
    %c21 = arith.constant 21 : index
    %c0_261 = arith.constant 0 : index
    %c0_262 = arith.constant 0 : index
    %351 = vector.load %arg10[%c0_260, %c21, %c0_261, %c0_262] : memref<1x24x32x8xf32, #tpu.memory_space<vmem>>, vector<1x1x32x8xf32>
    %352 = vector.shape_cast %351 : vector<1x1x32x8xf32> to vector<32x8xf32>
    %cst_263 = arith.constant dense<0.000000e+00> : vector<10x8xf32>
    %353 = tpu.matmul %293, %352, %cst_263 {dimension_numbers = #tpu.dot_dimension_numbers<[1], [0], [0], [1], [0, 0, 1, 1], [], []>} : vector<10x32xf32>, vector<32x8xf32>, vector<10x8xf32> -> vector<10x8xf32>
    %c0_264 = arith.constant 0 : index
    %c21_265 = arith.constant 21 : index
    %c0_266 = arith.constant 0 : index
    %c0_267 = arith.constant 0 : index
    %354 = vector.load %arg11[%c0_264, %c21_265, %c0_266, %c0_267] : memref<1x24x1x8xf32, #tpu.memory_space<vmem>>, vector<1x1x1x8xf32>
    %355 = vector.shape_cast %354 : vector<1x1x1x8xf32> to vector<1x8xf32>
    %356 = vector.broadcast %355 : vector<1x8xf32> to vector<10x8xf32>
    %357 = arith.addf %353, %356 : vector<10x8xf32>
    %358 = tpu.transpose %350, [1, 0] : vector<10x8xf32> -> vector<8x10xf32>
    %cst_268 = arith.constant dense<0.000000e+00> : vector<10x10xf32>
    %359 = tpu.matmul %343, %358, %cst_268 {dimension_numbers = #tpu.dot_dimension_numbers<[1], [0], [0], [1], [0, 0, 1, 1], [], []>} : vector<10x8xf32>, vector<8x10xf32>, vector<10x10xf32> -> vector<10x10xf32>
    %360 = arith.addf %359, %0 : vector<10x10xf32>
    %cst_269 = arith.constant dense<0xFF800000> : vector<10xf32>
    %361 = vector.multi_reduction <maximumf>, %360, %cst_269 [1] : vector<10x10xf32> to vector<10xf32>
    %362 = vector.shape_cast %361 : vector<10xf32> to vector<10x1xf32>
    %363 = vector.broadcast %362 : vector<10x1xf32> to vector<10x10xf32>
    %364 = arith.subf %360, %363 : vector<10x10xf32>
    %365 = math.exp %364 : vector<10x10xf32>
    %cst_270 = arith.constant dense<0.000000e+00> : vector<10xf32>
    %366 = vector.multi_reduction <add>, %365, %cst_270 [1] : vector<10x10xf32> to vector<10xf32>
    %367 = vector.shape_cast %366 : vector<10xf32> to vector<10x1xf32>
    %368 = tpu.reciprocal %367 {approx = true} : vector<10x1xf32> -> vector<10x1xf32>
    %369 = vector.broadcast %368 : vector<10x1xf32> to vector<10x10xf32>
    %370 = arith.mulf %365, %369 : vector<10x10xf32>
    %cst_271 = arith.constant dense<0.000000e+00> : vector<10x8xf32>
    %371 = tpu.matmul %370, %357, %cst_271 {dimension_numbers = #tpu.dot_dimension_numbers<[1], [0], [0], [1], [0, 0, 1, 1], [], []>} : vector<10x10xf32>, vector<10x8xf32>, vector<10x8xf32> -> vector<10x8xf32>
    %372 = vector.extract_strided_slice %295 {offsets = [8, 0], sizes = [8, 32], strides = [1, 1]} : vector<32x32xf32> to vector<8x32xf32>
    %cst_272 = arith.constant dense<0.000000e+00> : vector<10x32xf32>
    %373 = tpu.matmul %371, %372, %cst_272 {dimension_numbers = #tpu.dot_dimension_numbers<[1], [0], [0], [1], [0, 0, 1, 1], [], []>} : vector<10x8xf32>, vector<8x32xf32>, vector<10x32xf32> -> vector<10x32xf32>
    %374 = arith.addf %334, %373 : vector<10x32xf32>
    %c0_273 = arith.constant 0 : index
    %c14 = arith.constant 14 : index
    %c0_274 = arith.constant 0 : index
    %c0_275 = arith.constant 0 : index
    %375 = vector.load %arg10[%c0_273, %c14, %c0_274, %c0_275] : memref<1x24x32x8xf32, #tpu.memory_space<vmem>>, vector<1x1x32x8xf32>
    %376 = vector.shape_cast %375 : vector<1x1x32x8xf32> to vector<32x8xf32>
    %cst_276 = arith.constant dense<0.000000e+00> : vector<10x8xf32>
    %377 = tpu.matmul %293, %376, %cst_276 {dimension_numbers = #tpu.dot_dimension_numbers<[1], [0], [0], [1], [0, 0, 1, 1], [], []>} : vector<10x32xf32>, vector<32x8xf32>, vector<10x8xf32> -> vector<10x8xf32>
    %c0_277 = arith.constant 0 : index
    %c14_278 = arith.constant 14 : index
    %c0_279 = arith.constant 0 : index
    %c0_280 = arith.constant 0 : index
    %378 = vector.load %arg11[%c0_277, %c14_278, %c0_279, %c0_280] : memref<1x24x1x8xf32, #tpu.memory_space<vmem>>, vector<1x1x1x8xf32>
    %379 = vector.shape_cast %378 : vector<1x1x1x8xf32> to vector<1x8xf32>
    %380 = vector.broadcast %379 : vector<1x8xf32> to vector<10x8xf32>
    %381 = arith.addf %377, %380 : vector<10x8xf32>
    %cst_281 = arith.constant 0.353553385 : f32
    %382 = vector.broadcast %cst_281 : f32 to vector<10x8xf32>
    %383 = arith.mulf %381, %382 : vector<10x8xf32>
    %c0_282 = arith.constant 0 : index
    %c18 = arith.constant 18 : index
    %c0_283 = arith.constant 0 : index
    %c0_284 = arith.constant 0 : index
    %384 = vector.load %arg10[%c0_282, %c18, %c0_283, %c0_284] : memref<1x24x32x8xf32, #tpu.memory_space<vmem>>, vector<1x1x32x8xf32>
    %385 = vector.shape_cast %384 : vector<1x1x32x8xf32> to vector<32x8xf32>
    %cst_285 = arith.constant dense<0.000000e+00> : vector<10x8xf32>
    %386 = tpu.matmul %293, %385, %cst_285 {dimension_numbers = #tpu.dot_dimension_numbers<[1], [0], [0], [1], [0, 0, 1, 1], [], []>} : vector<10x32xf32>, vector<32x8xf32>, vector<10x8xf32> -> vector<10x8xf32>
    %c0_286 = arith.constant 0 : index
    %c18_287 = arith.constant 18 : index
    %c0_288 = arith.constant 0 : index
    %c0_289 = arith.constant 0 : index
    %387 = vector.load %arg11[%c0_286, %c18_287, %c0_288, %c0_289] : memref<1x24x1x8xf32, #tpu.memory_space<vmem>>, vector<1x1x1x8xf32>
    %388 = vector.shape_cast %387 : vector<1x1x1x8xf32> to vector<1x8xf32>
    %389 = vector.broadcast %388 : vector<1x8xf32> to vector<10x8xf32>
    %390 = arith.addf %386, %389 : vector<10x8xf32>
    %c0_290 = arith.constant 0 : index
    %c22 = arith.constant 22 : index
    %c0_291 = arith.constant 0 : index
    %c0_292 = arith.constant 0 : index
    %391 = vector.load %arg10[%c0_290, %c22, %c0_291, %c0_292] : memref<1x24x32x8xf32, #tpu.memory_space<vmem>>, vector<1x1x32x8xf32>
    %392 = vector.shape_cast %391 : vector<1x1x32x8xf32> to vector<32x8xf32>
    %cst_293 = arith.constant dense<0.000000e+00> : vector<10x8xf32>
    %393 = tpu.matmul %293, %392, %cst_293 {dimension_numbers = #tpu.dot_dimension_numbers<[1], [0], [0], [1], [0, 0, 1, 1], [], []>} : vector<10x32xf32>, vector<32x8xf32>, vector<10x8xf32> -> vector<10x8xf32>
    %c0_294 = arith.constant 0 : index
    %c22_295 = arith.constant 22 : index
    %c0_296 = arith.constant 0 : index
    %c0_297 = arith.constant 0 : index
    %394 = vector.load %arg11[%c0_294, %c22_295, %c0_296, %c0_297] : memref<1x24x1x8xf32, #tpu.memory_space<vmem>>, vector<1x1x1x8xf32>
    %395 = vector.shape_cast %394 : vector<1x1x1x8xf32> to vector<1x8xf32>
    %396 = vector.broadcast %395 : vector<1x8xf32> to vector<10x8xf32>
    %397 = arith.addf %393, %396 : vector<10x8xf32>
    %398 = tpu.transpose %390, [1, 0] : vector<10x8xf32> -> vector<8x10xf32>
    %cst_298 = arith.constant dense<0.000000e+00> : vector<10x10xf32>
    %399 = tpu.matmul %383, %398, %cst_298 {dimension_numbers = #tpu.dot_dimension_numbers<[1], [0], [0], [1], [0, 0, 1, 1], [], []>} : vector<10x8xf32>, vector<8x10xf32>, vector<10x10xf32> -> vector<10x10xf32>
    %400 = arith.addf %399, %0 : vector<10x10xf32>
    %cst_299 = arith.constant dense<0xFF800000> : vector<10xf32>
    %401 = vector.multi_reduction <maximumf>, %400, %cst_299 [1] : vector<10x10xf32> to vector<10xf32>
    %402 = vector.shape_cast %401 : vector<10xf32> to vector<10x1xf32>
    %403 = vector.broadcast %402 : vector<10x1xf32> to vector<10x10xf32>
    %404 = arith.subf %400, %403 : vector<10x10xf32>
    %405 = math.exp %404 : vector<10x10xf32>
    %cst_300 = arith.constant dense<0.000000e+00> : vector<10xf32>
    %406 = vector.multi_reduction <add>, %405, %cst_300 [1] : vector<10x10xf32> to vector<10xf32>
    %407 = vector.shape_cast %406 : vector<10xf32> to vector<10x1xf32>
    %408 = tpu.reciprocal %407 {approx = true} : vector<10x1xf32> -> vector<10x1xf32>
    %409 = vector.broadcast %408 : vector<10x1xf32> to vector<10x10xf32>
    %410 = arith.mulf %405, %409 : vector<10x10xf32>
    %cst_301 = arith.constant dense<0.000000e+00> : vector<10x8xf32>
    %411 = tpu.matmul %410, %397, %cst_301 {dimension_numbers = #tpu.dot_dimension_numbers<[1], [0], [0], [1], [0, 0, 1, 1], [], []>} : vector<10x10xf32>, vector<10x8xf32>, vector<10x8xf32> -> vector<10x8xf32>
    %412 = vector.extract_strided_slice %295 {offsets = [16, 0], sizes = [8, 32], strides = [1, 1]} : vector<32x32xf32> to vector<8x32xf32>
    %cst_302 = arith.constant dense<0.000000e+00> : vector<10x32xf32>
    %413 = tpu.matmul %411, %412, %cst_302 {dimension_numbers = #tpu.dot_dimension_numbers<[1], [0], [0], [1], [0, 0, 1, 1], [], []>} : vector<10x8xf32>, vector<8x32xf32>, vector<10x32xf32> -> vector<10x32xf32>
    %414 = arith.addf %374, %413 : vector<10x32xf32>
    %c0_303 = arith.constant 0 : index
    %c15 = arith.constant 15 : index
    %c0_304 = arith.constant 0 : index
    %c0_305 = arith.constant 0 : index
    %415 = vector.load %arg10[%c0_303, %c15, %c0_304, %c0_305] : memref<1x24x32x8xf32, #tpu.memory_space<vmem>>, vector<1x1x32x8xf32>
    %416 = vector.shape_cast %415 : vector<1x1x32x8xf32> to vector<32x8xf32>
    %cst_306 = arith.constant dense<0.000000e+00> : vector<10x8xf32>
    %417 = tpu.matmul %293, %416, %cst_306 {dimension_numbers = #tpu.dot_dimension_numbers<[1], [0], [0], [1], [0, 0, 1, 1], [], []>} : vector<10x32xf32>, vector<32x8xf32>, vector<10x8xf32> -> vector<10x8xf32>
    %c0_307 = arith.constant 0 : index
    %c15_308 = arith.constant 15 : index
    %c0_309 = arith.constant 0 : index
    %c0_310 = arith.constant 0 : index
    %418 = vector.load %arg11[%c0_307, %c15_308, %c0_309, %c0_310] : memref<1x24x1x8xf32, #tpu.memory_space<vmem>>, vector<1x1x1x8xf32>
    %419 = vector.shape_cast %418 : vector<1x1x1x8xf32> to vector<1x8xf32>
    %420 = vector.broadcast %419 : vector<1x8xf32> to vector<10x8xf32>
    %421 = arith.addf %417, %420 : vector<10x8xf32>
    %cst_311 = arith.constant 0.353553385 : f32
    %422 = vector.broadcast %cst_311 : f32 to vector<10x8xf32>
    %423 = arith.mulf %421, %422 : vector<10x8xf32>
    %c0_312 = arith.constant 0 : index
    %c19 = arith.constant 19 : index
    %c0_313 = arith.constant 0 : index
    %c0_314 = arith.constant 0 : index
    %424 = vector.load %arg10[%c0_312, %c19, %c0_313, %c0_314] : memref<1x24x32x8xf32, #tpu.memory_space<vmem>>, vector<1x1x32x8xf32>
    %425 = vector.shape_cast %424 : vector<1x1x32x8xf32> to vector<32x8xf32>
    %cst_315 = arith.constant dense<0.000000e+00> : vector<10x8xf32>
    %426 = tpu.matmul %293, %425, %cst_315 {dimension_numbers = #tpu.dot_dimension_numbers<[1], [0], [0], [1], [0, 0, 1, 1], [], []>} : vector<10x32xf32>, vector<32x8xf32>, vector<10x8xf32> -> vector<10x8xf32>
    %c0_316 = arith.constant 0 : index
    %c19_317 = arith.constant 19 : index
    %c0_318 = arith.constant 0 : index
    %c0_319 = arith.constant 0 : index
    %427 = vector.load %arg11[%c0_316, %c19_317, %c0_318, %c0_319] : memref<1x24x1x8xf32, #tpu.memory_space<vmem>>, vector<1x1x1x8xf32>
    %428 = vector.shape_cast %427 : vector<1x1x1x8xf32> to vector<1x8xf32>
    %429 = vector.broadcast %428 : vector<1x8xf32> to vector<10x8xf32>
    %430 = arith.addf %426, %429 : vector<10x8xf32>
    %c0_320 = arith.constant 0 : index
    %c23 = arith.constant 23 : index
    %c0_321 = arith.constant 0 : index
    %c0_322 = arith.constant 0 : index
    %431 = vector.load %arg10[%c0_320, %c23, %c0_321, %c0_322] : memref<1x24x32x8xf32, #tpu.memory_space<vmem>>, vector<1x1x32x8xf32>
    %432 = vector.shape_cast %431 : vector<1x1x32x8xf32> to vector<32x8xf32>
    %cst_323 = arith.constant dense<0.000000e+00> : vector<10x8xf32>
    %433 = tpu.matmul %293, %432, %cst_323 {dimension_numbers = #tpu.dot_dimension_numbers<[1], [0], [0], [1], [0, 0, 1, 1], [], []>} : vector<10x32xf32>, vector<32x8xf32>, vector<10x8xf32> -> vector<10x8xf32>
    %c0_324 = arith.constant 0 : index
    %c23_325 = arith.constant 23 : index
    %c0_326 = arith.constant 0 : index
    %c0_327 = arith.constant 0 : index
    %434 = vector.load %arg11[%c0_324, %c23_325, %c0_326, %c0_327] : memref<1x24x1x8xf32, #tpu.memory_space<vmem>>, vector<1x1x1x8xf32>
    %435 = vector.shape_cast %434 : vector<1x1x1x8xf32> to vector<1x8xf32>
    %436 = vector.broadcast %435 : vector<1x8xf32> to vector<10x8xf32>
    %437 = arith.addf %433, %436 : vector<10x8xf32>
    %438 = tpu.transpose %430, [1, 0] : vector<10x8xf32> -> vector<8x10xf32>
    %cst_328 = arith.constant dense<0.000000e+00> : vector<10x10xf32>
    %439 = tpu.matmul %423, %438, %cst_328 {dimension_numbers = #tpu.dot_dimension_numbers<[1], [0], [0], [1], [0, 0, 1, 1], [], []>} : vector<10x8xf32>, vector<8x10xf32>, vector<10x10xf32> -> vector<10x10xf32>
    %440 = arith.addf %439, %0 : vector<10x10xf32>
    %cst_329 = arith.constant dense<0xFF800000> : vector<10xf32>
    %441 = vector.multi_reduction <maximumf>, %440, %cst_329 [1] : vector<10x10xf32> to vector<10xf32>
    %442 = vector.shape_cast %441 : vector<10xf32> to vector<10x1xf32>
    %443 = vector.broadcast %442 : vector<10x1xf32> to vector<10x10xf32>
    %444 = arith.subf %440, %443 : vector<10x10xf32>
    %445 = math.exp %444 : vector<10x10xf32>
    %cst_330 = arith.constant dense<0.000000e+00> : vector<10xf32>
    %446 = vector.multi_reduction <add>, %445, %cst_330 [1] : vector<10x10xf32> to vector<10xf32>
    %447 = vector.shape_cast %446 : vector<10xf32> to vector<10x1xf32>
    %448 = tpu.reciprocal %447 {approx = true} : vector<10x1xf32> -> vector<10x1xf32>
    %449 = vector.broadcast %448 : vector<10x1xf32> to vector<10x10xf32>
    %450 = arith.mulf %445, %449 : vector<10x10xf32>
    %cst_331 = arith.constant dense<0.000000e+00> : vector<10x8xf32>
    %451 = tpu.matmul %450, %437, %cst_331 {dimension_numbers = #tpu.dot_dimension_numbers<[1], [0], [0], [1], [0, 0, 1, 1], [], []>} : vector<10x10xf32>, vector<10x8xf32>, vector<10x8xf32> -> vector<10x8xf32>
    %452 = vector.extract_strided_slice %295 {offsets = [24, 0], sizes = [8, 32], strides = [1, 1]} : vector<32x32xf32> to vector<8x32xf32>
    %cst_332 = arith.constant dense<0.000000e+00> : vector<10x32xf32>
    %453 = tpu.matmul %451, %452, %cst_332 {dimension_numbers = #tpu.dot_dimension_numbers<[1], [0], [0], [1], [0, 0, 1, 1], [], []>} : vector<10x8xf32>, vector<8x32xf32>, vector<10x32xf32> -> vector<10x32xf32>
    %454 = arith.addf %414, %453 : vector<10x32xf32>
    %455 = arith.addf %269, %454 : vector<10x32xf32>
    %c0_333 = arith.constant 0 : index
    %c1_334 = arith.constant 1 : index
    %c0_335 = arith.constant 0 : index
    %c0_336 = arith.constant 0 : index
    %456 = vector.load %arg13[%c0_333, %c1_334, %c0_335, %c0_336] : memref<1x2x1x32xf32, #tpu.memory_space<vmem>>, vector<1x1x1x32xf32>
    %457 = vector.shape_cast %456 : vector<1x1x1x32xf32> to vector<1x32xf32>
    %458 = vector.broadcast %457 : vector<1x32xf32> to vector<10x32xf32>
    %459 = arith.addf %455, %458 : vector<10x32xf32>
    %c0_337 = arith.constant 0 : index
    %c1_338 = arith.constant 1 : index
    %c0_339 = arith.constant 0 : index
    %c0_340 = arith.constant 0 : index
    %460 = vector.load %arg14[%c0_337, %c1_338, %c0_339, %c0_340] : memref<1x2x1x32xf32, #tpu.memory_space<vmem>>, vector<1x1x1x32xf32>
    %461 = vector.shape_cast %460 : vector<1x1x1x32xf32> to vector<1x32xf32>
    %c0_341 = arith.constant 0 : index
    %c1_342 = arith.constant 1 : index
    %c0_343 = arith.constant 0 : index
    %c0_344 = arith.constant 0 : index
    %462 = vector.load %arg15[%c0_341, %c1_342, %c0_343, %c0_344] : memref<1x2x1x32xf32, #tpu.memory_space<vmem>>, vector<1x1x1x32xf32>
    %463 = vector.shape_cast %462 : vector<1x1x1x32xf32> to vector<1x32xf32>
    %cst_345 = arith.constant dense<0.000000e+00> : vector<10xf32>
    %464 = vector.multi_reduction <add>, %459, %cst_345 [1] : vector<10x32xf32> to vector<10xf32>
    %465 = vector.shape_cast %464 : vector<10xf32> to vector<10x1xf32>
    %cst_346 = arith.constant 3.200000e+01 : f32
    %466 = vector.broadcast %cst_346 : f32 to vector<10x1xf32>
    %467 = arith.divf %465, %466 : vector<10x1xf32>
    %468 = vector.broadcast %467 : vector<10x1xf32> to vector<10x32xf32>
    %469 = arith.subf %459, %468 : vector<10x32xf32>
    %470 = arith.mulf %469, %469 : vector<10x32xf32>
    %cst_347 = arith.constant dense<0.000000e+00> : vector<10xf32>
    %471 = vector.multi_reduction <add>, %470, %cst_347 [1] : vector<10x32xf32> to vector<10xf32>
    %472 = vector.shape_cast %471 : vector<10xf32> to vector<10x1xf32>
    %cst_348 = arith.constant 3.200000e+01 : f32
    %473 = vector.broadcast %cst_348 : f32 to vector<10x1xf32>
    %474 = arith.divf %472, %473 : vector<10x1xf32>
    %cst_349 = arith.constant 9.99999974E-6 : f32
    %475 = vector.broadcast %cst_349 : f32 to vector<10x1xf32>
    %476 = arith.addf %474, %475 : vector<10x1xf32>
    %477 = math.rsqrt %476 : vector<10x1xf32>
    %478 = vector.broadcast %477 : vector<10x1xf32> to vector<10x32xf32>
    %479 = arith.mulf %469, %478 : vector<10x32xf32>
    %480 = vector.broadcast %461 : vector<1x32xf32> to vector<10x32xf32>
    %481 = arith.mulf %479, %480 : vector<10x32xf32>
    %482 = vector.broadcast %463 : vector<1x32xf32> to vector<10x32xf32>
    %483 = arith.addf %481, %482 : vector<10x32xf32>
    %c0_350 = arith.constant 0 : index
    %c1_351 = arith.constant 1 : index
    %c0_352 = arith.constant 0 : index
    %c0_353 = arith.constant 0 : index
    %484 = vector.load %arg16[%c0_350, %c1_351, %c0_352, %c0_353] : memref<1x2x32x64xf32, #tpu.memory_space<vmem>>, vector<1x1x32x64xf32>
    %485 = vector.shape_cast %484 : vector<1x1x32x64xf32> to vector<32x64xf32>
    %cst_354 = arith.constant dense<0.000000e+00> : vector<10x64xf32>
    %486 = tpu.matmul %483, %485, %cst_354 {dimension_numbers = #tpu.dot_dimension_numbers<[1], [0], [0], [1], [0, 0, 1, 1], [], []>} : vector<10x32xf32>, vector<32x64xf32>, vector<10x64xf32> -> vector<10x64xf32>
    %c0_355 = arith.constant 0 : index
    %c1_356 = arith.constant 1 : index
    %c0_357 = arith.constant 0 : index
    %c0_358 = arith.constant 0 : index
    %487 = vector.load %arg17[%c0_355, %c1_356, %c0_357, %c0_358] : memref<1x2x1x64xf32, #tpu.memory_space<vmem>>, vector<1x1x1x64xf32>
    %488 = vector.shape_cast %487 : vector<1x1x1x64xf32> to vector<1x64xf32>
    %489 = vector.broadcast %488 : vector<1x64xf32> to vector<10x64xf32>
    %490 = arith.addf %486, %489 : vector<10x64xf32>
    %cst_359 = arith.constant 1.702000e+00 : f32
    %491 = vector.broadcast %cst_359 : f32 to vector<10x64xf32>
    %492 = arith.mulf %491, %490 : vector<10x64xf32>
    %493 = arith.negf %492 : vector<10x64xf32>
    %494 = math.exp %493 : vector<10x64xf32>
    %cst_360 = arith.constant 1.000000e+00 : f32
    %495 = vector.broadcast %cst_360 : f32 to vector<10x64xf32>
    %496 = arith.addf %495, %494 : vector<10x64xf32>
    %497 = arith.divf %495, %496 : vector<10x64xf32>
    %498 = arith.mulf %490, %497 : vector<10x64xf32>
    %c0_361 = arith.constant 0 : index
    %c1_362 = arith.constant 1 : index
    %c0_363 = arith.constant 0 : index
    %c0_364 = arith.constant 0 : index
    %499 = vector.load %arg18[%c0_361, %c1_362, %c0_363, %c0_364] : memref<1x2x64x32xf32, #tpu.memory_space<vmem>>, vector<1x1x64x32xf32>
    %500 = vector.shape_cast %499 : vector<1x1x64x32xf32> to vector<64x32xf32>
    %cst_365 = arith.constant dense<0.000000e+00> : vector<10x32xf32>
    %501 = tpu.matmul %498, %500, %cst_365 {dimension_numbers = #tpu.dot_dimension_numbers<[1], [0], [0], [1], [0, 0, 1, 1], [], []>} : vector<10x64xf32>, vector<64x32xf32>, vector<10x32xf32> -> vector<10x32xf32>
    %c0_366 = arith.constant 0 : index
    %c1_367 = arith.constant 1 : index
    %c0_368 = arith.constant 0 : index
    %c0_369 = arith.constant 0 : index
    %502 = vector.load %arg19[%c0_366, %c1_367, %c0_368, %c0_369] : memref<1x2x1x32xf32, #tpu.memory_space<vmem>>, vector<1x1x1x32xf32>
    %503 = vector.shape_cast %502 : vector<1x1x1x32xf32> to vector<1x32xf32>
    %504 = vector.broadcast %503 : vector<1x32xf32> to vector<10x32xf32>
    %505 = arith.addf %501, %504 : vector<10x32xf32>
    %506 = arith.addf %459, %505 : vector<10x32xf32>
    %c0_370 = arith.constant 0 : index
    %c0_371 = arith.constant 0 : index
    %507 = vector.load %arg4[%c0_370, %c0_371] : memref<2x10xf32, #tpu.memory_space<vmem>>, vector<2x10xf32>
    %cst_372 = arith.constant dense<0.000000e+00> : vector<2x32xf32>
    %508 = tpu.matmul %507, %506, %cst_372 {dimension_numbers = #tpu.dot_dimension_numbers<[1], [0], [0], [1], [0, 0, 1, 1], [], []>} : vector<2x10xf32>, vector<10x32xf32>, vector<2x32xf32> -> vector<2x32xf32>
    %c0_373 = arith.constant 0 : index
    %c0_374 = arith.constant 0 : index
    %c0_375 = arith.constant 0 : index
    %509 = vector.load %arg20[%c0_373, %c0_374, %c0_375] : memref<1x1x32xf32, #tpu.memory_space<vmem>>, vector<1x1x32xf32>
    %510 = vector.shape_cast %509 : vector<1x1x32xf32> to vector<1x32xf32>
    %c0_376 = arith.constant 0 : index
    %c0_377 = arith.constant 0 : index
    %c0_378 = arith.constant 0 : index
    %511 = vector.load %arg21[%c0_376, %c0_377, %c0_378] : memref<1x1x32xf32, #tpu.memory_space<vmem>>, vector<1x1x32xf32>
    %512 = vector.shape_cast %511 : vector<1x1x32xf32> to vector<1x32xf32>
    %cst_379 = arith.constant dense<0.000000e+00> : vector<2xf32>
    %513 = vector.multi_reduction <add>, %508, %cst_379 [1] : vector<2x32xf32> to vector<2xf32>
    %514 = vector.shape_cast %513 : vector<2xf32> to vector<2x1xf32>
    %cst_380 = arith.constant 3.200000e+01 : f32
    %515 = vector.broadcast %cst_380 : f32 to vector<2x1xf32>
    %516 = arith.divf %514, %515 : vector<2x1xf32>
    %517 = vector.broadcast %516 : vector<2x1xf32> to vector<2x32xf32>
    %518 = arith.subf %508, %517 : vector<2x32xf32>
    %519 = arith.mulf %518, %518 : vector<2x32xf32>
    %cst_381 = arith.constant dense<0.000000e+00> : vector<2xf32>
    %520 = vector.multi_reduction <add>, %519, %cst_381 [1] : vector<2x32xf32> to vector<2xf32>
    %521 = vector.shape_cast %520 : vector<2xf32> to vector<2x1xf32>
    %cst_382 = arith.constant 3.200000e+01 : f32
    %522 = vector.broadcast %cst_382 : f32 to vector<2x1xf32>
    %523 = arith.divf %521, %522 : vector<2x1xf32>
    %cst_383 = arith.constant 9.99999974E-6 : f32
    %524 = vector.broadcast %cst_383 : f32 to vector<2x1xf32>
    %525 = arith.addf %523, %524 : vector<2x1xf32>
    %526 = math.rsqrt %525 : vector<2x1xf32>
    %527 = vector.broadcast %526 : vector<2x1xf32> to vector<2x32xf32>
    %528 = arith.mulf %518, %527 : vector<2x32xf32>
    %529 = vector.broadcast %510 : vector<1x32xf32> to vector<2x32xf32>
    %530 = arith.mulf %528, %529 : vector<2x32xf32>
    %531 = vector.broadcast %512 : vector<1x32xf32> to vector<2x32xf32>
    %532 = arith.addf %530, %531 : vector<2x32xf32>
    %c0_384 = arith.constant 0 : index
    %c0_385 = arith.constant 0 : index
    %c0_386 = arith.constant 0 : index
    %533 = vector.load %arg22[%c0_384, %c0_385, %c0_386] : memref<1x32x16xf32, #tpu.memory_space<vmem>>, vector<1x32x16xf32>
    %534 = vector.shape_cast %533 : vector<1x32x16xf32> to vector<32x16xf32>
    %cst_387 = arith.constant dense<0.000000e+00> : vector<2x16xf32>
    %535 = tpu.matmul %532, %534, %cst_387 {dimension_numbers = #tpu.dot_dimension_numbers<[1], [0], [0], [1], [0, 0, 1, 1], [], []>} : vector<2x32xf32>, vector<32x16xf32>, vector<2x16xf32> -> vector<2x16xf32>
    %c0_388 = arith.constant 0 : index
    %c0_389 = arith.constant 0 : index
    %c0_390 = arith.constant 0 : index
    %536 = vector.load %arg23[%c0_388, %c0_389, %c0_390] : memref<1x2x16xf32, #tpu.memory_space<vmem>>, vector<1x2x16xf32>
    %537 = vector.shape_cast %536 : vector<1x2x16xf32> to vector<2x16xf32>
    %538 = vector.shape_cast %535 : vector<2x16xf32> to vector<1x2x16xf32>
    tpu.vector_store %arg23[%c0_388, %c0_389, %c0_390], %538 {strides = array<i32>} : memref<1x2x16xf32, #tpu.memory_space<vmem>>, vector<1x2x16xf32>,
    return
  }
  func.func @transform_0(%arg0: i32) -> (i32, i32, i32) {
    %c0_i32 = arith.constant 0 : i32
    %c0_i32_0 = arith.constant 0 : i32
    %c0_i32_1 = arith.constant 0 : i32
    return %arg0, %c0_i32, %c0_i32_0 : i32, i32, i32
  }
  func.func @transform_1(%arg0: i32) -> (i32, i32, i32) {
    %c0_i32 = arith.constant 0 : i32
    %c0_i32_0 = arith.constant 0 : i32
    %c0_i32_1 = arith.constant 0 : i32
    return %arg0, %c0_i32, %c0_i32_0 : i32, i32, i32
  }
  func.func @transform_2(%arg0: i32) -> (i32, i32) {
    %c0_i32 = arith.constant 0 : i32
    %c0_i32_0 = arith.constant 0 : i32
    %c0_i32_1 = arith.constant 0 : i32
    return %c0_i32, %c0_i32_0 : i32, i32
  }
  func.func @transform_3(%arg0: i32) -> (i32, i32) {
    %c0_i32 = arith.constant 0 : i32
    %c0_i32_0 = arith.constant 0 : i32
    %c0_i32_1 = arith.constant 0 : i32
    return %c0_i32, %c0_i32_0 : i32, i32
  }
  func.func @transform_4(%arg0: i32) -> (i32, i32, i32) {
    %c0_i32 = arith.constant 0 : i32
    %c0_i32_0 = arith.constant 0 : i32
    %c0_i32_1 = arith.constant 0 : i32
    return %arg0, %c0_i32, %c0_i32_0 : i32, i32, i32
  }
  func.func @transform_5(%arg0: i32) -> (i32, i32, i32) {
    %c0_i32 = arith.constant 0 : i32
    %c0_i32_0 = arith.constant 0 : i32
    %c0_i32_1 = arith.constant 0 : i32
    return %arg0, %c0_i32, %c0_i32_0 : i32, i32, i32
  }
  func.func @transform_6(%arg0: i32) -> (i32, i32, i32) {
    %c0_i32 = arith.constant 0 : i32
    %c0_i32_0 = arith.constant 0 : i32
    %c0_i32_1 = arith.constant 0 : i32
    return %arg0, %c0_i32, %c0_i32_0 : i32, i32, i32
  }
  func.func @transform_7(%arg0: i32) -> (i32, i32, i32, i32) {
    %c0_i32 = arith.constant 0 : i32
    %c0_i32_0 = arith.constant 0 : i32
    %c0_i32_1 = arith.constant 0 : i32
    %c0_i32_2 = arith.constant 0 : i32
    return %arg0, %c0_i32, %c0_i32_0, %c0_i32_1 : i32, i32, i32, i32
  }
  func.func @transform_8(%arg0: i32) -> (i32, i32, i32, i32) {
    %c0_i32 = arith.constant 0 : i32
    %c0_i32_0 = arith.constant 0 : i32
    %c0_i32_1 = arith.constant 0 : i32
    %c0_i32_2 = arith.constant 0 : i32
    return %arg0, %c0_i32, %c0_i32_0, %c0_i32_1 : i32, i32, i32, i32
  }
  func.func @transform_9(%arg0: i32) -> (i32, i32, i32, i32) {
    %c0_i32 = arith.constant 0 : i32
    %c0_i32_0 = arith.constant 0 : i32
    %c0_i32_1 = arith.constant 0 : i32
    %c0_i32_2 = arith.constant 0 : i32
    return %arg0, %c0_i32, %c0_i32_0, %c0_i32_1 : i32, i32, i32, i32
  }
  func.func @transform_10(%arg0: i32) -> (i32, i32, i32, i32) {
    %c0_i32 = arith.constant 0 : i32
    %c0_i32_0 = arith.constant 0 : i32
    %c0_i32_1 = arith.constant 0 : i32
    %c0_i32_2 = arith.constant 0 : i32
    return %arg0, %c0_i32, %c0_i32_0, %c0_i32_1 : i32, i32, i32, i32
  }
  func.func @transform_11(%arg0: i32) -> (i32, i32, i32, i32) {
    %c0_i32 = arith.constant 0 : i32
    %c0_i32_0 = arith.constant 0 : i32
    %c0_i32_1 = arith.constant 0 : i32
    %c0_i32_2 = arith.constant 0 : i32
    return %arg0, %c0_i32, %c0_i32_0, %c0_i32_1 : i32, i32, i32, i32
  }
  func.func @transform_12(%arg0: i32) -> (i32, i32, i32, i32) {
    %c0_i32 = arith.constant 0 : i32
    %c0_i32_0 = arith.constant 0 : i32
    %c0_i32_1 = arith.constant 0 : i32
    %c0_i32_2 = arith.constant 0 : i32
    return %arg0, %c0_i32, %c0_i32_0, %c0_i32_1 : i32, i32, i32, i32
  }
  func.func @transform_13(%arg0: i32) -> (i32, i32, i32, i32) {
    %c0_i32 = arith.constant 0 : i32
    %c0_i32_0 = arith.constant 0 : i32
    %c0_i32_1 = arith.constant 0 : i32
    %c0_i32_2 = arith.constant 0 : i32
    return %arg0, %c0_i32, %c0_i32_0, %c0_i32_1 : i32, i32, i32, i32
  }
  func.func @transform_14(%arg0: i32) -> (i32, i32, i32, i32) {
    %c0_i32 = arith.constant 0 : i32
    %c0_i32_0 = arith.constant 0 : i32
    %c0_i32_1 = arith.constant 0 : i32
    %c0_i32_2 = arith.constant 0 : i32
    return %arg0, %c0_i32, %c0_i32_0, %c0_i32_1 : i32, i32, i32, i32
  }
  func.func @transform_15(%arg0: i32) -> (i32, i32, i32, i32) {
    %c0_i32 = arith.constant 0 : i32
    %c0_i32_0 = arith.constant 0 : i32
    %c0_i32_1 = arith.constant 0 : i32
    %c0_i32_2 = arith.constant 0 : i32
    return %arg0, %c0_i32, %c0_i32_0, %c0_i32_1 : i32, i32, i32, i32
  }
  func.func @transform_16(%arg0: i32) -> (i32, i32, i32, i32) {
    %c0_i32 = arith.constant 0 : i32
    %c0_i32_0 = arith.constant 0 : i32
    %c0_i32_1 = arith.constant 0 : i32
    %c0_i32_2 = arith.constant 0 : i32
    return %arg0, %c0_i32, %c0_i32_0, %c0_i32_1 : i32, i32, i32, i32
  }
  func.func @transform_17(%arg0: i32) -> (i32, i32, i32, i32) {
    %c0_i32 = arith.constant 0 : i32
    %c0_i32_0 = arith.constant 0 : i32
    %c0_i32_1 = arith.constant 0 : i32
    %c0_i32_2 = arith.constant 0 : i32
    return %arg0, %c0_i32, %c0_i32_0, %c0_i32_1 : i32, i32, i32, i32
  }
  func.func @transform_18(%arg0: i32) -> (i32, i32, i32, i32) {
    %c0_i32 = arith.constant 0 : i32
    %c0_i32_0 = arith.constant 0 : i32
    %c0_i32_1 = arith.constant 0 : i32
    %c0_i32_2 = arith.constant 0 : i32
    return %arg0, %c0_i32, %c0_i32_0, %c0_i32_1 : i32, i32, i32, i32
  }
  func.func @transform_19(%arg0: i32) -> (i32, i32, i32) {
    %c0_i32 = arith.constant 0 : i32
    %c0_i32_0 = arith.constant 0 : i32
    %c0_i32_1 = arith.constant 0 : i32
    return %arg0, %c0_i32, %c0_i32_0 : i32, i32, i32
  }
  func.func @transform_20(%arg0: i32) -> (i32, i32, i32) {
    %c0_i32 = arith.constant 0 : i32
    %c0_i32_0 = arith.constant 0 : i32
    %c0_i32_1 = arith.constant 0 : i32
    return %arg0, %c0_i32, %c0_i32_0 : i32, i32, i32
  }
  func.func @transform_21(%arg0: i32) -> (i32, i32, i32) {
    %c0_i32 = arith.constant 0 : i32
    %c0_i32_0 = arith.constant 0 : i32
    %c0_i32_1 = arith.constant 0 : i32
    return %arg0, %c0_i32, %c0_i32_0 : i32, i32, i32
  }
  func.func @transform_22(%arg0: i32) -> (i32, i32, i32) {
    %c0_i32 = arith.constant 0 : i32
    %c0_i32_0 = arith.constant 0 : i32
    %c0_i32_1 = arith.constant 0 : i32
    return %arg0, %c0_i32, %c0_i32_0 : i32, i32, i32
  }
}

</mosaic_0001>

<llo_original>
// kernel: vit_for_sketch_matching.3
$region0: #{vit_for_sketch_matching.3}
  #allocation0 [shape = 'u32[]', space=smem, size = 0x4, offset = 0x4, fixed_abs, tag = 'smem constant byte address 0x4 - core index']
  #allocation1 [shape = 'u32[72,128]{1,0:T(1,128)}', space=vmem, size = 0x9000, scoped, tag = 'internal scratch']
  #allocation2 [shape = 'f32[1,1]{1,0:T(1,128)S(1)}', space=vmem, size = 0x200, scoped, tag = 'scoped memory for vit_for_sketch_matching.3']
  %s0 = inlined_call_operand.vmem [shape: f32[2,2,16], index: 0, kind: input, shape index: {}]
  %s1 = inlined_call_operand.<no memory space> [shape: f32[1,1], index: 1, kind: input, shape index: {}]
  %s2 = inlined_call_operand.hbm [shape: f32[1,1], index: 2, kind: output, shape index: {0}]
  %s3 = inlined_call_operand.hbm [shape: f32[2,16], index: 3, kind: output, shape index: {1}]
  %s4 = inlined_call_operand.hbm [shape: f32[2,16], index: 4, kind: output, shape index: {2}]
  %5 = xla_tuple %s2, %s3, %s4
  %s6 = sld [smem:[#allocation0]]
  $region34: #{vit_for_sketch_matching.3} parent=0
    _
  %s8 = ssub.s32 1, %s6
  %s9 = scalar_select 0, %s8, %s6
  %v10 = vstv %s1
  %11 = vst [vmem:[#allocation2] sm:$0x1] %v10
  $region1: #{vit_for_sketch_matching.3} parent=0
    #allocation3 [shape = 'u8[512]{0}', space=vmem, size = 0x400, scoped, tag = 'output window, operand 0, single buffered']
    #allocation4 [shape = 's32[1]{0}', space=sflag, size = 0x4, scoped, tag = 'scoped memory for vit_for_sketch_matching.3']
    #allocation5 [shape = 'u8[1024]{0}', space=vmem, size = 0x400, scoped, tag = 'output window, operand 1, single buffered']
    #allocation6 [shape = 's32[1]{0}', space=sflag, size = 0x4, scoped, tag = 'scoped memory for vit_for_sketch_matching.3']
    #allocation7 [shape = 'u8[1024]{0}', space=vmem, size = 0x400, scoped, tag = 'output window, operand 2, single buffered']
    %12 = vsyncpa [#allocation4], 0
    %13 = vsyncpa [#allocation6], 0
    // Predicated region
    $region2: #{vit_for_sketch_matching.3} parent=1 // pred_check
      _
    $region3: #{vit_for_sketch_matching.3} parent=1 // pred_check_branch
      %15 = sbr.rel (0) target = $region5
    $region4: #{vit_for_sketch_matching.3} parent=1 // pred_region
      _
    $region5: #{vit_for_sketch_matching.3} parent=1 // pred_fallthru
      _
    // Predicated region
    $region6: #{vit_for_sketch_matching.3} parent=1 // pred_check
      _
    $region7: #{vit_for_sketch_matching.3} parent=1 // pred_check_branch
      %17 = sbr.rel (0) target = $region9
    $region8: #{vit_for_sketch_matching.3} parent=1 // pred_region
      _
    $region9: #{vit_for_sketch_matching.3} parent=1 // pred_fallthru
      _
    %v18 = vld [vmem:[%s0] sm:$0x3]
    %s19 = scalar_lea.vmem %s0, 2
    %v20 = vld [vmem:[%s19] sm:$0x3]
    %v21 = vmul.f32 %v18, %v18
    %vm22 = vcmask 123904
    %v23 = vsel %vm22, %v21, 0.0
    %24 = vadd.xlane.f32.xlu0 %v23
    %v25 = vpop.xlane.xlu0 %24
    %v26 = vrsqrt.pop %v25
    %v27 = vmul.f32 %v26, %v25
    %v28 = vmul.f32 %v27, %v26
    %v29 = vmul.f32 0.5, %v28
    %v30 = vsub.f32 1.5, %v29
    %v31 = vmul.f32 %v26, %v30
    %vm32 = vweird.f32 %v25
    %vm33 = vweird.f32 %v26
    %vm34 = vmor %vm32, %vm33
    %v35 = vsel %vm34, %v26, %v31
    %v36 = vmul.f32 %v18, %v35
    %v37 = vmul.f32 %v20, %v20
    %v38 = vsel %vm22, %v37, 0.0
    %39 = vadd.xlane.f32.xlu0 %v38
    %v40 = vpop.xlane.xlu0 %39
    %v41 = vrsqrt.pop %v40
    %v42 = vmul.f32 %v41, %v40
    %v43 = vmul.f32 %v42, %v41
    %v44 = vmul.f32 0.5, %v43
    %v45 = vsub.f32 1.5, %v44
    %v46 = vmul.f32 %v41, %v45
    %vm47 = vweird.f32 %v40
    %vm48 = vweird.f32 %v41
    %vm49 = vmor %vm47, %vm48
    %v50 = vsel %vm49, %v41, %v46
    %v51 = vmul.f32 %v20, %v50
    %52 = vst.msk [vmem:[#allocation5] sm:$0x3] %vm22, %v36
    %53 = vst.msk [vmem:[#allocation7] sm:$0x3] %vm22, %v51
    %vm54 = vcmask 130048
    %v56 = vsel %vm54, %v36, 0
    %v59 = vsel %vm54, %v51, 0
    %61 = vmatpush.xpose.msra.mxu0 0.0
    %62 = vmatpush.xpose.msra.mxu0 0.0
    %63 = vmatpush.xpose.msra.mxu0 0.0
    %64 = vmatpush.xpose.msra.mxu0 0.0
    %65 = vmatpush.xpose.msra.mxu0 0.0
    %66 = vmatpush.xpose.msra.mxu0 0.0
    %67 = vmatpush.xpose.msra.mxu0 0.0
    %68 = vmatpush.xpose.msra.mxu0 0.0
    %69 = vmatpush.xpose.msra.mxu0 0.0
    %70 = vmatpush.xpose.msra.mxu0 0.0
    %71 = vmatpush.xpose.msra.mxu0 0.0
    %72 = vmatpush.xpose.msra.mxu0 0.0
    %73 = vmatpush.xpose.msra.mxu0 0.0
    %74 = vmatpush.xpose.msra.mxu0 0.0
    %75 = vmatpush.xpose.msra.mxu0 0.0
    %76 = vmatpush.xpose.msra.mxu0 %v59
    %77 = vmatmul.f32.gmra.mxu0 %v56
    %v78 = vpop.f32.mrf.mxu0
    %v79 = vadd.f32 0.0, %v78
    %80 = vdwg.mxu0
    %v81 = vld [vmem:[#allocation2] sm:$0x1]
    %v82 = vmul.f32 %v81, 1.442695
    %v83 = vpow.pop %v82
    %v85 = vperm.slane %v83, 0
    %86 = vset.pattern.permute.xlu0 0
    %87 = vperm.xlu0 %86, %v85
    %v88 = vpop.permute.xlu0 %87
    %v90 = vmul.f32 %v79, %v88
    %v91 = vlaneseq
    %v92 = vshrl.u32 %v91, 7
    %v93 = vlaneseq
    %v94 = vand.u32 %v93, 127
    %vm95 = vcmp.eq.s32.totalorder %v92, %v94
    %v96 = vsel %vm95, %v90, 0.0
    %vm97 = vcmask 9216
    %v98 = vsel %vm97, %v96, 0.0
    %99 = vadd.xlane.f32.xlu0 %v98
    %v100 = vpop.xlane.xlu0 %99
    %v101 = vsel %vm97, %v90, -inf
    %102 = vmax.xlane.f32.xlu0 %v101
    %v103 = vpop.xlane.xlu0 %102
    %v104 = vsub.f32 %v90, %v103
    %v105 = vmul.f32 %v104, 1.442695
    %v106 = vpow.pop %v105
    %v107 = vsel %vm97, %v106, 0.0
    %108 = vadd.xlane.f32.xlu0 %v107
    %v109 = vpop.xlane.xlu0 %108
    %v110 = vlog2.pop %v109
    %v111 = vmul.f32 %v110, 0.6931472
    %v112 = vadd.f32 %v103, %v111
    %v113 = vsub.f32 %v112, %v100
    %vm114 = vcmask 1041408
    %v115 = vsel %vm114, %v113, 0.0
    %v116 = vrot.slane %v115, 4
    %v117 = vadd.f32 %v115, %v116
    %v118 = vrot.slane %v117, 2
    %v119 = vadd.f32 %v117, %v118
    %v120 = vrot.slane %v119, 1
    %v121 = vadd.f32 %v119, %v120
    %v122 = vrcp.pop 2.0
    %v123 = vmul.f32 2.0, %v122
    %v124 = vsub.f32 1.0, %v123
    %v125 = vmul.f32 %v122, %v124
    %v126 = vadd.f32 %v122, %v125
    %vm127 = vweird.f32 %v122
    %v128 = vsel %vm127, %v122, %v126
    %v129 = vmul.f32 %v121, %v128
    %v130 = vrot.slane %v98, 4
    %v131 = vadd.f32 %v98, %v130
    %v132 = vrot.slane %v131, 2
    %v133 = vadd.f32 %v131, %v132
    %v134 = vrot.slane %v133, 1
    %v135 = vadd.f32 %v133, %v134
    %v136 = vrot.slane %v101, 4
    %v137 = vmax.f32 %v101, %v136
    %v138 = vrot.slane %v137, 2
    %v139 = vmax.f32 %v137, %v138
    %v140 = vrot.slane %v139, 1
    %v141 = vmax.f32 %v139, %v140
    %v142 = vsub.f32 %v90, %v141
    %v143 = vmul.f32 %v142, 1.442695
    %v144 = vpow.pop %v143
    %v145 = vsel %vm97, %v144, 0.0
    %v146 = vrot.slane %v145, 4
    %v147 = vadd.f32 %v145, %v146
    %v148 = vrot.slane %v147, 2
    %v149 = vadd.f32 %v147, %v148
    %v150 = vrot.slane %v149, 1
    %v151 = vadd.f32 %v149, %v150
    %v152 = vlog2.pop %v151
    %v153 = vmul.f32 %v152, 0.6931472
    %v154 = vadd.f32 %v141, %v153
    %v155 = vsub.f32 %v154, %v135
    %vm156 = vcmask 15360
    %v157 = vsel %vm156, %v155, 0.0
    %158 = vadd.xlane.f32.xlu0 %v157
    %v159 = vpop.xlane.xlu0 %158
    %v160 = vmul.f32 %v159, %v128
    %v161 = vadd.f32 %v129, %v160
    %v162 = vmul.f32 %v161, 0.5
    %vm163 = vcmask 0
    %164 = vst.msk [vmem:[#allocation3] sm:$0x1] %vm163, %v162
    // Predicated region
    $region10: #{vit_for_sketch_matching.3} parent=1 // pred_check
      _
    $region11: #{vit_for_sketch_matching.3} parent=1 // pred_check_branch
      %166 = sbr.rel (0) target = $region13
    $region12: #{vit_for_sketch_matching.3} parent=1 // pred_region
      %168 = vsyncadd [#allocation4], 0
      %s170 = sshll.u32 [#allocation3], 4
      %s171 = int_to_ptr.vmem [resolvable:$true] %s170
      %s172 = sshll.u32 %s2, 4
      %s173 = int_to_ptr.hbm [resolvable:$true] %s172
      %175 = dma.vmem_to_hbm [thread:$0]  %s171, 16, %s173, [#allocation4]
    $region13: #{vit_for_sketch_matching.3} parent=1 // pred_fallthru
      _
    // Predicated region
    $region14: #{vit_for_sketch_matching.3} parent=1 // pred_check
      _
    $region15: #{vit_for_sketch_matching.3} parent=1 // pred_check_branch
      %177 = sbr.rel (0) target = $region17
    $region16: #{vit_for_sketch_matching.3} parent=1 // pred_region
      %179 = vsyncadd [#allocation6], 0
      %s181 = sshll.u32 [#allocation5], 4
      %s182 = int_to_ptr.vmem [resolvable:$true] %s181
      %s183 = sshll.u32 %s3, 4
      %s184 = int_to_ptr.hbm [resolvable:$true] %s183
      %186 = dma.vmem_to_hbm [thread:$0]  %s182, 32, %s184, [#allocation6]
    $region17: #{vit_for_sketch_matching.3} parent=1 // pred_fallthru
      _
    // Predicated region
    $region18: #{vit_for_sketch_matching.3} parent=1 // pred_check
      _
    $region19: #{vit_for_sketch_matching.3} parent=1 // pred_check_branch
      %188 = sbr.rel (0) target = $region21
    $region20: #{vit_for_sketch_matching.3} parent=1 // pred_region
      %190 = vsyncadd [#allocation6], 0
      %s192 = sshll.u32 [#allocation7], 4
      %s193 = int_to_ptr.vmem [resolvable:$true] %s192
      %s194 = sshll.u32 %s4, 4
      %s195 = int_to_ptr.hbm [resolvable:$true] %s194
      %197 = dma.vmem_to_hbm [thread:$0]  %s193, 32, %s195, [#allocation6]
    $region21: #{vit_for_sketch_matching.3} parent=1 // pred_fallthru
      _
    // Predicated region
    $region22: #{vit_for_sketch_matching.3} parent=1 // pred_check
      _
    $region23: #{vit_for_sketch_matching.3} parent=1 // pred_check_branch
      %199 = sbr.rel (0) target = $region25
    $region24: #{vit_for_sketch_matching.3} parent=1 // pred_region
      %201 = dma.done [#allocation4], 16
    $region25: #{vit_for_sketch_matching.3} parent=1 // pred_fallthru
      _
    // Predicated region
    $region26: #{vit_for_sketch_matching.3} parent=1 // pred_check
      _
    $region27: #{vit_for_sketch_matching.3} parent=1 // pred_check_branch
      %203 = sbr.rel (0) target = $region29
    $region28: #{vit_for_sketch_matching.3} parent=1 // pred_region
      %205 = dma.done [#allocation6], 32
    $region29: #{vit_for_sketch_matching.3} parent=1 // pred_fallthru
      _
    // Predicated region
    $region30: #{vit_for_sketch_matching.3} parent=1 // pred_check
      _
    $region31: #{vit_for_sketch_matching.3} parent=1 // pred_check_branch
      %207 = sbr.rel (0) target = $region33
    $region32: #{vit_for_sketch_matching.3} parent=1 // pred_region
      %209 = dma.done [#allocation6], 32
    $region33: #{vit_for_sketch_matching.3} parent=1 // pred_fallthru
      _
    %210 = vsyncpa [#allocation4], 1
    %211 = vsyncpa [#allocation6], 1

// kernel: vit_for_sketch_matching.2
$region0: #{vit_for_sketch_matching.2}
  #allocation0 [shape = 'u32[]', space=smem, size = 0x4, offset = 0x4, fixed_abs, tag = 'smem constant byte address 0x4 - core index']
  #allocation1 [shape = 'u32[72,128]{1,0:T(1,128)}', space=vmem, size = 0x9000, scoped, tag = 'internal scratch']
  %s0 = inlined_call_operand.vmem [shape: f32[2,10,192], index: 0, kind: input, shape index: {}]
  %s1 = inlined_call_operand.vmem [shape: f32[2,10,32], index: 1, kind: input, shape index: {}]
  %s2 = inlined_call_operand.vmem [shape: f32[10,10], index: 2, kind: input, shape index: {}]
  %s3 = inlined_call_operand.vmem [shape: f32[2,10], index: 3, kind: input, shape index: {}]
  %s4 = inlined_call_operand.vmem [shape: f32[2,192,32], index: 4, kind: input, shape index: {}]
  %s5 = inlined_call_operand.vmem [shape: f32[2,1,32], index: 5, kind: input, shape index: {}]
  %s6 = inlined_call_operand.vmem [shape: f32[2,1,32], index: 6, kind: input, shape index: {}]
  %s7 = inlined_call_operand.vmem [shape: f32[2,2,1,32], index: 7, kind: input, shape index: {}]
  %s8 = inlined_call_operand.vmem [shape: f32[2,2,1,32], index: 8, kind: input, shape index: {}]
  %s9 = inlined_call_operand.vmem [shape: f32[2,24,32,8], index: 9, kind: input, shape index: {}]
  %s10 = inlined_call_operand.vmem [shape: f32[2,24,1,8], index: 10, kind: input, shape index: {}]
  %s11 = inlined_call_operand.vmem [shape: f32[2,2,32,32], index: 11, kind: input, shape index: {}]
  %s12 = inlined_call_operand.vmem [shape: f32[2,2,1,32], index: 12, kind: input, shape index: {}]
  %s13 = inlined_call_operand.vmem [shape: f32[2,2,1,32], index: 13, kind: input, shape index: {}]
  %s14 = inlined_call_operand.vmem [shape: f32[2,2,1,32], index: 14, kind: input, shape index: {}]
  %s15 = inlined_call_operand.vmem [shape: f32[2,2,32,64], index: 15, kind: input, shape index: {}]
  %s16 = inlined_call_operand.vmem [shape: f32[2,2,1,64], index: 16, kind: input, shape index: {}]
  %s17 = inlined_call_operand.vmem [shape: f32[2,2,64,32], index: 17, kind: input, shape index: {}]
  %s18 = inlined_call_operand.vmem [shape: f32[2,2,1,32], index: 18, kind: input, shape index: {}]
  %s19 = inlined_call_operand.vmem [shape: f32[2,1,32], index: 19, kind: input, shape index: {}]
  %s20 = inlined_call_operand.vmem [shape: f32[2,1,32], index: 20, kind: input, shape index: {}]
  %s21 = inlined_call_operand.vmem [shape: f32[2,32,16], index: 21, kind: input, shape index: {}]
  %s22 = inlined_call_operand.vmem [shape: f32[2,2,16], index: 22, kind: output, shape index: {}]
  %s23 = sld [smem:[#allocation0]]
  $region121: #{vit_for_sketch_matching.2} parent=0
    _
  %s25 = ssub.s32 1, %s23
  %s26 = scalar_select 0, %s25, %s23
  loop: start=0, step=1, limit=4
  $region2: #{vit_for_sketch_matching.2} parent=0 // loop_pre_header
    _
  $region3: #{vit_for_sketch_matching.2} parent=0 // loop_header
    %s28 = sphi 0, %s32
    %p29 = scmp.ge.s32.totalorder %s28, 4
    %s38 = sphi 0, %s40
    %s41 = sphi 0, %s38
    %s42 = sphi 0, %s41
    %s58 = sphi 0, %s42
    %s64 = sphi 0, %s66
    %s67 = sphi 0, %s64
    %s68 = sphi 0, %s67
    %s84 = sphi 0, %s68
    %s88 = sphi 0, %s88
    %s90 = sphi 0, %s88
    %s91 = sphi 0, %s90
    %s105 = sphi 0, %s91
    %s109 = sphi 0, %s109
    %s111 = sphi 0, %s109
    %s112 = sphi 0, %s111
    %s126 = sphi 0, %s112
    %s132 = sphi 0, %s134
    %s135 = sphi 0, %s132
    %s136 = sphi 0, %s135
    %s152 = sphi 0, %s136
    %s158 = sphi 0, %s160
    %s161 = sphi 0, %s158
    %s162 = sphi 0, %s161
    %s178 = sphi 0, %s162
    %s184 = sphi 0, %s186
    %s187 = sphi 0, %s184
    %s188 = sphi 0, %s187
    %s204 = sphi 0, %s188
    %s210 = sphi 0, %s212
    %s213 = sphi 0, %s210
    %s214 = sphi 0, %s213
    %s230 = sphi 0, %s214
    %s236 = sphi 0, %s238
    %s239 = sphi 0, %s236
    %s240 = sphi 0, %s239
    %s256 = sphi 0, %s240
    %s262 = sphi 0, %s264
    %s265 = sphi 0, %s262
    %s266 = sphi 0, %s265
    %s282 = sphi 0, %s266
    %s288 = sphi 0, %s290
    %s291 = sphi 0, %s288
    %s292 = sphi 0, %s291
    %s308 = sphi 0, %s292
    %s314 = sphi 0, %s316
    %s317 = sphi 0, %s314
    %s318 = sphi 0, %s317
    %s334 = sphi 0, %s318
    %s340 = sphi 0, %s342
    %s343 = sphi 0, %s340
    %s344 = sphi 0, %s343
    %s360 = sphi 0, %s344
    %s366 = sphi 0, %s368
    %s369 = sphi 0, %s366
    %s370 = sphi 0, %s369
    %s386 = sphi 0, %s370
    %s392 = sphi 0, %s394
    %s395 = sphi 0, %s392
    %s396 = sphi 0, %s395
    %s412 = sphi 0, %s396
    %s418 = sphi 0, %s420
    %s421 = sphi 0, %s418
    %s422 = sphi 0, %s421
    %s438 = sphi 0, %s422
    %s444 = sphi 0, %s446
    %s447 = sphi 0, %s444
    %s448 = sphi 0, %s447
    %s464 = sphi 0, %s448
    %s470 = sphi 0, %s472
    %s473 = sphi 0, %s470
    %s474 = sphi 0, %s473
    %s490 = sphi 0, %s474
    %s496 = sphi 0, %s498
    %s499 = sphi 0, %s496
    %s500 = sphi 0, %s499
    %s516 = sphi 0, %s500
    %s522 = sphi 0, %s524
    %s525 = sphi 0, %s522
    %s526 = sphi 0, %s525
    %s542 = sphi 0, %s526
    %s548 = sphi 0, %s550
    %s551 = sphi 0, %s548
    %s552 = sphi 0, %s551
    %s568 = sphi 0, %s552
    %s574 = sphi 0, %s576
    %s577 = sphi 0, %s574
    %s578 = sphi 0, %s577
    %s594 = sphi 0, %s578
    %s600 = sphi 0, %s602
    %s603 = sphi 0, %s600
    %s604 = sphi 0, %s603
    %s620 = sphi 0, %s604
  $region4: #{vit_for_sketch_matching.2} parent=0 // loop_header_branch
    %31 = sbr.rel (%p29) target = $region8
  $region5: #{vit_for_sketch_matching.2} parent=0 // loop_body
    %s33 = ssub.s32 %s28, 1
    %s34 = ssub.s32 %s28, 2
    %s35 = sadd.s32 %s28, 1
    %s36 = ssub.s32 %s28, %s35
    %p37 = scmp.eq.s32.totalorder %s36, 0
    %s39 = sadd.s32 %s38, 1
    %s40 = scalar_select %p37, %s38, %s39
    %p43 = pneg %p37
    %p44 = scmp.eq.s32.totalorder %s28, 1
    %p45 = por %p43, %p44
    %p46 = scmp.ne.s32.totalorder %s38, %s41
    %p47 = scmp.eq.s32.totalorder %s28, 0
    %p48 = por %p46, %p47
    %p49 = scmp.ne.s32.totalorder %s38, %s41
    %p50 = scmp.eq.s32.totalorder %s33, 1
    %p51 = por %p49, %p50
    %p52 = scmp.ne.s32.totalorder %s41, %s42
    %p53 = scmp.eq.s32.totalorder %s33, 0
    %p54 = por %p52, %p53
    %p55 = scmp.ne.s32.totalorder %s41, %s42
    %p56 = scmp.eq.s32.totalorder %s34, 1
    %p57 = por %p55, %p56
    %p59 = scmp.ne.s32.totalorder %s42, %s58
    %p60 = scmp.eq.s32.totalorder %s34, 0
    %p61 = por %p59, %p60
    %s62 = ssub.s32 %s28, %s35
    %p63 = scmp.eq.s32.totalorder %s62, 0
    %s65 = sadd.s32 %s64, 1
    %s66 = scalar_select %p63, %s64, %s65
    %p69 = pneg %p63
    %p70 = scmp.eq.s32.totalorder %s28, 1
    %p71 = por %p69, %p70
    %p72 = scmp.ne.s32.totalorder %s64, %s67
    %p73 = scmp.eq.s32.totalorder %s28, 0
    %p74 = por %p72, %p73
    %p75 = scmp.ne.s32.totalorder %s64, %s67
    %p76 = scmp.eq.s32.totalorder %s33, 1
    %p77 = por %p75, %p76
    %p78 = scmp.ne.s32.totalorder %s67, %s68
    %p79 = scmp.eq.s32.totalorder %s33, 0
    %p80 = por %p78, %p79
    %p81 = scmp.ne.s32.totalorder %s67, %s68
    %p82 = scmp.eq.s32.totalorder %s34, 1
    %p83 = por %p81, %p82
    %p85 = scmp.ne.s32.totalorder %s68, %s84
    %p86 = scmp.eq.s32.totalorder %s34, 0
    %p87 = por %p85, %p86
    %s89 = sadd.s32 %s88, 1
    %p92 = scmp.eq.s32.totalorder %s28, 1
    %p93 = scmp.ne.s32.totalorder %s88, %s90
    %p94 = scmp.eq.s32.totalorder %s28, 0
    %p95 = por %p93, %p94
    %p96 = scmp.ne.s32.totalorder %s88, %s90
    %p97 = scmp.eq.s32.totalorder %s33, 1
    %p98 = por %p96, %p97
    %p99 = scmp.ne.s32.totalorder %s90, %s91
    %p100 = scmp.eq.s32.totalorder %s33, 0
    %p101 = por %p99, %p100
    %p102 = scmp.ne.s32.totalorder %s90, %s91
    %p103 = scmp.eq.s32.totalorder %s34, 1
    %p104 = por %p102, %p103
    %p106 = scmp.ne.s32.totalorder %s91, %s105
    %p107 = scmp.eq.s32.totalorder %s34, 0
    %p108 = por %p106, %p107
    %s110 = sadd.s32 %s109, 1
    %p113 = scmp.eq.s32.totalorder %s28, 1
    %p114 = scmp.ne.s32.totalorder %s109, %s111
    %p115 = scmp.eq.s32.totalorder %s28, 0
    %p116 = por %p114, %p115
    %p117 = scmp.ne.s32.totalorder %s109, %s111
    %p118 = scmp.eq.s32.totalorder %s33, 1
    %p119 = por %p117, %p118
    %p120 = scmp.ne.s32.totalorder %s111, %s112
    %p121 = scmp.eq.s32.totalorder %s33, 0
    %p122 = por %p120, %p121
    %p123 = scmp.ne.s32.totalorder %s111, %s112
    %p124 = scmp.eq.s32.totalorder %s34, 1
    %p125 = por %p123, %p124
    %p127 = scmp.ne.s32.totalorder %s112, %s126
    %p128 = scmp.eq.s32.totalorder %s34, 0
    %p129 = por %p127, %p128
    %s130 = ssub.s32 %s28, %s35
    %p131 = scmp.eq.s32.totalorder %s130, 0
    %s133 = sadd.s32 %s132, 1
    %s134 = scalar_select %p131, %s132, %s133
    %p137 = pneg %p131
    %p138 = scmp.eq.s32.totalorder %s28, 1
    %p139 = por %p137, %p138
    %p140 = scmp.ne.s32.totalorder %s132, %s135
    %p141 = scmp.eq.s32.totalorder %s28, 0
    %p142 = por %p140, %p141
    %p143 = scmp.ne.s32.totalorder %s132, %s135
    %p144 = scmp.eq.s32.totalorder %s33, 1
    %p145 = por %p143, %p144
    %p146 = scmp.ne.s32.totalorder %s135, %s136
    %p147 = scmp.eq.s32.totalorder %s33, 0
    %p148 = por %p146, %p147
    %p149 = scmp.ne.s32.totalorder %s135, %s136
    %p150 = scmp.eq.s32.totalorder %s34, 1
    %p151 = por %p149, %p150
    %p153 = scmp.ne.s32.totalorder %s136, %s152
    %p154 = scmp.eq.s32.totalorder %s34, 0
    %p155 = por %p153, %p154
    %s156 = ssub.s32 %s28, %s35
    %p157 = scmp.eq.s32.totalorder %s156, 0
    %s159 = sadd.s32 %s158, 1
    %s160 = scalar_select %p157, %s158, %s159
    %p163 = pneg %p157
    %p164 = scmp.eq.s32.totalorder %s28, 1
    %p165 = por %p163, %p164
    %p166 = scmp.ne.s32.totalorder %s158, %s161
    %p167 = scmp.eq.s32.totalorder %s28, 0
    %p168 = por %p166, %p167
    %p169 = scmp.ne.s32.totalorder %s158, %s161
    %p170 = scmp.eq.s32.totalorder %s33, 1
    %p171 = por %p169, %p170
    %p172 = scmp.ne.s32.totalorder %s161, %s162
    %p173 = scmp.eq.s32.totalorder %s33, 0
    %p174 = por %p172, %p173
    %p175 = scmp.ne.s32.totalorder %s161, %s162
    %p176 = scmp.eq.s32.totalorder %s34, 1
    %p177 = por %p175, %p176
    %p179 = scmp.ne.s32.totalorder %s162, %s178
    %p180 = scmp.eq.s32.totalorder %s34, 0
    %p181 = por %p179, %p180
    %s182 = ssub.s32 %s28, %s35
    %p183 = scmp.eq.s32.totalorder %s182, 0
    %s185 = sadd.s32 %s184, 1
    %s186 = scalar_select %p183, %s184, %s185
    %p189 = pneg %p183
    %p190 = scmp.eq.s32.totalorder %s28, 1
    %p191 = por %p189, %p190
    %p192 = scmp.ne.s32.totalorder %s184, %s187
    %p193 = scmp.eq.s32.totalorder %s28, 0
    %p194 = por %p192, %p193
    %p195 = scmp.ne.s32.totalorder %s184, %s187
    %p196 = scmp.eq.s32.totalorder %s33, 1
    %p197 = por %p195, %p196
    %p198 = scmp.ne.s32.totalorder %s187, %s188
    %p199 = scmp.eq.s32.totalorder %s33, 0
    %p200 = por %p198, %p199
    %p201 = scmp.ne.s32.totalorder %s187, %s188
    %p202 = scmp.eq.s32.totalorder %s34, 1
    %p203 = por %p201, %p202
    %p205 = scmp.ne.s32.totalorder %s188, %s204
    %p206 = scmp.eq.s32.totalorder %s34, 0
    %p207 = por %p205, %p206
    %s208 = ssub.s32 %s28, %s35
    %p209 = scmp.eq.s32.totalorder %s208, 0
    %s211 = sadd.s32 %s210, 1
    %s212 = scalar_select %p209, %s210, %s211
    %p215 = pneg %p209
    %p216 = scmp.eq.s32.totalorder %s28, 1
    %p217 = por %p215, %p216
    %p218 = scmp.ne.s32.totalorder %s210, %s213
    %p219 = scmp.eq.s32.totalorder %s28, 0
    %p220 = por %p218, %p219
    %p221 = scmp.ne.s32.totalorder %s210, %s213
    %p222 = scmp.eq.s32.totalorder %s33, 1
    %p223 = por %p221, %p222
    %p224 = scmp.ne.s32.totalorder %s213, %s214
    %p225 = scmp.eq.s32.totalorder %s33, 0
    %p226 = por %p224, %p225
    %p227 = scmp.ne.s32.totalorder %s213, %s214
    %p228 = scmp.eq.s32.totalorder %s34, 1
    %p229 = por %p227, %p228
    %p231 = scmp.ne.s32.totalorder %s214, %s230
    %p232 = scmp.eq.s32.totalorder %s34, 0
    %p233 = por %p231, %p232
    %s234 = ssub.s32 %s28, %s35
    %p235 = scmp.eq.s32.totalorder %s234, 0
    %s237 = sadd.s32 %s236, 1
    %s238 = scalar_select %p235, %s236, %s237
    %p241 = pneg %p235
    %p242 = scmp.eq.s32.totalorder %s28, 1
    %p243 = por %p241, %p242
    %p244 = scmp.ne.s32.totalorder %s236, %s239
    %p245 = scmp.eq.s32.totalorder %s28, 0
    %p246 = por %p244, %p245
    %p247 = scmp.ne.s32.totalorder %s236, %s239
    %p248 = scmp.eq.s32.totalorder %s33, 1
    %p249 = por %p247, %p248
    %p250 = scmp.ne.s32.totalorder %s239, %s240
    %p251 = scmp.eq.s32.totalorder %s33, 0
    %p252 = por %p250, %p251
    %p253 = scmp.ne.s32.totalorder %s239, %s240
    %p254 = scmp.eq.s32.totalorder %s34, 1
    %p255 = por %p253, %p254
    %p257 = scmp.ne.s32.totalorder %s240, %s256
    %p258 = scmp.eq.s32.totalorder %s34, 0
    %p259 = por %p257, %p258
    %s260 = ssub.s32 %s28, %s35
    %p261 = scmp.eq.s32.totalorder %s260, 0
    %s263 = sadd.s32 %s262, 1
    %s264 = scalar_select %p261, %s262, %s263
    %p267 = pneg %p261
    %p268 = scmp.eq.s32.totalorder %s28, 1
    %p269 = por %p267, %p268
    %p270 = scmp.ne.s32.totalorder %s262, %s265
    %p271 = scmp.eq.s32.totalorder %s28, 0
    %p272 = por %p270, %p271
    %p273 = scmp.ne.s32.totalorder %s262, %s265
    %p274 = scmp.eq.s32.totalorder %s33, 1
    %p275 = por %p273, %p274
    %p276 = scmp.ne.s32.totalorder %s265, %s266
    %p277 = scmp.eq.s32.totalorder %s33, 0
    %p278 = por %p276, %p277
    %p279 = scmp.ne.s32.totalorder %s265, %s266
    %p280 = scmp.eq.s32.totalorder %s34, 1
    %p281 = por %p279, %p280
    %p283 = scmp.ne.s32.totalorder %s266, %s282
    %p284 = scmp.eq.s32.totalorder %s34, 0
    %p285 = por %p283, %p284
    %s286 = ssub.s32 %s28, %s35
    %p287 = scmp.eq.s32.totalorder %s286, 0
    %s289 = sadd.s32 %s288, 1
    %s290 = scalar_select %p287, %s288, %s289
    %p293 = pneg %p287
    %p294 = scmp.eq.s32.totalorder %s28, 1
    %p295 = por %p293, %p294
    %p296 = scmp.ne.s32.totalorder %s288, %s291
    %p297 = scmp.eq.s32.totalorder %s28, 0
    %p298 = por %p296, %p297
    %p299 = scmp.ne.s32.totalorder %s288, %s291
    %p300 = scmp.eq.s32.totalorder %s33, 1
    %p301 = por %p299, %p300
    %p302 = scmp.ne.s32.totalorder %s291, %s292
    %p303 = scmp.eq.s32.totalorder %s33, 0
    %p304 = por %p302, %p303
    %p305 = scmp.ne.s32.totalorder %s291, %s292
    %p306 = scmp.eq.s32.totalorder %s34, 1
    %p307 = por %p305, %p306
    %p309 = scmp.ne.s32.totalorder %s292, %s308
    %p310 = scmp.eq.s32.totalorder %s34, 0
    %p311 = por %p309, %p310
    %s312 = ssub.s32 %s28, %s35
    %p313 = scmp.eq.s32.totalorder %s312, 0
    %s315 = sadd.s32 %s314, 1
    %s316 = scalar_select %p313, %s314, %s315
    %p319 = pneg %p313
    %p320 = scmp.eq.s32.totalorder %s28, 1
    %p321 = por %p319, %p320
    %p322 = scmp.ne.s32.totalorder %s314, %s317
    %p323 = scmp.eq.s32.totalorder %s28, 0
    %p324 = por %p322, %p323
    %p325 = scmp.ne.s32.totalorder %s314, %s317
    %p326 = scmp.eq.s32.totalorder %s33, 1
    %p327 = por %p325, %p326
    %p328 = scmp.ne.s32.totalorder %s317, %s318
    %p329 = scmp.eq.s32.totalorder %s33, 0
    %p330 = por %p328, %p329
    %p331 = scmp.ne.s32.totalorder %s317, %s318
    %p332 = scmp.eq.s32.totalorder %s34, 1
    %p333 = por %p331, %p332
    %p335 = scmp.ne.s32.totalorder %s318, %s334
    %p336 = scmp.eq.s32.totalorder %s34, 0
    %p337 = por %p335, %p336
    %s338 = ssub.s32 %s28, %s35
    %p339 = scmp.eq.s32.totalorder %s338, 0
    %s341 = sadd.s32 %s340, 1
    %s342 = scalar_select %p339, %s340, %s341
    %p345 = pneg %p339
    %p346 = scmp.eq.s32.totalorder %s28, 1
    %p347 = por %p345, %p346
    %p348 = scmp.ne.s32.totalorder %s340, %s343
    %p349 = scmp.eq.s32.totalorder %s28, 0
    %p350 = por %p348, %p349
    %p351 = scmp.ne.s32.totalorder %s340, %s343
    %p352 = scmp.eq.s32.totalorder %s33, 1
    %p353 = por %p351, %p352
    %p354 = scmp.ne.s32.totalorder %s343, %s344
    %p355 = scmp.eq.s32.totalorder %s33, 0
    %p356 = por %p354, %p355
    %p357 = scmp.ne.s32.totalorder %s343, %s344
    %p358 = scmp.eq.s32.totalorder %s34, 1
    %p359 = por %p357, %p358
    %p361 = scmp.ne.s32.totalorder %s344, %s360
    %p362 = scmp.eq.s32.totalorder %s34, 0
    %p363 = por %p361, %p362
    %s364 = ssub.s32 %s28, %s35
    %p365 = scmp.eq.s32.totalorder %s364, 0
    %s367 = sadd.s32 %s366, 1
    %s368 = scalar_select %p365, %s366, %s367
    %p371 = pneg %p365
    %p372 = scmp.eq.s32.totalorder %s28, 1
    %p373 = por %p371, %p372
    %p374 = scmp.ne.s32.totalorder %s366, %s369
    %p375 = scmp.eq.s32.totalorder %s28, 0
    %p376 = por %p374, %p375
    %p377 = scmp.ne.s32.totalorder %s366, %s369
    %p378 = scmp.eq.s32.totalorder %s33, 1
    %p379 = por %p377, %p378
    %p380 = scmp.ne.s32.totalorder %s369, %s370
    %p381 = scmp.eq.s32.totalorder %s33, 0
    %p382 = por %p380, %p381
    %p383 = scmp.ne.s32.totalorder %s369, %s370
    %p384 = scmp.eq.s32.totalorder %s34, 1
    %p385 = por %p383, %p384
    %p387 = scmp.ne.s32.totalorder %s370, %s386
    %p388 = scmp.eq.s32.totalorder %s34, 0
    %p389 = por %p387, %p388
    %s390 = ssub.s32 %s28, %s35
    %p391 = scmp.eq.s32.totalorder %s390, 0
    %s393 = sadd.s32 %s392, 1
    %s394 = scalar_select %p391, %s392, %s393
    %p397 = pneg %p391
    %p398 = scmp.eq.s32.totalorder %s28, 1
    %p399 = por %p397, %p398
    %p400 = scmp.ne.s32.totalorder %s392, %s395
    %p401 = scmp.eq.s32.totalorder %s28, 0
    %p402 = por %p400, %p401
    %p403 = scmp.ne.s32.totalorder %s392, %s395
    %p404 = scmp.eq.s32.totalorder %s33, 1
    %p405 = por %p403, %p404
    %p406 = scmp.ne.s32.totalorder %s395, %s396
    %p407 = scmp.eq.s32.totalorder %s33, 0
    %p408 = por %p406, %p407
    %p409 = scmp.ne.s32.totalorder %s395, %s396
    %p410 = scmp.eq.s32.totalorder %s34, 1
    %p411 = por %p409, %p410
    %p413 = scmp.ne.s32.totalorder %s396, %s412
    %p414 = scmp.eq.s32.totalorder %s34, 0
    %p415 = por %p413, %p414
    %s416 = ssub.s32 %s28, %s35
    %p417 = scmp.eq.s32.totalorder %s416, 0
    %s419 = sadd.s32 %s418, 1
    %s420 = scalar_select %p417, %s418, %s419
    %p423 = pneg %p417
    %p424 = scmp.eq.s32.totalorder %s28, 1
    %p425 = por %p423, %p424
    %p426 = scmp.ne.s32.totalorder %s418, %s421
    %p427 = scmp.eq.s32.totalorder %s28, 0
    %p428 = por %p426, %p427
    %p429 = scmp.ne.s32.totalorder %s418, %s421
    %p430 = scmp.eq.s32.totalorder %s33, 1
    %p431 = por %p429, %p430
    %p432 = scmp.ne.s32.totalorder %s421, %s422
    %p433 = scmp.eq.s32.totalorder %s33, 0
    %p434 = por %p432, %p433
    %p435 = scmp.ne.s32.totalorder %s421, %s422
    %p436 = scmp.eq.s32.totalorder %s34, 1
    %p437 = por %p435, %p436
    %p439 = scmp.ne.s32.totalorder %s422, %s438
    %p440 = scmp.eq.s32.totalorder %s34, 0
    %p441 = por %p439, %p440
    %s442 = ssub.s32 %s28, %s35
    %p443 = scmp.eq.s32.totalorder %s442, 0
    %s445 = sadd.s32 %s444, 1
    %s446 = scalar_select %p443, %s444, %s445
    %p449 = pneg %p443
    %p450 = scmp.eq.s32.totalorder %s28, 1
    %p451 = por %p449, %p450
    %p452 = scmp.ne.s32.totalorder %s444, %s447
    %p453 = scmp.eq.s32.totalorder %s28, 0
    %p454 = por %p452, %p453
    %p455 = scmp.ne.s32.totalorder %s444, %s447
    %p456 = scmp.eq.s32.totalorder %s33, 1
    %p457 = por %p455, %p456
    %p458 = scmp.ne.s32.totalorder %s447, %s448
    %p459 = scmp.eq.s32.totalorder %s33, 0
    %p460 = por %p458, %p459
    %p461 = scmp.ne.s32.totalorder %s447, %s448
    %p462 = scmp.eq.s32.totalorder %s34, 1
    %p463 = por %p461, %p462
    %p465 = scmp.ne.s32.totalorder %s448, %s464
    %p466 = scmp.eq.s32.totalorder %s34, 0
    %p467 = por %p465, %p466
    %s468 = ssub.s32 %s28, %s35
    %p469 = scmp.eq.s32.totalorder %s468, 0
    %s471 = sadd.s32 %s470, 1
    %s472 = scalar_select %p469, %s470, %s471
    %p475 = pneg %p469
    %p476 = scmp.eq.s32.totalorder %s28, 1
    %p477 = por %p475, %p476
    %p478 = scmp.ne.s32.totalorder %s470, %s473
    %p479 = scmp.eq.s32.totalorder %s28, 0
    %p480 = por %p478, %p479
    %p481 = scmp.ne.s32.totalorder %s470, %s473
    %p482 = scmp.eq.s32.totalorder %s33, 1
    %p483 = por %p481, %p482
    %p484 = scmp.ne.s32.totalorder %s473, %s474
    %p485 = scmp.eq.s32.totalorder %s33, 0
    %p486 = por %p484, %p485
    %p487 = scmp.ne.s32.totalorder %s473, %s474
    %p488 = scmp.eq.s32.totalorder %s34, 1
    %p489 = por %p487, %p488
    %p491 = scmp.ne.s32.totalorder %s474, %s490
    %p492 = scmp.eq.s32.totalorder %s34, 0
    %p493 = por %p491, %p492
    %s494 = ssub.s32 %s28, %s35
    %p495 = scmp.eq.s32.totalorder %s494, 0
    %s497 = sadd.s32 %s496, 1
    %s498 = scalar_select %p495, %s496, %s497
    %p501 = pneg %p495
    %p502 = scmp.eq.s32.totalorder %s28, 1
    %p503 = por %p501, %p502
    %p504 = scmp.ne.s32.totalorder %s496, %s499
    %p505 = scmp.eq.s32.totalorder %s28, 0
    %p506 = por %p504, %p505
    %p507 = scmp.ne.s32.totalorder %s496, %s499
    %p508 = scmp.eq.s32.totalorder %s33, 1
    %p509 = por %p507, %p508
    %p510 = scmp.ne.s32.totalorder %s499, %s500
    %p511 = scmp.eq.s32.totalorder %s33, 0
    %p512 = por %p510, %p511
    %p513 = scmp.ne.s32.totalorder %s499, %s500
    %p514 = scmp.eq.s32.totalorder %s34, 1
    %p515 = por %p513, %p514
    %p517 = scmp.ne.s32.totalorder %s500, %s516
    %p518 = scmp.eq.s32.totalorder %s34, 0
    %p519 = por %p517, %p518
    %s520 = ssub.s32 %s28, %s35
    %p521 = scmp.eq.s32.totalorder %s520, 0
    %s523 = sadd.s32 %s522, 1
    %s524 = scalar_select %p521, %s522, %s523
    %p527 = pneg %p521
    %p528 = scmp.eq.s32.totalorder %s28, 1
    %p529 = por %p527, %p528
    %p530 = scmp.ne.s32.totalorder %s522, %s525
    %p531 = scmp.eq.s32.totalorder %s28, 0
    %p532 = por %p530, %p531
    %p533 = scmp.ne.s32.totalorder %s522, %s525
    %p534 = scmp.eq.s32.totalorder %s33, 1
    %p535 = por %p533, %p534
    %p536 = scmp.ne.s32.totalorder %s525, %s526
    %p537 = scmp.eq.s32.totalorder %s33, 0
    %p538 = por %p536, %p537
    %p539 = scmp.ne.s32.totalorder %s525, %s526
    %p540 = scmp.eq.s32.totalorder %s34, 1
    %p541 = por %p539, %p540
    %p543 = scmp.ne.s32.totalorder %s526, %s542
    %p544 = scmp.eq.s32.totalorder %s34, 0
    %p545 = por %p543, %p544
    %s546 = ssub.s32 %s28, %s35
    %p547 = scmp.eq.s32.totalorder %s546, 0
    %s549 = sadd.s32 %s548, 1
    %s550 = scalar_select %p547, %s548, %s549
    %p553 = pneg %p547
    %p554 = scmp.eq.s32.totalorder %s28, 1
    %p555 = por %p553, %p554
    %p556 = scmp.ne.s32.totalorder %s548, %s551
    %p557 = scmp.eq.s32.totalorder %s28, 0
    %p558 = por %p556, %p557
    %p559 = scmp.ne.s32.totalorder %s548, %s551
    %p560 = scmp.eq.s32.totalorder %s33, 1
    %p561 = por %p559, %p560
    %p562 = scmp.ne.s32.totalorder %s551, %s552
    %p563 = scmp.eq.s32.totalorder %s33, 0
    %p564 = por %p562, %p563
    %p565 = scmp.ne.s32.totalorder %s551, %s552
    %p566 = scmp.eq.s32.totalorder %s34, 1
    %p567 = por %p565, %p566
    %p569 = scmp.ne.s32.totalorder %s552, %s568
    %p570 = scmp.eq.s32.totalorder %s34, 0
    %p571 = por %p569, %p570
    %s572 = ssub.s32 %s28, %s35
    %p573 = scmp.eq.s32.totalorder %s572, 0
    %s575 = sadd.s32 %s574, 1
    %s576 = scalar_select %p573, %s574, %s575
    %p579 = pneg %p573
    %p580 = scmp.eq.s32.totalorder %s28, 1
    %p581 = por %p579, %p580
    %p582 = scmp.ne.s32.totalorder %s574, %s577
    %p583 = scmp.eq.s32.totalorder %s28, 0
    %p584 = por %p582, %p583
    %p585 = scmp.ne.s32.totalorder %s574, %s577
    %p586 = scmp.eq.s32.totalorder %s33, 1
    %p587 = por %p585, %p586
    %p588 = scmp.ne.s32.totalorder %s577, %s578
    %p589 = scmp.eq.s32.totalorder %s33, 0
    %p590 = por %p588, %p589
    %p591 = scmp.ne.s32.totalorder %s577, %s578
    %p592 = scmp.eq.s32.totalorder %s34, 1
    %p593 = por %p591, %p592
    %p595 = scmp.ne.s32.totalorder %s578, %s594
    %p596 = scmp.eq.s32.totalorder %s34, 0
    %p597 = por %p595, %p596
    %s598 = ssub.s32 %s28, %s35
    %p599 = scmp.eq.s32.totalorder %s598, 0
    %s601 = sadd.s32 %s600, 1
    %s602 = scalar_select %p599, %s600, %s601
    %p605 = pneg %p599
    %p606 = scmp.eq.s32.totalorder %s28, 1
    %p607 = por %p605, %p606
    %p608 = scmp.ne.s32.totalorder %s600, %s603
    %p609 = scmp.eq.s32.totalorder %s28, 0
    %p610 = por %p608, %p609
    %p611 = scmp.ne.s32.totalorder %s600, %s603
    %p612 = scmp.eq.s32.totalorder %s33, 1
    %p613 = por %p611, %p612
    %p614 = scmp.ne.s32.totalorder %s603, %s604
    %p615 = scmp.eq.s32.totalorder %s33, 0
    %p616 = por %p614, %p615
    %p617 = scmp.ne.s32.totalorder %s603, %s604
    %p618 = scmp.eq.s32.totalorder %s34, 1
    %p619 = por %p617, %p618
    %p621 = scmp.ne.s32.totalorder %s604, %s620
    %p622 = scmp.eq.s32.totalorder %s34, 0
    %p623 = por %p621, %p622
    %p624 = scmp.le.s32.totalorder 1, %s28
    %p625 = scmp.lt.s32.totalorder %s28, 3
    %p626 = pnand %p624, %p625
    %p627 = pneg %p626
    // Predicated region
    $region9: #{vit_for_sketch_matching.2} parent=5 // pred_check
      _
    $region10: #{vit_for_sketch_matching.2} parent=5 // pred_check_branch
      %629 = sbr.rel (%p626) target = $region12
    $region11: #{vit_for_sketch_matching.2} parent=5 // pred_region
      %s630 = ssub.s32 %s28, 1
      // Predicated region
      $region13: #{vit_for_sketch_matching.2} parent=11 // pred_check
        %p631 = pneg %p101
      $region14: #{vit_for_sketch_matching.2} parent=11 // pred_check_branch
        %633 = sbr.rel (%p631) target = $region16
      $region15: #{vit_for_sketch_matching.2} parent=11 // pred_region
        _
      $region16: #{vit_for_sketch_matching.2} parent=11 // pred_fallthru
        _
      // Predicated region
      $region17: #{vit_for_sketch_matching.2} parent=11 // pred_check
        %p634 = pneg %p122
      $region18: #{vit_for_sketch_matching.2} parent=11 // pred_check_branch
        %636 = sbr.rel (%p634) target = $region20
      $region19: #{vit_for_sketch_matching.2} parent=11 // pred_region
        _
      $region20: #{vit_for_sketch_matching.2} parent=11 // pred_fallthru
        _
    $region12: #{vit_for_sketch_matching.2} parent=5 // pred_fallthru
      _
    %p637 = scmp.lt.s32.totalorder %s28, 2
    // Predicated region
    $region21: #{vit_for_sketch_matching.2} parent=5 // pred_check
      %p638 = pneg %p637
    $region22: #{vit_for_sketch_matching.2} parent=5 // pred_check_branch
      %640 = sbr.rel (%p638) target = $region24
    $region23: #{vit_for_sketch_matching.2} parent=5 // pred_region
      // Predicated region
      $region25: #{vit_for_sketch_matching.2} parent=23 // pred_check
        %p641 = pneg %p48
      $region26: #{vit_for_sketch_matching.2} parent=23 // pred_check_branch
        %643 = sbr.rel (%p641) target = $region28
      $region27: #{vit_for_sketch_matching.2} parent=23 // pred_region
        %p644 = scmp.lt.s32.totalorder %s28, 1
        %s645 = scalar_select %p644, %s28, 1
        %s646 = smul.addr %s645, 4
        %s647 = smul.addr %s646, 8
        %s648 = scalar_lea.vmem %s0, %s647
      $region28: #{vit_for_sketch_matching.2} parent=23 // pred_fallthru
        _
      // Predicated region
      $region29: #{vit_for_sketch_matching.2} parent=23 // pred_check
        %p649 = pneg %p74
      $region30: #{vit_for_sketch_matching.2} parent=23 // pred_check_branch
        %651 = sbr.rel (%p649) target = $region32
      $region31: #{vit_for_sketch_matching.2} parent=23 // pred_region
        %p652 = scmp.lt.s32.totalorder %s28, 1
        %s653 = scalar_select %p652, %s28, 1
        %s654 = smul.addr %s653, 2
        %s655 = smul.addr %s654, 8
        %s656 = scalar_lea.vmem %s1, %s655
      $region32: #{vit_for_sketch_matching.2} parent=23 // pred_fallthru
        _
      // Predicated region
      $region33: #{vit_for_sketch_matching.2} parent=23 // pred_check
        %p657 = pneg %p142
      $region34: #{vit_for_sketch_matching.2} parent=23 // pred_check_branch
        %659 = sbr.rel (%p657) target = $region36
      $region35: #{vit_for_sketch_matching.2} parent=23 // pred_region
        %p660 = scmp.lt.s32.totalorder %s28, 1
        %s661 = scalar_select %p660, %s28, 1
        %s662 = smul.addr %s661, 24
        %s663 = smul.addr %s662, 8
        %s664 = scalar_lea.vmem %s4, %s663
      $region36: #{vit_for_sketch_matching.2} parent=23 // pred_fallthru
        _
      // Predicated region
      $region37: #{vit_for_sketch_matching.2} parent=23 // pred_check
        %p665 = pneg %p168
      $region38: #{vit_for_sketch_matching.2} parent=23 // pred_check_branch
        %667 = sbr.rel (%p665) target = $region40
      $region39: #{vit_for_sketch_matching.2} parent=23 // pred_region
        %p668 = scmp.lt.s32.totalorder %s28, 1
        %s669 = scalar_select %p668, %s28, 1
        %s670 = scalar_lea.vmem %s5, %s669
      $region40: #{vit_for_sketch_matching.2} parent=23 // pred_fallthru
        _
      // Predicated region
      $region41: #{vit_for_sketch_matching.2} parent=23 // pred_check
        %p671 = pneg %p194
      $region42: #{vit_for_sketch_matching.2} parent=23 // pred_check_branch
        %673 = sbr.rel (%p671) target = $region44
      $region43: #{vit_for_sketch_matching.2} parent=23 // pred_region
        %p674 = scmp.lt.s32.totalorder %s28, 1
        %s675 = scalar_select %p674, %s28, 1
        %s676 = scalar_lea.vmem %s6, %s675
      $region44: #{vit_for_sketch_matching.2} parent=23 // pred_fallthru
        _
      // Predicated region
      $region45: #{vit_for_sketch_matching.2} parent=23 // pred_check
        %p677 = pneg %p220
      $region46: #{vit_for_sketch_matching.2} parent=23 // pred_check_branch
        %679 = sbr.rel (%p677) target = $region48
      $region47: #{vit_for_sketch_matching.2} parent=23 // pred_region
        %p680 = scmp.lt.s32.totalorder %s28, 1
        %s681 = scalar_select %p680, %s28, 1
        %s682 = smul.addr %s681, 2
        %s683 = scalar_lea.vmem %s7, %s682
      $region48: #{vit_for_sketch_matching.2} parent=23 // pred_fallthru
        _
      // Predicated region
      $region49: #{vit_for_sketch_matching.2} parent=23 // pred_check
        %p684 = pneg %p246
      $region50: #{vit_for_sketch_matching.2} parent=23 // pred_check_branch
        %686 = sbr.rel (%p684) target = $region52
      $region51: #{vit_for_sketch_matching.2} parent=23 // pred_region
        %p687 = scmp.lt.s32.totalorder %s28, 1
        %s688 = scalar_select %p687, %s28, 1
        %s689 = smul.addr %s688, 2
        %s690 = scalar_lea.vmem %s8, %s689
      $region52: #{vit_for_sketch_matching.2} parent=23 // pred_fallthru
        _
      // Predicated region
      $region53: #{vit_for_sketch_matching.2} parent=23 // pred_check
        %p691 = pneg %p272
      $region54: #{vit_for_sketch_matching.2} parent=23 // pred_check_branch
        %693 = sbr.rel (%p691) target = $region56
      $region55: #{vit_for_sketch_matching.2} parent=23 // pred_region
        %p694 = scmp.lt.s32.totalorder %s28, 1
        %s695 = scalar_select %p694, %s28, 1
        %s696 = smul.addr %s695, 96
        %s697 = smul.addr %s696, 8
        %s698 = scalar_lea.vmem %s9, %s697
      $region56: #{vit_for_sketch_matching.2} parent=23 // pred_fallthru
        _
      // Predicated region
      $region57: #{vit_for_sketch_matching.2} parent=23 // pred_check
        %p699 = pneg %p298
      $region58: #{vit_for_sketch_matching.2} parent=23 // pred_check_branch
        %701 = sbr.rel (%p699) target = $region60
      $region59: #{vit_for_sketch_matching.2} parent=23 // pred_region
        %p702 = scmp.lt.s32.totalorder %s28, 1
        %s703 = scalar_select %p702, %s28, 1
        %s704 = smul.addr %s703, 24
        %s705 = scalar_lea.vmem %s10, %s704
      $region60: #{vit_for_sketch_matching.2} parent=23 // pred_fallthru
        _
      // Predicated region
      $region61: #{vit_for_sketch_matching.2} parent=23 // pred_check
        %p706 = pneg %p324
      $region62: #{vit_for_sketch_matching.2} parent=23 // pred_check_branch
        %708 = sbr.rel (%p706) target = $region64
      $region63: #{vit_for_sketch_matching.2} parent=23 // pred_region
        %p709 = scmp.lt.s32.totalorder %s28, 1
        %s710 = scalar_select %p709, %s28, 1
        %s711 = smul.addr %s710, 8
        %s712 = smul.addr %s711, 8
        %s713 = scalar_lea.vmem %s11, %s712
      $region64: #{vit_for_sketch_matching.2} parent=23 // pred_fallthru
        _
      // Predicated region
      $region65: #{vit_for_sketch_matching.2} parent=23 // pred_check
        %p714 = pneg %p350
      $region66: #{vit_for_sketch_matching.2} parent=23 // pred_check_branch
        %716 = sbr.rel (%p714) target = $region68
      $region67: #{vit_for_sketch_matching.2} parent=23 // pred_region
        %p717 = scmp.lt.s32.totalorder %s28, 1
        %s718 = scalar_select %p717, %s28, 1
        %s719 = smul.addr %s718, 2
        %s720 = scalar_lea.vmem %s12, %s719
      $region68: #{vit_for_sketch_matching.2} parent=23 // pred_fallthru
        _
      // Predicated region
      $region69: #{vit_for_sketch_matching.2} parent=23 // pred_check
        %p721 = pneg %p376
      $region70: #{vit_for_sketch_matching.2} parent=23 // pred_check_branch
        %723 = sbr.rel (%p721) target = $region72
      $region71: #{vit_for_sketch_matching.2} parent=23 // pred_region
        %p724 = scmp.lt.s32.totalorder %s28, 1
        %s725 = scalar_select %p724, %s28, 1
        %s726 = smul.addr %s725, 2
        %s727 = scalar_lea.vmem %s13, %s726
      $region72: #{vit_for_sketch_matching.2} parent=23 // pred_fallthru
        _
      // Predicated region
      $region73: #{vit_for_sketch_matching.2} parent=23 // pred_check
        %p728 = pneg %p402
      $region74: #{vit_for_sketch_matching.2} parent=23 // pred_check_branch
        %730 = sbr.rel (%p728) target = $region76
      $region75: #{vit_for_sketch_matching.2} parent=23 // pred_region
        %p731 = scmp.lt.s32.totalorder %s28, 1
        %s732 = scalar_select %p731, %s28, 1
        %s733 = smul.addr %s732, 2
        %s734 = scalar_lea.vmem %s14, %s733
      $region76: #{vit_for_sketch_matching.2} parent=23 // pred_fallthru
        _
      // Predicated region
      $region77: #{vit_for_sketch_matching.2} parent=23 // pred_check
        %p735 = pneg %p428
      $region78: #{vit_for_sketch_matching.2} parent=23 // pred_check_branch
        %737 = sbr.rel (%p735) target = $region80
      $region79: #{vit_for_sketch_matching.2} parent=23 // pred_region
        %p738 = scmp.lt.s32.totalorder %s28, 1
        %s739 = scalar_select %p738, %s28, 1
        %s740 = smul.addr %s739, 8
        %s741 = smul.addr %s740, 8
        %s742 = scalar_lea.vmem %s15, %s741
      $region80: #{vit_for_sketch_matching.2} parent=23 // pred_fallthru
        _
      // Predicated region
      $region81: #{vit_for_sketch_matching.2} parent=23 // pred_check
        %p743 = pneg %p454
      $region82: #{vit_for_sketch_matching.2} parent=23 // pred_check_branch
        %745 = sbr.rel (%p743) target = $region84
      $region83: #{vit_for_sketch_matching.2} parent=23 // pred_region
        %p746 = scmp.lt.s32.totalorder %s28, 1
        %s747 = scalar_select %p746, %s28, 1
        %s748 = smul.addr %s747, 2
        %s749 = scalar_lea.vmem %s16, %s748
      $region84: #{vit_for_sketch_matching.2} parent=23 // pred_fallthru
        _
      // Predicated region
      $region85: #{vit_for_sketch_matching.2} parent=23 // pred_check
        %p750 = pneg %p480
      $region86: #{vit_for_sketch_matching.2} parent=23 // pred_check_branch
        %752 = sbr.rel (%p750) target = $region88
      $region87: #{vit_for_sketch_matching.2} parent=23 // pred_region
        %p753 = scmp.lt.s32.totalorder %s28, 1
        %s754 = scalar_select %p753, %s28, 1
        %s755 = smul.addr %s754, 16
        %s756 = smul.addr %s755, 8
        %s757 = scalar_lea.vmem %s17, %s756
      $region88: #{vit_for_sketch_matching.2} parent=23 // pred_fallthru
        _
      // Predicated region
      $region89: #{vit_for_sketch_matching.2} parent=23 // pred_check
        %p758 = pneg %p506
      $region90: #{vit_for_sketch_matching.2} parent=23 // pred_check_branch
        %760 = sbr.rel (%p758) target = $region92
      $region91: #{vit_for_sketch_matching.2} parent=23 // pred_region
        %p761 = scmp.lt.s32.totalorder %s28, 1
        %s762 = scalar_select %p761, %s28, 1
        %s763 = smul.addr %s762, 2
        %s764 = scalar_lea.vmem %s18, %s763
      $region92: #{vit_for_sketch_matching.2} parent=23 // pred_fallthru
        _
      // Predicated region
      $region93: #{vit_for_sketch_matching.2} parent=23 // pred_check
        %p765 = pneg %p532
      $region94: #{vit_for_sketch_matching.2} parent=23 // pred_check_branch
        %767 = sbr.rel (%p765) target = $region96
      $region95: #{vit_for_sketch_matching.2} parent=23 // pred_region
        %p768 = scmp.lt.s32.totalorder %s28, 1
        %s769 = scalar_select %p768, %s28, 1
        %s770 = scalar_lea.vmem %s19, %s769
      $region96: #{vit_for_sketch_matching.2} parent=23 // pred_fallthru
        _
      // Predicated region
      $region97: #{vit_for_sketch_matching.2} parent=23 // pred_check
        %p771 = pneg %p558
      $region98: #{vit_for_sketch_matching.2} parent=23 // pred_check_branch
        %773 = sbr.rel (%p771) target = $region100
      $region99: #{vit_for_sketch_matching.2} parent=23 // pred_region
        %p774 = scmp.lt.s32.totalorder %s28, 1
        %s775 = scalar_select %p774, %s28, 1
        %s776 = scalar_lea.vmem %s20, %s775
      $region100: #{vit_for_sketch_matching.2} parent=23 // pred_fallthru
        _
      // Predicated region
      $region101: #{vit_for_sketch_matching.2} parent=23 // pred_check
        %p777 = pneg %p584
      $region102: #{vit_for_sketch_matching.2} parent=23 // pred_check_branch
        %779 = sbr.rel (%p777) target = $region104
      $region103: #{vit_for_sketch_matching.2} parent=23 // pred_region
        %p780 = scmp.lt.s32.totalorder %s28, 1
        %s781 = scalar_select %p780, %s28, 1
        %s782 = smul.addr %s781, 4
        %s783 = smul.addr %s782, 8
        %s784 = scalar_lea.vmem %s21, %s783
      $region104: #{vit_for_sketch_matching.2} parent=23 // pred_fallthru
        _
    $region24: #{vit_for_sketch_matching.2} parent=5 // pred_fallthru
      _
    %p785 = scmp.le.s32.totalorder 1, %s28
    %p786 = scmp.lt.s32.totalorder %s28, 3
    %p787 = pnand %p785, %p786
    %p788 = pneg %p787
    // Predicated region
    $region105: #{vit_for_sketch_matching.2} parent=5 // pred_check
      _
    $region106: #{vit_for_sketch_matching.2} parent=5 // pred_check_branch
      %790 = sbr.rel (%p787) target = $region108
    $region107: #{vit_for_sketch_matching.2} parent=5 // pred_region
      %s791 = ssub.s32 %s28, 1
      %p792 = scmp.lt.s32.totalorder %s33, 1
      %s793 = scalar_select %p792, %s33, 1
      %s794 = smul.addr %s793, 4
      %s795 = smul.addr %s794, 8
      %s796 = scalar_lea.vmem %s0, %s795
      %p797 = pneg %p54
      %p798 = pneg %p51
      %p799 = scmp.lt.s32.totalorder %s33, 1
      %s800 = scalar_select %p799, %s33, 1
      %s801 = smul.addr %s800, 2
      %s802 = smul.addr %s801, 8
      %s803 = scalar_lea.vmem %s1, %s802
      %p804 = pneg %p80
      %p805 = pneg %p77
      %p806 = pneg %p101
      %p807 = pneg %p98
      %p808 = pneg %p122
      %p809 = pneg %p119
      %p810 = scmp.lt.s32.totalorder %s33, 1
      %s811 = scalar_select %p810, %s33, 1
      %s812 = smul.addr %s811, 24
      %s813 = smul.addr %s812, 8
      %s814 = scalar_lea.vmem %s4, %s813
      %p815 = pneg %p148
      %p816 = pneg %p145
      %p817 = scmp.lt.s32.totalorder %s33, 1
      %s818 = scalar_select %p817, %s33, 1
      %s819 = scalar_lea.vmem %s5, %s818
      %p820 = pneg %p174
      %p821 = pneg %p171
      %p822 = scmp.lt.s32.totalorder %s33, 1
      %s823 = scalar_select %p822, %s33, 1
      %s824 = scalar_lea.vmem %s6, %s823
      %p825 = pneg %p200
      %p826 = pneg %p197
      %p827 = scmp.lt.s32.totalorder %s33, 1
      %s828 = scalar_select %p827, %s33, 1
      %s829 = smul.addr %s828, 2
      %s830 = scalar_lea.vmem %s7, %s829
      %p831 = pneg %p226
      %p832 = pneg %p223
      %p833 = scmp.lt.s32.totalorder %s33, 1
      %s834 = scalar_select %p833, %s33, 1
      %s835 = smul.addr %s834, 2
      %s836 = scalar_lea.vmem %s8, %s835
      %p837 = pneg %p252
      %p838 = pneg %p249
      %p839 = scmp.lt.s32.totalorder %s33, 1
      %s840 = scalar_select %p839, %s33, 1
      %s841 = smul.addr %s840, 96
      %s842 = smul.addr %s841, 8
      %s843 = scalar_lea.vmem %s9, %s842
      %p844 = pneg %p278
      %p845 = pneg %p275
      %p846 = scmp.lt.s32.totalorder %s33, 1
      %s847 = scalar_select %p846, %s33, 1
      %s848 = smul.addr %s847, 24
      %s849 = scalar_lea.vmem %s10, %s848
      %p850 = pneg %p304
      %p851 = pneg %p301
      %p852 = scmp.lt.s32.totalorder %s33, 1
      %s853 = scalar_select %p852, %s33, 1
      %s854 = smul.addr %s853, 8
      %s855 = smul.addr %s854, 8
      %s856 = scalar_lea.vmem %s11, %s855
      %p857 = pneg %p330
      %p858 = pneg %p327
      %p859 = scmp.lt.s32.totalorder %s33, 1
      %s860 = scalar_select %p859, %s33, 1
      %s861 = smul.addr %s860, 2
      %s862 = scalar_lea.vmem %s12, %s861
      %p863 = pneg %p356
      %p864 = pneg %p353
      %p865 = scmp.lt.s32.totalorder %s33, 1
      %s866 = scalar_select %p865, %s33, 1
      %s867 = smul.addr %s866, 2
      %s868 = scalar_lea.vmem %s13, %s867
      %p869 = pneg %p382
      %p870 = pneg %p379
      %p871 = scmp.lt.s32.totalorder %s33, 1
      %s872 = scalar_select %p871, %s33, 1
      %s873 = smul.addr %s872, 2
      %s874 = scalar_lea.vmem %s14, %s873
      %p875 = pneg %p408
      %p876 = pneg %p405
      %p877 = scmp.lt.s32.totalorder %s33, 1
      %s878 = scalar_select %p877, %s33, 1
      %s879 = smul.addr %s878, 8
      %s880 = smul.addr %s879, 8
      %s881 = scalar_lea.vmem %s15, %s880
      %p882 = pneg %p434
      %p883 = pneg %p431
      %p884 = scmp.lt.s32.totalorder %s33, 1
      %s885 = scalar_select %p884, %s33, 1
      %s886 = smul.addr %s885, 2
      %s887 = scalar_lea.vmem %s16, %s886
      %p888 = pneg %p460
      %p889 = pneg %p457
      %p890 = scmp.lt.s32.totalorder %s33, 1
      %s891 = scalar_select %p890, %s33, 1
      %s892 = smul.addr %s891, 16
      %s893 = smul.addr %s892, 8
      %s894 = scalar_lea.vmem %s17, %s893
      %p895 = pneg %p486
      %p896 = pneg %p483
      %p897 = scmp.lt.s32.totalorder %s33, 1
      %s898 = scalar_select %p897, %s33, 1
      %s899 = smul.addr %s898, 2
      %s900 = scalar_lea.vmem %s18, %s899
      %p901 = pneg %p512
      %p902 = pneg %p509
      %p903 = scmp.lt.s32.totalorder %s33, 1
      %s904 = scalar_select %p903, %s33, 1
      %s905 = scalar_lea.vmem %s19, %s904
      %p906 = pneg %p538
      %p907 = pneg %p535
      %p908 = scmp.lt.s32.totalorder %s33, 1
      %s909 = scalar_select %p908, %s33, 1
      %s910 = scalar_lea.vmem %s20, %s909
      %p911 = pneg %p564
      %p912 = pneg %p561
      %p913 = scmp.lt.s32.totalorder %s33, 1
      %s914 = scalar_select %p913, %s33, 1
      %s915 = smul.addr %s914, 4
      %s916 = smul.addr %s915, 8
      %s917 = scalar_lea.vmem %s21, %s916
      %p918 = pneg %p590
      %p919 = pneg %p587
      %p920 = pneg %p616
      %p921 = pneg %p613
      %p922 = scmp.lt.s32.totalorder %s33, 1
      %s923 = scalar_select %p922, %s33, 1
      %s924 = smul.addr %s923, 2
      %s925 = scalar_lea.vmem %s22, %s924
      %p926 = scmp.lt.s32.totalorder %s33, 1
      %s927 = scalar_select %p926, %s33, 1
      %s928 = smul.addr %s927, 4
      %s929 = smul.addr %s928, 8
      %s930 = scalar_lea.vmem %s0, %s929
      %p931 = scmp.lt.s32.totalorder %s33, 1
      %s932 = scalar_select %p931, %s33, 1
      %s933 = smul.addr %s932, 2
      %s934 = smul.addr %s933, 8
      %s935 = scalar_lea.vmem %s1, %s934
      %p936 = scmp.lt.s32.totalorder %s33, 1
      %s937 = scalar_select %p936, %s33, 1
      %s938 = smul.addr %s937, 24
      %s939 = smul.addr %s938, 8
      %s940 = scalar_lea.vmem %s4, %s939
      %p941 = scmp.lt.s32.totalorder %s33, 1
      %s942 = scalar_select %p941, %s33, 1
      %s943 = scalar_lea.vmem %s5, %s942
      %p944 = scmp.lt.s32.totalorder %s33, 1
      %s945 = scalar_select %p944, %s33, 1
      %s946 = scalar_lea.vmem %s6, %s945
      %p947 = scmp.lt.s32.totalorder %s33, 1
      %s948 = scalar_select %p947, %s33, 1
      %s949 = smul.addr %s948, 2
      %s950 = scalar_lea.vmem %s7, %s949
      %p951 = scmp.lt.s32.totalorder %s33, 1
      %s952 = scalar_select %p951, %s33, 1
      %s953 = smul.addr %s952, 2
      %s954 = scalar_lea.vmem %s8, %s953
      %p955 = scmp.lt.s32.totalorder %s33, 1
      %s956 = scalar_select %p955, %s33, 1
      %s957 = smul.addr %s956, 96
      %s958 = smul.addr %s957, 8
      %s959 = scalar_lea.vmem %s9, %s958
      %p960 = scmp.lt.s32.totalorder %s33, 1
      %s961 = scalar_select %p960, %s33, 1
      %s962 = smul.addr %s961, 24
      %s963 = scalar_lea.vmem %s10, %s962
      %p964 = scmp.lt.s32.totalorder %s33, 1
      %s965 = scalar_select %p964, %s33, 1
      %s966 = smul.addr %s965, 8
      %s967 = smul.addr %s966, 8
      %s968 = scalar_lea.vmem %s11, %s967
      %p969 = scmp.lt.s32.totalorder %s33, 1
      %s970 = scalar_select %p969, %s33, 1
      %s971 = smul.addr %s970, 2
      %s972 = scalar_lea.vmem %s12, %s971
      %p973 = scmp.lt.s32.totalorder %s33, 1
      %s974 = scalar_select %p973, %s33, 1
      %s975 = smul.addr %s974, 2
      %s976 = scalar_lea.vmem %s13, %s975
      %p977 = scmp.lt.s32.totalorder %s33, 1
      %s978 = scalar_select %p977, %s33, 1
      %s979 = smul.addr %s978, 2
      %s980 = scalar_lea.vmem %s14, %s979
      %p981 = scmp.lt.s32.totalorder %s33, 1
      %s982 = scalar_select %p981, %s33, 1
      %s983 = smul.addr %s982, 8
      %s984 = smul.addr %s983, 8
      %s985 = scalar_lea.vmem %s15, %s984
      %p986 = scmp.lt.s32.totalorder %s33, 1
      %s987 = scalar_select %p986, %s33, 1
      %s988 = smul.addr %s987, 2
      %s989 = scalar_lea.vmem %s16, %s988
      %p990 = scmp.lt.s32.totalorder %s33, 1
      %s991 = scalar_select %p990, %s33, 1
      %s992 = smul.addr %s991, 16
      %s993 = smul.addr %s992, 8
      %s994 = scalar_lea.vmem %s17, %s993
      %p995 = scmp.lt.s32.totalorder %s33, 1
      %s996 = scalar_select %p995, %s33, 1
      %s997 = smul.addr %s996, 2
      %s998 = scalar_lea.vmem %s18, %s997
      %p999 = scmp.lt.s32.totalorder %s33, 1
      %s1000 = scalar_select %p999, %s33, 1
      %s1001 = scalar_lea.vmem %s19, %s1000
      %p1002 = scmp.lt.s32.totalorder %s33, 1
      %s1003 = scalar_select %p1002, %s33, 1
      %s1004 = scalar_lea.vmem %s20, %s1003
      %p1005 = scmp.lt.s32.totalorder %s33, 1
      %s1006 = scalar_select %p1005, %s33, 1
      %s1007 = smul.addr %s1006, 4
      %s1008 = smul.addr %s1007, 8
      %s1009 = scalar_lea.vmem %s21, %s1008
      %p1010 = scmp.lt.s32.totalorder %s33, 1
      %s1011 = scalar_select %p1010, %s33, 1
      %s1012 = smul.addr %s1011, 2
      %s1013 = scalar_lea.vmem %s22, %s1012
      %v1014 = vld [vmem:[%s2] sm:$0xff]
      %v1015 = vld [vmem:[%s2 + $0x8] sm:$0x3]
      %v1016 = vld [vmem:[%s930] sm:$0xff]
      %v1017 = vld [vmem:[%s930 + $0x8] sm:$0xff]
      %v1018 = vld [vmem:[%s930 + $0x10] sm:$0x3]
      %v1019 = vld [vmem:[%s930 + $0x18] sm:$0x3]
      %v1020 = vld [vmem:[%s940] sm:$0xff]
      %v1021 = vld [vmem:[%s940 + $0x8] sm:$0xff]
      %v1022 = vld [vmem:[%s940 + $0x10] sm:$0xff]
      %v1023 = vld [vmem:[%s940 + $0x18] sm:$0xff]
      %v1024 = vld [vmem:[%s940 + $0x20] sm:$0xff]
      %v1025 = vld [vmem:[%s940 + $0x28] sm:$0xff]
      %v1026 = vld [vmem:[%s940 + $0x30] sm:$0xff]
      %v1027 = vld [vmem:[%s940 + $0x38] sm:$0xff]
      %v1028 = vld [vmem:[%s940 + $0x40] sm:$0xff]
      %v1029 = vld [vmem:[%s940 + $0x48] sm:$0xff]
      %v1030 = vld [vmem:[%s940 + $0x50] sm:$0xff]
      %v1031 = vld [vmem:[%s940 + $0x58] sm:$0xff]
      %v1032 = vld [vmem:[%s940 + $0x60] sm:$0xff]
      %v1033 = vld [vmem:[%s940 + $0x68] sm:$0xff]
      %v1034 = vld [vmem:[%s940 + $0x70] sm:$0xff]
      %v1035 = vld [vmem:[%s940 + $0x78] sm:$0xff]
      %v1036 = vld [vmem:[%s940 + $0x80] sm:$0xff]
      %v1037 = vld [vmem:[%s940 + $0x88] sm:$0xff]
      %v1038 = vld [vmem:[%s940 + $0x90] sm:$0xff]
      %v1039 = vld [vmem:[%s940 + $0x98] sm:$0xff]
      %v1040 = vld [vmem:[%s940 + $0xa0] sm:$0xff]
      %v1041 = vld [vmem:[%s940 + $0xa8] sm:$0xff]
      %v1042 = vld [vmem:[%s940 + $0xb0] sm:$0xff]
      %v1043 = vld [vmem:[%s940 + $0xb8] sm:$0xff]
      %v1044 = vld [vmem:[%s935] sm:$0xff]
      %v1045 = vld [vmem:[%s935 + $0x8] sm:$0x3]
      %vm1046 = vcmask 523264
      %v1048 = vsel %vm1046, %v1017, 0
      %v1051 = vsel %vm1046, %v1019, 0
      %1053 = vmatpush.msra.mxu0 %v1035
      %1054 = vmatpush.msra.mxu0 %v1034
      %1055 = vmatpush.msra.mxu0 %v1033
      %1056 = vmatpush.msra.mxu0 %v1032
      %1057 = vmatpush.msra.mxu0 %v1031
      %1058 = vmatpush.msra.mxu0 %v1030
      %1059 = vmatpush.msra.mxu0 %v1029
      %1060 = vmatpush.msra.mxu0 %v1028
      %1061 = vmatpush.msra.mxu0 %v1027
      %1062 = vmatpush.msra.mxu0 %v1026
      %1063 = vmatpush.msra.mxu0 %v1025
      %1064 = vmatpush.msra.mxu0 %v1024
      %1065 = vmatpush.msra.mxu0 %v1023
      %1066 = vmatpush.msra.mxu0 %v1022
      %1067 = vmatpush.msra.mxu0 %v1021
      %1068 = vmatpush.msra.mxu0 %v1020
      %1069 = vmatmul.f32.gmra.mxu0 %v1016
      %v1070 = vpop.f32.mrf.mxu0
      %v1071 = vadd.f32 %v1044, %v1070
      %1072 = vmatmul.f32.gmra.mxu0 %v1018
      %v1073 = vpop.f32.mrf.mxu0
      %v1074 = vadd.f32 %v1045, %v1073
      %1075 = vdwg.mxu0
      %1076 = vmatpush.msra.mxu0 0.0
      %1077 = vmatpush.msra.mxu0 0.0
      %1078 = vmatpush.msra.mxu0 0.0
      %1079 = vmatpush.msra.mxu0 0.0
      %1080 = vmatpush.msra.mxu0 0.0
      %1081 = vmatpush.msra.mxu0 0.0
      %1082 = vmatpush.msra.mxu0 0.0
      %1083 = vmatpush.msra.mxu0 0.0
      %1084 = vmatpush.msra.mxu0 %v1043
      %1085 = vmatpush.msra.mxu0 %v1042
      %1086 = vmatpush.msra.mxu0 %v1041
      %1087 = vmatpush.msra.mxu0 %v1040
      %1088 = vmatpush.msra.mxu0 %v1039
      %1089 = vmatpush.msra.mxu0 %v1038
      %1090 = vmatpush.msra.mxu0 %v1037
      %1091 = vmatpush.msra.mxu0 %v1036
      %1092 = vmatmul.f32.gmra.mxu0 %v1048
      %v1093 = vpop.f32.mrf.mxu0
      %v1094 = vadd.f32 %v1071, %v1093
      %1095 = vmatmul.f32.gmra.mxu0 %v1051
      %v1096 = vpop.f32.mrf.mxu0
      %v1097 = vadd.f32 %v1074, %v1096
      %1098 = vdwg.mxu0
      %v1099 = vld [vmem:[%s943] sm:$0x1]
      %v1100 = vld [vmem:[%s946] sm:$0x1]
      %vm1101 = vcmask 261120
      %v1102 = vsel %vm1101, %v1094, 0.0
      %1103 = vadd.xlane.f32.xlu0 %v1102
      %v1104 = vpop.xlane.xlu0 %1103
      %vm1105 = vcmask 254976
      %v1106 = vsel %vm1105, %v1097, 0.0
      %1107 = vadd.xlane.f32.xlu0 %v1106
      %v1108 = vpop.xlane.xlu0 %1107
      %v1109 = vrcp.pop 32.0
      %v1110 = vmul.f32 32.0, %v1109
      %v1111 = vsub.f32 1.0, %v1110
      %v1112 = vmul.f32 %v1109, %v1111
      %v1113 = vadd.f32 %v1109, %v1112
      %vm1114 = vweird.f32 %v1109
      %v1115 = vsel %vm1114, %v1109, %v1113
      %v1116 = vmul.f32 %v1104, %v1115
      %v1117 = vmul.f32 %v1108, %v1115
      %v1118 = vsub.f32 %v1094, %v1116
      %v1119 = vsub.f32 %v1097, %v1117
      %v1120 = vmul.f32 %v1118, %v1118
      %v1121 = vmul.f32 %v1119, %v1119
      %v1122 = vsel %vm1101, %v1120, 0.0
      %1123 = vadd.xlane.f32.xlu0 %v1122
      %v1124 = vpop.xlane.xlu0 %1123
      %v1125 = vsel %vm1105, %v1121, 0.0
      %1126 = vadd.xlane.f32.xlu0 %v1125
      %v1127 = vpop.xlane.xlu0 %1126
      %v1128 = vmul.f32 %v1124, %v1115
      %v1129 = vmul.f32 %v1127, %v1115
      %v1130 = vadd.f32 %v1128, 1e-05
      %v1131 = vadd.f32 %v1129, 1e-05
      %v1132 = vrsqrt.pop %v1130
      %v1133 = vmul.f32 %v1132, %v1130
      %v1134 = vmul.f32 %v1133, %v1132
      %v1135 = vmul.f32 0.5, %v1134
      %v1136 = vsub.f32 1.5, %v1135
      %v1137 = vmul.f32 %v1132, %v1136
      %vm1138 = vweird.f32 %v1130
      %vm1139 = vweird.f32 %v1132
      %vm1140 = vmor %vm1138, %vm1139
      %v1141 = vsel %vm1140, %v1132, %v1137
      %v1142 = vrsqrt.pop %v1131
      %v1143 = vmul.f32 %v1142, %v1131
      %v1144 = vmul.f32 %v1143, %v1142
      %v1145 = vmul.f32 0.5, %v1144
      %v1146 = vsub.f32 1.5, %v1145
      %v1147 = vmul.f32 %v1142, %v1146
      %vm1148 = vweird.f32 %v1131
      %vm1149 = vweird.f32 %v1142
      %vm1150 = vmor %vm1148, %vm1149
      %v1151 = vsel %vm1150, %v1142, %v1147
      %v1152 = vmul.f32 %v1118, %v1141
      %v1153 = vmul.f32 %v1119, %v1151
      %v1155 = vperm.slane %v1099, 0
      %v1157 = vmul.f32 %v1152, %v1155
      %v1158 = vmul.f32 %v1153, %v1155
      %v1160 = vperm.slane %v1100, 0
      %v1162 = vadd.f32 %v1157, %v1160
      %v1163 = vadd.f32 %v1158, %v1160
      %v1164 = vld [vmem:[%s950] sm:$0x1]
      %v1165 = vld [vmem:[%s954] sm:$0x1]
      %v1166 = vsel %vm1101, %v1162, 0.0
      %1167 = vadd.xlane.f32.xlu0 %v1166
      %v1168 = vpop.xlane.xlu0 %1167
      %v1169 = vsel %vm1105, %v1163, 0.0
      %1170 = vadd.xlane.f32.xlu0 %v1169
      %v1171 = vpop.xlane.xlu0 %1170
      %v1172 = vmul.f32 %v1168, %v1115
      %v1173 = vmul.f32 %v1171, %v1115
      %v1174 = vsub.f32 %v1162, %v1172
      %v1175 = vsub.f32 %v1163, %v1173
      %v1176 = vmul.f32 %v1174, %v1174
      %v1177 = vmul.f32 %v1175, %v1175
      %v1178 = vsel %vm1101, %v1176, 0.0
      %1179 = vadd.xlane.f32.xlu0 %v1178
      %v1180 = vpop.xlane.xlu0 %1179
      %v1181 = vsel %vm1105, %v1177, 0.0
      %1182 = vadd.xlane.f32.xlu0 %v1181
      %v1183 = vpop.xlane.xlu0 %1182
      %v1184 = vmul.f32 %v1180, %v1115
      %v1185 = vmul.f32 %v1183, %v1115
      %v1186 = vadd.f32 %v1184, 1e-05
      %v1187 = vadd.f32 %v1185, 1e-05
      %v1188 = vrsqrt.pop %v1186
      %v1189 = vmul.f32 %v1188, %v1186
      %v1190 = vmul.f32 %v1189, %v1188
      %v1191 = vmul.f32 0.5, %v1190
      %v1192 = vsub.f32 1.5, %v1191
      %v1193 = vmul.f32 %v1188, %v1192
      %vm1194 = vweird.f32 %v1186
      %vm1195 = vweird.f32 %v1188
      %vm1196 = vmor %vm1194, %vm1195
      %v1197 = vsel %vm1196, %v1188, %v1193
      %v1198 = vrsqrt.pop %v1187
      %v1199 = vmul.f32 %v1198, %v1187
      %v1200 = vmul.f32 %v1199, %v1198
      %v1201 = vmul.f32 0.5, %v1200
      %v1202 = vsub.f32 1.5, %v1201
      %v1203 = vmul.f32 %v1198, %v1202
      %vm1204 = vweird.f32 %v1187
      %vm1205 = vweird.f32 %v1198
      %vm1206 = vmor %vm1204, %vm1205
      %v1207 = vsel %vm1206, %v1198, %v1203
      %v1208 = vmul.f32 %v1174, %v1197
      %v1209 = vmul.f32 %v1175, %v1207
      %v1211 = vperm.slane %v1164, 0
      %v1213 = vmul.f32 %v1208, %v1211
      %v1214 = vmul.f32 %v1209, %v1211
      %v1216 = vperm.slane %v1165, 0
      %v1218 = vadd.f32 %v1213, %v1216
      %v1219 = vadd.f32 %v1214, %v1216
      %v1220 = vld [vmem:[%s968] sm:$0xff]
      %v1221 = vld [vmem:[%s968 + $0x8] sm:$0xff]
      %v1222 = vld [vmem:[%s968 + $0x10] sm:$0xff]
      %v1223 = vld [vmem:[%s968 + $0x18] sm:$0xff]
      %v1224 = vld [vmem:[%s959] sm:$0xff]
      %v1225 = vld [vmem:[%s959 + $0x8] sm:$0xff]
      %v1226 = vld [vmem:[%s959 + $0x10] sm:$0xff]
      %v1227 = vld [vmem:[%s959 + $0x18] sm:$0xff]
      %v1228 = vld [vmem:[%s963] sm:$0x1]
      %v1230 = vperm.slane %v1228, 0
      %v1233 = vsel %vm1101, %v1218, 0
      %v1236 = vsel %vm1101, %v1219, 0
      %1238 = vmatpush.msra.mxu0 0.0
      %1239 = vmatpush.msra.mxu0 0.0
      %1240 = vmatpush.msra.mxu0 0.0
      %1241 = vmatpush.msra.mxu0 0.0
      %1242 = vmatpush.msra.mxu0 0.0
      %1243 = vmatpush.msra.mxu0 0.0
      %1244 = vmatpush.msra.mxu0 0.0
      %1245 = vmatpush.msra.mxu0 0.0
      %1246 = vmatpush.msra.mxu0 0.0
      %1247 = vmatpush.msra.mxu0 0.0
      %1248 = vmatpush.msra.mxu0 0.0
      %1249 = vmatpush.msra.mxu0 0.0
      %1250 = vmatpush.msra.mxu0 %v1227
      %1251 = vmatpush.msra.mxu0 %v1226
      %1252 = vmatpush.msra.mxu0 %v1225
      %1253 = vmatpush.msra.mxu0 %v1224
      %1254 = vmatmul.f32.gmra.mxu0 %v1233
      %v1255 = vpop.f32.mrf.mxu0
      %v1256 = vadd.f32 %v1230, %v1255
      %1257 = vmatmul.f32.gmra.mxu0 %v1236
      %v1258 = vpop.f32.mrf.mxu0
      %v1259 = vadd.f32 %v1230, %v1258
      %1260 = vdwg.mxu0
      %v1261 = vmul.f32 %v1256, 0.35355338
      %v1262 = vmul.f32 %v1259, 0.35355338
      %s1263 = scalar_lea.vmem %s959, 128
      %v1264 = vld [vmem:[%s1263] sm:$0xff]
      %v1265 = vld [vmem:[%s1263 + $0x8] sm:$0xff]
      %v1266 = vld [vmem:[%s1263 + $0x10] sm:$0xff]
      %v1267 = vld [vmem:[%s1263 + $0x18] sm:$0xff]
      %s1268 = scalar_lea.vmem %s963, 4
      %v1269 = vld [vmem:[%s1268] sm:$0x1]
      %v1271 = vperm.slane %v1269, 0
      %1273 = vmatpush.msra.mxu0 0.0
      %1274 = vmatpush.msra.mxu0 0.0
      %1275 = vmatpush.msra.mxu0 0.0
      %1276 = vmatpush.msra.mxu0 0.0
      %1277 = vmatpush.msra.mxu0 0.0
      %1278 = vmatpush.msra.mxu0 0.0
      %1279 = vmatpush.msra.mxu0 0.0
      %1280 = vmatpush.msra.mxu0 0.0
      %1281 = vmatpush.msra.mxu0 0.0
      %1282 = vmatpush.msra.mxu0 0.0
      %1283 = vmatpush.msra.mxu0 0.0
      %1284 = vmatpush.msra.mxu0 0.0
      %1285 = vmatpush.msra.mxu0 %v1267
      %1286 = vmatpush.msra.mxu0 %v1266
      %1287 = vmatpush.msra.mxu0 %v1265
      %1288 = vmatpush.msra.mxu0 %v1264
      %1289 = vmatmul.f32.gmra.mxu0 %v1233
      %v1290 = vpop.f32.mrf.mxu0
      %v1291 = vadd.f32 %v1271, %v1290
      %1292 = vmatmul.f32.gmra.mxu0 %v1236
      %v1293 = vpop.f32.mrf.mxu0
      %v1294 = vadd.f32 %v1271, %v1293
      %1295 = vdwg.mxu0
      %s1296 = scalar_lea.vmem %s959, 256
      %v1297 = vld [vmem:[%s1296] sm:$0xff]
      %v1298 = vld [vmem:[%s1296 + $0x8] sm:$0xff]
      %v1299 = vld [vmem:[%s1296 + $0x10] sm:$0xff]
      %v1300 = vld [vmem:[%s1296 + $0x18] sm:$0xff]
      %s1301 = scalar_lea.vmem %s963, 8
      %v1302 = vld [vmem:[%s1301] sm:$0x1]
      %v1304 = vperm.slane %v1302, 0
      %1306 = vmatpush.msra.mxu0 0.0
      %1307 = vmatpush.msra.mxu0 0.0
      %1308 = vmatpush.msra.mxu0 0.0
      %1309 = vmatpush.msra.mxu0 0.0
      %1310 = vmatpush.msra.mxu0 0.0
      %1311 = vmatpush.msra.mxu0 0.0
      %1312 = vmatpush.msra.mxu0 0.0
      %1313 = vmatpush.msra.mxu0 0.0
      %1314 = vmatpush.msra.mxu0 0.0
      %1315 = vmatpush.msra.mxu0 0.0
      %1316 = vmatpush.msra.mxu0 0.0
      %1317 = vmatpush.msra.mxu0 0.0
      %1318 = vmatpush.msra.mxu0 %v1300
      %1319 = vmatpush.msra.mxu0 %v1299
      %1320 = vmatpush.msra.mxu0 %v1298
      %1321 = vmatpush.msra.mxu0 %v1297
      %1322 = vmatmul.f32.gmra.mxu0 %v1233
      %v1323 = vpop.f32.mrf.mxu0
      %v1324 = vadd.f32 %v1304, %v1323
      %1325 = vmatmul.f32.gmra.mxu0 %v1236
      %v1326 = vpop.f32.mrf.mxu0
      %v1327 = vadd.f32 %v1304, %v1326
      %1328 = vdwg.mxu0
      %vm1329 = vcmask 64512
      %v1331 = vsel %vm1329, %v1261, 0
      %v1334 = vsel %vm1329, %v1262, 0
      %v1337 = vsel %vm1329, %v1291, 0
      %v1340 = vsel %vm1329, %v1294, 0
      %1342 = vmatpush.xpose.msra.mxu0 0.0
      %1343 = vmatpush.xpose.msra.mxu0 0.0
      %1344 = vmatpush.xpose.msra.mxu0 0.0
      %1345 = vmatpush.xpose.msra.mxu0 0.0
      %1346 = vmatpush.xpose.msra.mxu0 0.0
      %1347 = vmatpush.xpose.msra.mxu0 0.0
      %1348 = vmatpush.xpose.msra.mxu0 0.0
      %1349 = vmatpush.xpose.msra.mxu0 0.0
      %1350 = vmatpush.xpose.msra.mxu0 0.0
      %1351 = vmatpush.xpose.msra.mxu0 0.0
      %1352 = vmatpush.xpose.msra.mxu0 0.0
      %1353 = vmatpush.xpose.msra.mxu0 0.0
      %1354 = vmatpush.xpose.msra.mxu0 0.0
      %1355 = vmatpush.xpose.msra.mxu0 0.0
      %1356 = vmatpush.xpose.msra.mxu0 %v1340
      %1357 = vmatpush.xpose.msra.mxu0 %v1337
      %1358 = vmatmul.f32.gmra.mxu0 %v1331
      %v1359 = vpop.f32.mrf.mxu0
      %v1360 = vadd.f32 %v1014, %v1359
      %1361 = vmatmul.f32.gmra.mxu0 %v1334
      %v1362 = vpop.f32.mrf.mxu0
      %v1363 = vadd.f32 %v1015, %v1362
      %1364 = vdwg.mxu0
      %vm1365 = vcmask 80896
      %v1366 = vsel %vm1365, %v1360, -inf
      %1367 = vmax.xlane.f32.xlu0 %v1366
      %v1368 = vpop.xlane.xlu0 %1367
      %vm1369 = vcmask 74752
      %v1370 = vsel %vm1369, %v1363, -inf
      %1371 = vmax.xlane.f32.xlu0 %v1370
      %v1372 = vpop.xlane.xlu0 %1371
      %v1373 = vsub.f32 %v1360, %v1368
      %v1374 = vsub.f32 %v1363, %v1372
      %v1375 = vmul.f32 %v1373, 1.442695
      %v1376 = vpow.pop %v1375
      %v1377 = vmul.f32 %v1374, 1.442695
      %v1378 = vpow.pop %v1377
      %v1379 = vsel %vm1365, %v1376, 0.0
      %1380 = vadd.xlane.f32.xlu0 %v1379
      %v1381 = vpop.xlane.xlu0 %1380
      %v1382 = vsel %vm1369, %v1378, 0.0
      %1383 = vadd.xlane.f32.xlu0 %v1382
      %v1384 = vpop.xlane.xlu0 %1383
      %v1385 = vrcp.pop %v1381
      %v1386 = vrcp.pop %v1384
      %v1387 = vmul.f32 %v1376, %v1385
      %v1388 = vmul.f32 %v1378, %v1386
      %v1390 = vsel %vm1365, %v1387, 0
      %v1393 = vsel %vm1365, %v1388, 0
      %vm1395 = vcmask 1041408
      %v1397 = vsel %vm1395, %v1327, 0
      %1399 = vmatpush.msra.mxu0 0.0
      %1400 = vmatpush.msra.mxu0 0.0
      %1401 = vmatpush.msra.mxu0 0.0
      %1402 = vmatpush.msra.mxu0 0.0
      %1403 = vmatpush.msra.mxu0 0.0
      %1404 = vmatpush.msra.mxu0 0.0
      %1405 = vmatpush.msra.mxu0 0.0
      %1406 = vmatpush.msra.mxu0 0.0
      %1407 = vmatpush.msra.mxu0 0.0
      %1408 = vmatpush.msra.mxu0 0.0
      %1409 = vmatpush.msra.mxu0 0.0
      %1410 = vmatpush.msra.mxu0 0.0
      %1411 = vmatpush.msra.mxu0 0.0
      %1412 = vmatpush.msra.mxu0 0.0
      %1413 = vmatpush.msra.mxu0 %v1397
      %1414 = vmatpush.msra.mxu0 %v1324
      %1415 = vmatmul.f32.gmra.mxu0 %v1390
      %v1416 = vpop.f32.mrf.mxu0
      %v1417 = vadd.f32 0.0, %v1416
      %1418 = vmatmul.f32.gmra.mxu0 %v1393
      %v1419 = vpop.f32.mrf.mxu0
      %v1420 = vadd.f32 0.0, %v1419
      %1421 = vdwg.mxu0
      %s1422 = scalar_lea.vmem %s959, 32
      %v1423 = vld [vmem:[%s1422] sm:$0xff]
      %v1424 = vld [vmem:[%s1422 + $0x8] sm:$0xff]
      %v1425 = vld [vmem:[%s1422 + $0x10] sm:$0xff]
      %v1426 = vld [vmem:[%s1422 + $0x18] sm:$0xff]
      %s1427 = scalar_lea.vmem %s963, 1
      %v1428 = vld [vmem:[%s1427] sm:$0x1]
      %v1430 = vperm.slane %v1428, 0
      %1432 = vmatpush.msra.mxu0 0.0
      %1433 = vmatpush.msra.mxu0 0.0
      %1434 = vmatpush.msra.mxu0 0.0
      %1435 = vmatpush.msra.mxu0 0.0
      %1436 = vmatpush.msra.mxu0 0.0
      %1437 = vmatpush.msra.mxu0 0.0
      %1438 = vmatpush.msra.mxu0 0.0
      %1439 = vmatpush.msra.mxu0 0.0
      %1440 = vmatpush.msra.mxu0 0.0
      %1441 = vmatpush.msra.mxu0 0.0
      %1442 = vmatpush.msra.mxu0 0.0
      %1443 = vmatpush.msra.mxu0 0.0
      %1444 = vmatpush.msra.mxu0 %v1426
      %1445 = vmatpush.msra.mxu0 %v1425
      %1446 = vmatpush.msra.mxu0 %v1424
      %1447 = vmatpush.msra.mxu0 %v1423
      %1448 = vmatmul.f32.gmra.mxu0 %v1233
      %v1449 = vpop.f32.mrf.mxu0
      %v1450 = vadd.f32 %v1430, %v1449
      %1451 = vmatmul.f32.gmra.mxu0 %v1236
      %v1452 = vpop.f32.mrf.mxu0
      %v1453 = vadd.f32 %v1430, %v1452
      %1454 = vdwg.mxu0
      %v1455 = vmul.f32 %v1450, 0.35355338
      %v1456 = vmul.f32 %v1453, 0.35355338
      %s1457 = scalar_lea.vmem %s959, 160
      %v1458 = vld [vmem:[%s1457] sm:$0xff]
      %v1459 = vld [vmem:[%s1457 + $0x8] sm:$0xff]
      %v1460 = vld [vmem:[%s1457 + $0x10] sm:$0xff]
      %v1461 = vld [vmem:[%s1457 + $0x18] sm:$0xff]
      %s1462 = scalar_lea.vmem %s963, 5
      %v1463 = vld [vmem:[%s1462] sm:$0x1]
      %v1465 = vperm.slane %v1463, 0
      %1467 = vmatpush.msra.mxu0 0.0
      %1468 = vmatpush.msra.mxu0 0.0
      %1469 = vmatpush.msra.mxu0 0.0
      %1470 = vmatpush.msra.mxu0 0.0
      %1471 = vmatpush.msra.mxu0 0.0
      %1472 = vmatpush.msra.mxu0 0.0
      %1473 = vmatpush.msra.mxu0 0.0
      %1474 = vmatpush.msra.mxu0 0.0
      %1475 = vmatpush.msra.mxu0 0.0
      %1476 = vmatpush.msra.mxu0 0.0
      %1477 = vmatpush.msra.mxu0 0.0
      %1478 = vmatpush.msra.mxu0 0.0
      %1479 = vmatpush.msra.mxu0 %v1461
      %1480 = vmatpush.msra.mxu0 %v1460
      %1481 = vmatpush.msra.mxu0 %v1459
      %1482 = vmatpush.msra.mxu0 %v1458
      %1483 = vmatmul.f32.gmra.mxu0 %v1233
      %v1484 = vpop.f32.mrf.mxu0
      %v1485 = vadd.f32 %v1465, %v1484
      %1486 = vmatmul.f32.gmra.mxu0 %v1236
      %v1487 = vpop.f32.mrf.mxu0
      %v1488 = vadd.f32 %v1465, %v1487
      %1489 = vdwg.mxu0
      %s1490 = scalar_lea.vmem %s959, 288
      %v1491 = vld [vmem:[%s1490] sm:$0xff]
      %v1492 = vld [vmem:[%s1490 + $0x8] sm:$0xff]
      %v1493 = vld [vmem:[%s1490 + $0x10] sm:$0xff]
      %v1494 = vld [vmem:[%s1490 + $0x18] sm:$0xff]
      %s1495 = scalar_lea.vmem %s963, 9
      %v1496 = vld [vmem:[%s1495] sm:$0x1]
      %v1498 = vperm.slane %v1496, 0
      %1500 = vmatpush.msra.mxu0 0.0
      %1501 = vmatpush.msra.mxu0 0.0
      %1502 = vmatpush.msra.mxu0 0.0
      %1503 = vmatpush.msra.mxu0 0.0
      %1504 = vmatpush.msra.mxu0 0.0
      %1505 = vmatpush.msra.mxu0 0.0
      %1506 = vmatpush.msra.mxu0 0.0
      %1507 = vmatpush.msra.mxu0 0.0
      %1508 = vmatpush.msra.mxu0 0.0
      %1509 = vmatpush.msra.mxu0 0.0
      %1510 = vmatpush.msra.mxu0 0.0
      %1511 = vmatpush.msra.mxu0 0.0
      %1512 = vmatpush.msra.mxu0 %v1494
      %1513 = vmatpush.msra.mxu0 %v1493
      %1514 = vmatpush.msra.mxu0 %v1492
      %1515 = vmatpush.msra.mxu0 %v1491
      %1516 = vmatmul.f32.gmra.mxu0 %v1233
      %v1517 = vpop.f32.mrf.mxu0
      %v1518 = vadd.f32 %v1498, %v1517
      %1519 = vmatmul.f32.gmra.mxu0 %v1236
      %v1520 = vpop.f32.mrf.mxu0
      %v1521 = vadd.f32 %v1498, %v1520
      %1522 = vdwg.mxu0
      %v1524 = vsel %vm1329, %v1455, 0
      %v1527 = vsel %vm1329, %v1456, 0
      %v1530 = vsel %vm1329, %v1485, 0
      %v1533 = vsel %vm1329, %v1488, 0
      %1535 = vmatpush.xpose.msra.mxu0 0.0
      %1536 = vmatpush.xpose.msra.mxu0 0.0
      %1537 = vmatpush.xpose.msra.mxu0 0.0
      %1538 = vmatpush.xpose.msra.mxu0 0.0
      %1539 = vmatpush.xpose.msra.mxu0 0.0
      %1540 = vmatpush.xpose.msra.mxu0 0.0
      %1541 = vmatpush.xpose.msra.mxu0 0.0
      %1542 = vmatpush.xpose.msra.mxu0 0.0
      %1543 = vmatpush.xpose.msra.mxu0 0.0
      %1544 = vmatpush.xpose.msra.mxu0 0.0
      %1545 = vmatpush.xpose.msra.mxu0 0.0
      %1546 = vmatpush.xpose.msra.mxu0 0.0
      %1547 = vmatpush.xpose.msra.mxu0 0.0
      %1548 = vmatpush.xpose.msra.mxu0 0.0
      %1549 = vmatpush.xpose.msra.mxu0 %v1533
      %1550 = vmatpush.xpose.msra.mxu0 %v1530
      %1551 = vmatmul.f32.gmra.mxu0 %v1524
      %v1552 = vpop.f32.mrf.mxu0
      %v1553 = vadd.f32 %v1014, %v1552
      %1554 = vmatmul.f32.gmra.mxu0 %v1527
      %v1555 = vpop.f32.mrf.mxu0
      %v1556 = vadd.f32 %v1015, %v1555
      %1557 = vdwg.mxu0
      %v1558 = vsel %vm1365, %v1553, -inf
      %1559 = vmax.xlane.f32.xlu0 %v1558
      %v1560 = vpop.xlane.xlu0 %1559
      %v1561 = vsel %vm1369, %v1556, -inf
      %1562 = vmax.xlane.f32.xlu0 %v1561
      %v1563 = vpop.xlane.xlu0 %1562
      %v1564 = vsub.f32 %v1553, %v1560
      %v1565 = vsub.f32 %v1556, %v1563
      %v1566 = vmul.f32 %v1564, 1.442695
      %v1567 = vpow.pop %v1566
      %v1568 = vmul.f32 %v1565, 1.442695
      %v1569 = vpow.pop %v1568
      %v1570 = vsel %vm1365, %v1567, 0.0
      %1571 = vadd.xlane.f32.xlu0 %v1570
      %v1572 = vpop.xlane.xlu0 %1571
      %v1573 = vsel %vm1369, %v1569, 0.0
      %1574 = vadd.xlane.f32.xlu0 %v1573
      %v1575 = vpop.xlane.xlu0 %1574
      %v1576 = vrcp.pop %v1572
      %v1577 = vrcp.pop %v1575
      %v1578 = vmul.f32 %v1567, %v1576
      %v1579 = vmul.f32 %v1569, %v1577
      %v1581 = vsel %vm1365, %v1578, 0
      %v1584 = vsel %vm1365, %v1579, 0
      %v1587 = vsel %vm1395, %v1521, 0
      %1589 = vmatpush.msra.mxu0 0.0
      %1590 = vmatpush.msra.mxu0 0.0
      %1591 = vmatpush.msra.mxu0 0.0
      %1592 = vmatpush.msra.mxu0 0.0
      %1593 = vmatpush.msra.mxu0 0.0
      %1594 = vmatpush.msra.mxu0 0.0
      %1595 = vmatpush.msra.mxu0 0.0
      %1596 = vmatpush.msra.mxu0 0.0
      %1597 = vmatpush.msra.mxu0 0.0
      %1598 = vmatpush.msra.mxu0 0.0
      %1599 = vmatpush.msra.mxu0 0.0
      %1600 = vmatpush.msra.mxu0 0.0
      %1601 = vmatpush.msra.mxu0 0.0
      %1602 = vmatpush.msra.mxu0 0.0
      %1603 = vmatpush.msra.mxu0 %v1587
      %1604 = vmatpush.msra.mxu0 %v1518
      %1605 = vmatmul.f32.gmra.mxu0 %v1581
      %v1606 = vpop.f32.mrf.mxu0
      %v1607 = vadd.f32 0.0, %v1606
      %1608 = vmatmul.f32.gmra.mxu0 %v1584
      %v1609 = vpop.f32.mrf.mxu0
      %v1610 = vadd.f32 0.0, %v1609
      %1611 = vdwg.mxu0
      %v1613 = vsel %vm1329, %v1607, 0
      %v1616 = vsel %vm1329, %v1610, 0
      %1618 = vmatpush.msra.mxu0 0.0
      %1619 = vmatpush.msra.mxu0 0.0
      %1620 = vmatpush.msra.mxu0 0.0
      %1621 = vmatpush.msra.mxu0 0.0
      %1622 = vmatpush.msra.mxu0 0.0
      %1623 = vmatpush.msra.mxu0 0.0
      %1624 = vmatpush.msra.mxu0 0.0
      %1625 = vmatpush.msra.mxu0 0.0
      %1626 = vmatpush.msra.mxu0 0.0
      %1627 = vmatpush.msra.mxu0 0.0
      %1628 = vmatpush.msra.mxu0 0.0
      %1629 = vmatpush.msra.mxu0 0.0
      %1630 = vmatpush.msra.mxu0 0.0
      %1631 = vmatpush.msra.mxu0 0.0
      %1632 = vmatpush.msra.mxu0 0.0
      %1633 = vmatpush.msra.mxu0 %v1221
      %1634 = vmatmul.f32.gmra.mxu0 %v1613
      %v1635 = vpop.f32.mrf.mxu0
      %v1636 = vadd.f32 0.0, %v1635
      %1637 = vmatmul.f32.gmra.mxu0 %v1616
      %v1638 = vpop.f32.mrf.mxu0
      %v1639 = vadd.f32 0.0, %v1638
      %1640 = vdwg.mxu0
      %v1642 = vsel %vm1329, %v1417, 0
      %v1645 = vsel %vm1329, %v1420, 0
      %1647 = vmatpush.msra.mxu0 0.0
      %1648 = vmatpush.msra.mxu0 0.0
      %1649 = vmatpush.msra.mxu0 0.0
      %1650 = vmatpush.msra.mxu0 0.0
      %1651 = vmatpush.msra.mxu0 0.0
      %1652 = vmatpush.msra.mxu0 0.0
      %1653 = vmatpush.msra.mxu0 0.0
      %1654 = vmatpush.msra.mxu0 0.0
      %1655 = vmatpush.msra.mxu0 0.0
      %1656 = vmatpush.msra.mxu0 0.0
      %1657 = vmatpush.msra.mxu0 0.0
      %1658 = vmatpush.msra.mxu0 0.0
      %1659 = vmatpush.msra.mxu0 0.0
      %1660 = vmatpush.msra.mxu0 0.0
      %1661 = vmatpush.msra.mxu0 0.0
      %1662 = vmatpush.msra.mxu0 %v1220
      %1663 = vmatmul.f32.gmra.mxu0 %v1642
      %v1664 = vpop.f32.mrf.mxu0
      %v1665 = vadd.f32 %v1636, %v1664
      %1666 = vmatmul.f32.gmra.mxu0 %v1645
      %v1667 = vpop.f32.mrf.mxu0
      %v1668 = vadd.f32 %v1639, %v1667
      %1669 = vdwg.mxu0
      %s1670 = scalar_lea.vmem %s959, 64
      %v1671 = vld [vmem:[%s1670] sm:$0xff]
      %v1672 = vld [vmem:[%s1670 + $0x8] sm:$0xff]
      %v1673 = vld [vmem:[%s1670 + $0x10] sm:$0xff]
      %v1674 = vld [vmem:[%s1670 + $0x18] sm:$0xff]
      %s1675 = scalar_lea.vmem %s963, 2
      %v1676 = vld [vmem:[%s1675] sm:$0x1]
      %v1678 = vperm.slane %v1676, 0
      %1680 = vmatpush.msra.mxu0 0.0
      %1681 = vmatpush.msra.mxu0 0.0
      %1682 = vmatpush.msra.mxu0 0.0
      %1683 = vmatpush.msra.mxu0 0.0
      %1684 = vmatpush.msra.mxu0 0.0
      %1685 = vmatpush.msra.mxu0 0.0
      %1686 = vmatpush.msra.mxu0 0.0
      %1687 = vmatpush.msra.mxu0 0.0
      %1688 = vmatpush.msra.mxu0 0.0
      %1689 = vmatpush.msra.mxu0 0.0
      %1690 = vmatpush.msra.mxu0 0.0
      %1691 = vmatpush.msra.mxu0 0.0
      %1692 = vmatpush.msra.mxu0 %v1674
      %1693 = vmatpush.msra.mxu0 %v1673
      %1694 = vmatpush.msra.mxu0 %v1672
      %1695 = vmatpush.msra.mxu0 %v1671
      %1696 = vmatmul.f32.gmra.mxu0 %v1233
      %v1697 = vpop.f32.mrf.mxu0
      %v1698 = vadd.f32 %v1678, %v1697
      %1699 = vmatmul.f32.gmra.mxu0 %v1236
      %v1700 = vpop.f32.mrf.mxu0
      %v1701 = vadd.f32 %v1678, %v1700
      %1702 = vdwg.mxu0
      %v1703 = vmul.f32 %v1698, 0.35355338
      %v1704 = vmul.f32 %v1701, 0.35355338
      %s1705 = scalar_lea.vmem %s959, 192
      %v1706 = vld [vmem:[%s1705] sm:$0xff]
      %v1707 = vld [vmem:[%s1705 + $0x8] sm:$0xff]
      %v1708 = vld [vmem:[%s1705 + $0x10] sm:$0xff]
      %v1709 = vld [vmem:[%s1705 + $0x18] sm:$0xff]
      %s1710 = scalar_lea.vmem %s963, 6
      %v1711 = vld [vmem:[%s1710] sm:$0x1]
      %v1713 = vperm.slane %v1711, 0
      %1715 = vmatpush.msra.mxu0 0.0
      %1716 = vmatpush.msra.mxu0 0.0
      %1717 = vmatpush.msra.mxu0 0.0
      %1718 = vmatpush.msra.mxu0 0.0
      %1719 = vmatpush.msra.mxu0 0.0
      %1720 = vmatpush.msra.mxu0 0.0
      %1721 = vmatpush.msra.mxu0 0.0
      %1722 = vmatpush.msra.mxu0 0.0
      %1723 = vmatpush.msra.mxu0 0.0
      %1724 = vmatpush.msra.mxu0 0.0
      %1725 = vmatpush.msra.mxu0 0.0
      %1726 = vmatpush.msra.mxu0 0.0
      %1727 = vmatpush.msra.mxu0 %v1709
      %1728 = vmatpush.msra.mxu0 %v1708
      %1729 = vmatpush.msra.mxu0 %v1707
      %1730 = vmatpush.msra.mxu0 %v1706
      %1731 = vmatmul.f32.gmra.mxu0 %v1233
      %v1732 = vpop.f32.mrf.mxu0
      %v1733 = vadd.f32 %v1713, %v1732
      %1734 = vmatmul.f32.gmra.mxu0 %v1236
      %v1735 = vpop.f32.mrf.mxu0
      %v1736 = vadd.f32 %v1713, %v1735
      %1737 = vdwg.mxu0
      %s1738 = scalar_lea.vmem %s959, 320
      %v1739 = vld [vmem:[%s1738] sm:$0xff]
      %v1740 = vld [vmem:[%s1738 + $0x8] sm:$0xff]
      %v1741 = vld [vmem:[%s1738 + $0x10] sm:$0xff]
      %v1742 = vld [vmem:[%s1738 + $0x18] sm:$0xff]
      %s1743 = scalar_lea.vmem %s963, 10
      %v1744 = vld [vmem:[%s1743] sm:$0x1]
      %v1746 = vperm.slane %v1744, 0
      %1748 = vmatpush.msra.mxu0 0.0
      %1749 = vmatpush.msra.mxu0 0.0
      %1750 = vmatpush.msra.mxu0 0.0
      %1751 = vmatpush.msra.mxu0 0.0
      %1752 = vmatpush.msra.mxu0 0.0
      %1753 = vmatpush.msra.mxu0 0.0
      %1754 = vmatpush.msra.mxu0 0.0
      %1755 = vmatpush.msra.mxu0 0.0
      %1756 = vmatpush.msra.mxu0 0.0
      %1757 = vmatpush.msra.mxu0 0.0
      %1758 = vmatpush.msra.mxu0 0.0
      %1759 = vmatpush.msra.mxu0 0.0
      %1760 = vmatpush.msra.mxu0 %v1742
      %1761 = vmatpush.msra.mxu0 %v1741
      %1762 = vmatpush.msra.mxu0 %v1740
      %1763 = vmatpush.msra.mxu0 %v1739
      %1764 = vmatmul.f32.gmra.mxu0 %v1233
      %v1765 = vpop.f32.mrf.mxu0
      %v1766 = vadd.f32 %v1746, %v1765
      %1767 = vmatmul.f32.gmra.mxu0 %v1236
      %v1768 = vpop.f32.mrf.mxu0
      %v1769 = vadd.f32 %v1746, %v1768
      %1770 = vdwg.mxu0
      %v1772 = vsel %vm1329, %v1703, 0
      %v1775 = vsel %vm1329, %v1704, 0
      %v1778 = vsel %vm1329, %v1733, 0
      %v1781 = vsel %vm1329, %v1736, 0
      %1783 = vmatpush.xpose.msra.mxu0 0.0
      %1784 = vmatpush.xpose.msra.mxu0 0.0
      %1785 = vmatpush.xpose.msra.mxu0 0.0
      %1786 = vmatpush.xpose.msra.mxu0 0.0
      %1787 = vmatpush.xpose.msra.mxu0 0.0
      %1788 = vmatpush.xpose.msra.mxu0 0.0
      %1789 = vmatpush.xpose.msra.mxu0 0.0
      %1790 = vmatpush.xpose.msra.mxu0 0.0
      %1791 = vmatpush.xpose.msra.mxu0 0.0
      %1792 = vmatpush.xpose.msra.mxu0 0.0
      %1793 = vmatpush.xpose.msra.mxu0 0.0
      %1794 = vmatpush.xpose.msra.mxu0 0.0
      %1795 = vmatpush.xpose.msra.mxu0 0.0
      %1796 = vmatpush.xpose.msra.mxu0 0.0
      %1797 = vmatpush.xpose.msra.mxu0 %v1781
      %1798 = vmatpush.xpose.msra.mxu0 %v1778
      %1799 = vmatmul.f32.gmra.mxu0 %v1772
      %v1800 = vpop.f32.mrf.mxu0
      %v1801 = vadd.f32 %v1014, %v1800
      %1802 = vmatmul.f32.gmra.mxu0 %v1775
      %v1803 = vpop.f32.mrf.mxu0
      %v1804 = vadd.f32 %v1015, %v1803
      %1805 = vdwg.mxu0
      %v1806 = vsel %vm1365, %v1801, -inf
      %1807 = vmax.xlane.f32.xlu0 %v1806
      %v1808 = vpop.xlane.xlu0 %1807
      %v1809 = vsel %vm1369, %v1804, -inf
      %1810 = vmax.xlane.f32.xlu0 %v1809
      %v1811 = vpop.xlane.xlu0 %1810
      %v1812 = vsub.f32 %v1801, %v1808
      %v1813 = vsub.f32 %v1804, %v1811
      %v1814 = vmul.f32 %v1812, 1.442695
      %v1815 = vpow.pop %v1814
      %v1816 = vmul.f32 %v1813, 1.442695
      %v1817 = vpow.pop %v1816
      %v1818 = vsel %vm1365, %v1815, 0.0
      %1819 = vadd.xlane.f32.xlu0 %v1818
      %v1820 = vpop.xlane.xlu0 %1819
      %v1821 = vsel %vm1369, %v1817, 0.0
      %1822 = vadd.xlane.f32.xlu0 %v1821
      %v1823 = vpop.xlane.xlu0 %1822
      %v1824 = vrcp.pop %v1820
      %v1825 = vrcp.pop %v1823
      %v1826 = vmul.f32 %v1815, %v1824
      %v1827 = vmul.f32 %v1817, %v1825
      %v1829 = vsel %vm1365, %v1826, 0
      %v1832 = vsel %vm1365, %v1827, 0
      %v1835 = vsel %vm1395, %v1769, 0
      %1837 = vmatpush.msra.mxu0 0.0
      %1838 = vmatpush.msra.mxu0 0.0
      %1839 = vmatpush.msra.mxu0 0.0
      %1840 = vmatpush.msra.mxu0 0.0
      %1841 = vmatpush.msra.mxu0 0.0
      %1842 = vmatpush.msra.mxu0 0.0
      %1843 = vmatpush.msra.mxu0 0.0
      %1844 = vmatpush.msra.mxu0 0.0
      %1845 = vmatpush.msra.mxu0 0.0
      %1846 = vmatpush.msra.mxu0 0.0
      %1847 = vmatpush.msra.mxu0 0.0
      %1848 = vmatpush.msra.mxu0 0.0
      %1849 = vmatpush.msra.mxu0 0.0
      %1850 = vmatpush.msra.mxu0 0.0
      %1851 = vmatpush.msra.mxu0 %v1835
      %1852 = vmatpush.msra.mxu0 %v1766
      %1853 = vmatmul.f32.gmra.mxu0 %v1829
      %v1854 = vpop.f32.mrf.mxu0
      %v1855 = vadd.f32 0.0, %v1854
      %1856 = vmatmul.f32.gmra.mxu0 %v1832
      %v1857 = vpop.f32.mrf.mxu0
      %v1858 = vadd.f32 0.0, %v1857
      %1859 = vdwg.mxu0
      %v1861 = vsel %vm1329, %v1855, 0
      %v1864 = vsel %vm1329, %v1858, 0
      %1866 = vmatpush.msra.mxu0 0.0
      %1867 = vmatpush.msra.mxu0 0.0
      %1868 = vmatpush.msra.mxu0 0.0
      %1869 = vmatpush.msra.mxu0 0.0
      %1870 = vmatpush.msra.mxu0 0.0
      %1871 = vmatpush.msra.mxu0 0.0
      %1872 = vmatpush.msra.mxu0 0.0
      %1873 = vmatpush.msra.mxu0 0.0
      %1874 = vmatpush.msra.mxu0 0.0
      %1875 = vmatpush.msra.mxu0 0.0
      %1876 = vmatpush.msra.mxu0 0.0
      %1877 = vmatpush.msra.mxu0 0.0
      %1878 = vmatpush.msra.mxu0 0.0
      %1879 = vmatpush.msra.mxu0 0.0
      %1880 = vmatpush.msra.mxu0 0.0
      %1881 = vmatpush.msra.mxu0 %v1222
      %1882 = vmatmul.f32.gmra.mxu0 %v1861
      %v1883 = vpop.f32.mrf.mxu0
      %v1884 = vadd.f32 0.0, %v1883
      %1885 = vmatmul.f32.gmra.mxu0 %v1864
      %v1886 = vpop.f32.mrf.mxu0
      %v1887 = vadd.f32 0.0, %v1886
      %1888 = vdwg.mxu0
      %v1889 = vadd.f32 %v1665, %v1884
      %v1890 = vadd.f32 %v1668, %v1887
      %s1891 = scalar_lea.vmem %s959, 96
      %v1892 = vld [vmem:[%s1891] sm:$0xff]
      %v1893 = vld [vmem:[%s1891 + $0x8] sm:$0xff]
      %v1894 = vld [vmem:[%s1891 + $0x10] sm:$0xff]
      %v1895 = vld [vmem:[%s1891 + $0x18] sm:$0xff]
      %s1896 = scalar_lea.vmem %s963, 3
      %v1897 = vld [vmem:[%s1896] sm:$0x1]
      %v1899 = vperm.slane %v1897, 0
      %1901 = vmatpush.msra.mxu0 0.0
      %1902 = vmatpush.msra.mxu0 0.0
      %1903 = vmatpush.msra.mxu0 0.0
      %1904 = vmatpush.msra.mxu0 0.0
      %1905 = vmatpush.msra.mxu0 0.0
      %1906 = vmatpush.msra.mxu0 0.0
      %1907 = vmatpush.msra.mxu0 0.0
      %1908 = vmatpush.msra.mxu0 0.0
      %1909 = vmatpush.msra.mxu0 0.0
      %1910 = vmatpush.msra.mxu0 0.0
      %1911 = vmatpush.msra.mxu0 0.0
      %1912 = vmatpush.msra.mxu0 0.0
      %1913 = vmatpush.msra.mxu0 %v1895
      %1914 = vmatpush.msra.mxu0 %v1894
      %1915 = vmatpush.msra.mxu0 %v1893
      %1916 = vmatpush.msra.mxu0 %v1892
      %1917 = vmatmul.f32.gmra.mxu0 %v1233
      %v1918 = vpop.f32.mrf.mxu0
      %v1919 = vadd.f32 %v1899, %v1918
      %1920 = vmatmul.f32.gmra.mxu0 %v1236
      %v1921 = vpop.f32.mrf.mxu0
      %v1922 = vadd.f32 %v1899, %v1921
      %1923 = vdwg.mxu0
      %v1924 = vmul.f32 %v1919, 0.35355338
      %v1925 = vmul.f32 %v1922, 0.35355338
      %s1926 = scalar_lea.vmem %s959, 224
      %v1927 = vld [vmem:[%s1926] sm:$0xff]
      %v1928 = vld [vmem:[%s1926 + $0x8] sm:$0xff]
      %v1929 = vld [vmem:[%s1926 + $0x10] sm:$0xff]
      %v1930 = vld [vmem:[%s1926 + $0x18] sm:$0xff]
      %s1931 = scalar_lea.vmem %s963, 7
      %v1932 = vld [vmem:[%s1931] sm:$0x1]
      %v1934 = vperm.slane %v1932, 0
      %1936 = vmatpush.msra.mxu0 0.0
      %1937 = vmatpush.msra.mxu0 0.0
      %1938 = vmatpush.msra.mxu0 0.0
      %1939 = vmatpush.msra.mxu0 0.0
      %1940 = vmatpush.msra.mxu0 0.0
      %1941 = vmatpush.msra.mxu0 0.0
      %1942 = vmatpush.msra.mxu0 0.0
      %1943 = vmatpush.msra.mxu0 0.0
      %1944 = vmatpush.msra.mxu0 0.0
      %1945 = vmatpush.msra.mxu0 0.0
      %1946 = vmatpush.msra.mxu0 0.0
      %1947 = vmatpush.msra.mxu0 0.0
      %1948 = vmatpush.msra.mxu0 %v1930
      %1949 = vmatpush.msra.mxu0 %v1929
      %1950 = vmatpush.msra.mxu0 %v1928
      %1951 = vmatpush.msra.mxu0 %v1927
      %1952 = vmatmul.f32.gmra.mxu0 %v1233
      %v1953 = vpop.f32.mrf.mxu0
      %v1954 = vadd.f32 %v1934, %v1953
      %1955 = vmatmul.f32.gmra.mxu0 %v1236
      %v1956 = vpop.f32.mrf.mxu0
      %v1957 = vadd.f32 %v1934, %v1956
      %1958 = vdwg.mxu0
      %s1959 = scalar_lea.vmem %s959, 352
      %v1960 = vld [vmem:[%s1959] sm:$0xff]
      %v1961 = vld [vmem:[%s1959 + $0x8] sm:$0xff]
      %v1962 = vld [vmem:[%s1959 + $0x10] sm:$0xff]
      %v1963 = vld [vmem:[%s1959 + $0x18] sm:$0xff]
      %s1964 = scalar_lea.vmem %s963, 11
      %v1965 = vld [vmem:[%s1964] sm:$0x1]
      %v1967 = vperm.slane %v1965, 0
      %1969 = vmatpush.msra.mxu0 0.0
      %1970 = vmatpush.msra.mxu0 0.0
      %1971 = vmatpush.msra.mxu0 0.0
      %1972 = vmatpush.msra.mxu0 0.0
      %1973 = vmatpush.msra.mxu0 0.0
      %1974 = vmatpush.msra.mxu0 0.0
      %1975 = vmatpush.msra.mxu0 0.0
      %1976 = vmatpush.msra.mxu0 0.0
      %1977 = vmatpush.msra.mxu0 0.0
      %1978 = vmatpush.msra.mxu0 0.0
      %1979 = vmatpush.msra.mxu0 0.0
      %1980 = vmatpush.msra.mxu0 0.0
      %1981 = vmatpush.msra.mxu0 %v1963
      %1982 = vmatpush.msra.mxu0 %v1962
      %1983 = vmatpush.msra.mxu0 %v1961
      %1984 = vmatpush.msra.mxu0 %v1960
      %1985 = vmatmul.f32.gmra.mxu0 %v1233
      %v1986 = vpop.f32.mrf.mxu0
      %v1987 = vadd.f32 %v1967, %v1986
      %1988 = vmatmul.f32.gmra.mxu0 %v1236
      %v1989 = vpop.f32.mrf.mxu0
      %v1990 = vadd.f32 %v1967, %v1989
      %1991 = vdwg.mxu0
      %v1993 = vsel %vm1329, %v1924, 0
      %v1996 = vsel %vm1329, %v1925, 0
      %v1999 = vsel %vm1329, %v1954, 0
      %v2002 = vsel %vm1329, %v1957, 0
      %2004 = vmatpush.xpose.msra.mxu0 0.0
      %2005 = vmatpush.xpose.msra.mxu0 0.0
      %2006 = vmatpush.xpose.msra.mxu0 0.0
      %2007 = vmatpush.xpose.msra.mxu0 0.0
      %2008 = vmatpush.xpose.msra.mxu0 0.0
      %2009 = vmatpush.xpose.msra.mxu0 0.0
      %2010 = vmatpush.xpose.msra.mxu0 0.0
      %2011 = vmatpush.xpose.msra.mxu0 0.0
      %2012 = vmatpush.xpose.msra.mxu0 0.0
      %2013 = vmatpush.xpose.msra.mxu0 0.0
      %2014 = vmatpush.xpose.msra.mxu0 0.0
      %2015 = vmatpush.xpose.msra.mxu0 0.0
      %2016 = vmatpush.xpose.msra.mxu0 0.0
      %2017 = vmatpush.xpose.msra.mxu0 0.0
      %2018 = vmatpush.xpose.msra.mxu0 %v2002
      %2019 = vmatpush.xpose.msra.mxu0 %v1999
      %2020 = vmatmul.f32.gmra.mxu0 %v1993
      %v2021 = vpop.f32.mrf.mxu0
      %v2022 = vadd.f32 %v1014, %v2021
      %2023 = vmatmul.f32.gmra.mxu0 %v1996
      %v2024 = vpop.f32.mrf.mxu0
      %v2025 = vadd.f32 %v1015, %v2024
      %2026 = vdwg.mxu0
      %v2027 = vsel %vm1365, %v2022, -inf
      %2028 = vmax.xlane.f32.xlu0 %v2027
      %v2029 = vpop.xlane.xlu0 %2028
      %v2030 = vsel %vm1369, %v2025, -inf
      %2031 = vmax.xlane.f32.xlu0 %v2030
      %v2032 = vpop.xlane.xlu0 %2031
      %v2033 = vsub.f32 %v2022, %v2029
      %v2034 = vsub.f32 %v2025, %v2032
      %v2035 = vmul.f32 %v2033, 1.442695
      %v2036 = vpow.pop %v2035
      %v2037 = vmul.f32 %v2034, 1.442695
      %v2038 = vpow.pop %v2037
      %v2039 = vsel %vm1365, %v2036, 0.0
      %2040 = vadd.xlane.f32.xlu0 %v2039
      %v2041 = vpop.xlane.xlu0 %2040
      %v2042 = vsel %vm1369, %v2038, 0.0
      %2043 = vadd.xlane.f32.xlu0 %v2042
      %v2044 = vpop.xlane.xlu0 %2043
      %v2045 = vrcp.pop %v2041
      %v2046 = vrcp.pop %v2044
      %v2047 = vmul.f32 %v2036, %v2045
      %v2048 = vmul.f32 %v2038, %v2046
      %v2050 = vsel %vm1365, %v2047, 0
      %v2053 = vsel %vm1365, %v2048, 0
      %v2056 = vsel %vm1395, %v1990, 0
      %2058 = vmatpush.msra.mxu0 0.0
      %2059 = vmatpush.msra.mxu0 0.0
      %2060 = vmatpush.msra.mxu0 0.0
      %2061 = vmatpush.msra.mxu0 0.0
      %2062 = vmatpush.msra.mxu0 0.0
      %2063 = vmatpush.msra.mxu0 0.0
      %2064 = vmatpush.msra.mxu0 0.0
      %2065 = vmatpush.msra.mxu0 0.0
      %2066 = vmatpush.msra.mxu0 0.0
      %2067 = vmatpush.msra.mxu0 0.0
      %2068 = vmatpush.msra.mxu0 0.0
      %2069 = vmatpush.msra.mxu0 0.0
      %2070 = vmatpush.msra.mxu0 0.0
      %2071 = vmatpush.msra.mxu0 0.0
      %2072 = vmatpush.msra.mxu0 %v2056
      %2073 = vmatpush.msra.mxu0 %v1987
      %2074 = vmatmul.f32.gmra.mxu0 %v2050
      %v2075 = vpop.f32.mrf.mxu0
      %v2076 = vadd.f32 0.0, %v2075
      %2077 = vmatmul.f32.gmra.mxu0 %v2053
      %v2078 = vpop.f32.mrf.mxu0
      %v2079 = vadd.f32 0.0, %v2078
      %2080 = vdwg.mxu0
      %v2082 = vsel %vm1329, %v2076, 0
      %v2085 = vsel %vm1329, %v2079, 0
      %2087 = vmatpush.msra.mxu0 0.0
      %2088 = vmatpush.msra.mxu0 0.0
      %2089 = vmatpush.msra.mxu0 0.0
      %2090 = vmatpush.msra.mxu0 0.0
      %2091 = vmatpush.msra.mxu0 0.0
      %2092 = vmatpush.msra.mxu0 0.0
      %2093 = vmatpush.msra.mxu0 0.0
      %2094 = vmatpush.msra.mxu0 0.0
      %2095 = vmatpush.msra.mxu0 0.0
      %2096 = vmatpush.msra.mxu0 0.0
      %2097 = vmatpush.msra.mxu0 0.0
      %2098 = vmatpush.msra.mxu0 0.0
      %2099 = vmatpush.msra.mxu0 0.0
      %2100 = vmatpush.msra.mxu0 0.0
      %2101 = vmatpush.msra.mxu0 0.0
      %2102 = vmatpush.msra.mxu0 %v1223
      %2103 = vmatmul.f32.gmra.mxu0 %v2082
      %v2104 = vpop.f32.mrf.mxu0
      %v2105 = vadd.f32 0.0, %v2104
      %2106 = vmatmul.f32.gmra.mxu0 %v2085
      %v2107 = vpop.f32.mrf.mxu0
      %v2108 = vadd.f32 0.0, %v2107
      %2109 = vdwg.mxu0
      %v2110 = vadd.f32 %v1889, %v2105
      %v2111 = vadd.f32 %v1890, %v2108
      %v2112 = vadd.f32 %v1162, %v2110
      %v2113 = vadd.f32 %v1163, %v2111
      %v2114 = vld [vmem:[%s972] sm:$0x1]
      %v2116 = vperm.slane %v2114, 0
      %v2118 = vadd.f32 %v2112, %v2116
      %v2119 = vadd.f32 %v2113, %v2116
      %v2120 = vld [vmem:[%s976] sm:$0x1]
      %v2121 = vld [vmem:[%s980] sm:$0x1]
      %v2122 = vsel %vm1101, %v2118, 0.0
      %2123 = vadd.xlane.f32.xlu0 %v2122
      %v2124 = vpop.xlane.xlu0 %2123
      %v2125 = vsel %vm1105, %v2119, 0.0
      %2126 = vadd.xlane.f32.xlu0 %v2125
      %v2127 = vpop.xlane.xlu0 %2126
      %v2128 = vmul.f32 %v2124, %v1115
      %v2129 = vmul.f32 %v2127, %v1115
      %v2130 = vsub.f32 %v2118, %v2128
      %v2131 = vsub.f32 %v2119, %v2129
      %v2132 = vmul.f32 %v2130, %v2130
      %v2133 = vmul.f32 %v2131, %v2131
      %v2134 = vsel %vm1101, %v2132, 0.0
      %2135 = vadd.xlane.f32.xlu0 %v2134
      %v2136 = vpop.xlane.xlu0 %2135
      %v2137 = vsel %vm1105, %v2133, 0.0
      %2138 = vadd.xlane.f32.xlu0 %v2137
      %v2139 = vpop.xlane.xlu0 %2138
      %v2140 = vmul.f32 %v2136, %v1115
      %v2141 = vmul.f32 %v2139, %v1115
      %v2142 = vadd.f32 %v2140, 1e-05
      %v2143 = vadd.f32 %v2141, 1e-05
      %v2144 = vrsqrt.pop %v2142
      %v2145 = vmul.f32 %v2144, %v2142
      %v2146 = vmul.f32 %v2145, %v2144
      %v2147 = vmul.f32 0.5, %v2146
      %v2148 = vsub.f32 1.5, %v2147
      %v2149 = vmul.f32 %v2144, %v2148
      %vm2150 = vweird.f32 %v2142
      %vm2151 = vweird.f32 %v2144
      %vm2152 = vmor %vm2150, %vm2151
      %v2153 = vsel %vm2152, %v2144, %v2149
      %v2154 = vrsqrt.pop %v2143
      %v2155 = vmul.f32 %v2154, %v2143
      %v2156 = vmul.f32 %v2155, %v2154
      %v2157 = vmul.f32 0.5, %v2156
      %v2158 = vsub.f32 1.5, %v2157
      %v2159 = vmul.f32 %v2154, %v2158
      %vm2160 = vweird.f32 %v2143
      %vm2161 = vweird.f32 %v2154
      %vm2162 = vmor %vm2160, %vm2161
      %v2163 = vsel %vm2162, %v2154, %v2159
      %v2164 = vmul.f32 %v2130, %v2153
      %v2165 = vmul.f32 %v2131, %v2163
      %v2167 = vperm.slane %v2120, 0
      %v2169 = vmul.f32 %v2164, %v2167
      %v2170 = vmul.f32 %v2165, %v2167
      %v2172 = vperm.slane %v2121, 0
      %v2174 = vadd.f32 %v2169, %v2172
      %v2175 = vadd.f32 %v2170, %v2172
      %v2176 = vld [vmem:[%s985] sm:$0xff]
      %v2177 = vld [vmem:[%s985 + $0x8] sm:$0xff]
      %v2178 = vld [vmem:[%s985 + $0x10] sm:$0xff]
      %v2179 = vld [vmem:[%s985 + $0x18] sm:$0xff]
      %v2180 = vld [vmem:[%s989] sm:$0x1]
      %v2182 = vperm.slane %v2180, 0
      %v2185 = vsel %vm1101, %v2174, 0
      %v2188 = vsel %vm1101, %v2175, 0
      %2190 = vmatpush.msra.mxu0 0.0
      %2191 = vmatpush.msra.mxu0 0.0
      %2192 = vmatpush.msra.mxu0 0.0
      %2193 = vmatpush.msra.mxu0 0.0
      %2194 = vmatpush.msra.mxu0 0.0
      %2195 = vmatpush.msra.mxu0 0.0
      %2196 = vmatpush.msra.mxu0 0.0
      %2197 = vmatpush.msra.mxu0 0.0
      %2198 = vmatpush.msra.mxu0 0.0
      %2199 = vmatpush.msra.mxu0 0.0
      %2200 = vmatpush.msra.mxu0 0.0
      %2201 = vmatpush.msra.mxu0 0.0
      %2202 = vmatpush.msra.mxu0 %v2179
      %2203 = vmatpush.msra.mxu0 %v2178
      %2204 = vmatpush.msra.mxu0 %v2177
      %2205 = vmatpush.msra.mxu0 %v2176
      %2206 = vmatmul.f32.gmra.mxu0 %v2185
      %v2207 = vpop.f32.mrf.mxu0
      %v2208 = vadd.f32 %v2182, %v2207
      %2209 = vmatmul.f32.gmra.mxu0 %v2188
      %v2210 = vpop.f32.mrf.mxu0
      %v2211 = vadd.f32 %v2182, %v2210
      %2212 = vdwg.mxu0
      %v2213 = vmul.f32 %v2208, 1.702
      %v2214 = vmul.f32 %v2211, 1.702
      %v2215 = vxor.u32 %v2213, 2147483648
      %v2216 = vxor.u32 %v2214, 2147483648
      %v2217 = vmul.f32 %v2215, 1.442695
      %v2218 = vpow.pop %v2217
      %v2219 = vmul.f32 %v2216, 1.442695
      %v2220 = vpow.pop %v2219
      %v2221 = vadd.f32 %v2218, 1.0
      %v2222 = vadd.f32 %v2220, 1.0
      %v2223 = vrcp.pop %v2221
      %v2224 = vmul.f32 %v2221, %v2223
      %v2225 = vsub.f32 1.0, %v2224
      %v2226 = vmul.f32 %v2223, %v2225
      %v2227 = vadd.f32 %v2223, %v2226
      %vm2228 = vweird.f32 %v2221
      %vm2229 = vweird.f32 %v2223
      %vm2230 = vmor %vm2228, %vm2229
      %v2231 = vsel %vm2230, %v2223, %v2227
      %v2232 = vand.u32 2147483647, %v2221
      %vm2233 = vcmp.eq.f32.partialorder %v2232, 8.507059e+37
      %v2234 = vand.u32 %v2221, 2147483648
      %v2235 = vor.u32 1.1754944e-38, %v2234
      %v2236 = vsel %vm2233, %v2235, %v2231
      %v2237 = vmul.f32 1.0, %v2236
      %v2238 = vrcp.pop %v2222
      %v2239 = vmul.f32 %v2222, %v2238
      %v2240 = vsub.f32 1.0, %v2239
      %v2241 = vmul.f32 %v2238, %v2240
      %v2242 = vadd.f32 %v2238, %v2241
      %vm2243 = vweird.f32 %v2222
      %vm2244 = vweird.f32 %v2238
      %vm2245 = vmor %vm2243, %vm2244
      %v2246 = vsel %vm2245, %v2238, %v2242
      %v2247 = vand.u32 2147483647, %v2222
      %vm2248 = vcmp.eq.f32.partialorder %v2247, 8.507059e+37
      %v2249 = vand.u32 %v2222, 2147483648
      %v2250 = vor.u32 1.1754944e-38, %v2249
      %v2251 = vsel %vm2248, %v2250, %v2246
      %v2252 = vmul.f32 1.0, %v2251
      %v2253 = vmul.f32 %v2208, %v2237
      %v2254 = vmul.f32 %v2211, %v2252
      %v2255 = vld [vmem:[%s994] sm:$0xff]
      %v2256 = vld [vmem:[%s994 + $0x8] sm:$0xff]
      %v2257 = vld [vmem:[%s994 + $0x10] sm:$0xff]
      %v2258 = vld [vmem:[%s994 + $0x18] sm:$0xff]
      %v2259 = vld [vmem:[%s994 + $0x20] sm:$0xff]
      %v2260 = vld [vmem:[%s994 + $0x28] sm:$0xff]
      %v2261 = vld [vmem:[%s994 + $0x30] sm:$0xff]
      %v2262 = vld [vmem:[%s994 + $0x38] sm:$0xff]
      %v2263 = vld [vmem:[%s998] sm:$0x1]
      %v2265 = vperm.slane %v2263, 0
      %v2268 = vsel %vm1046, %v2253, 0
      %v2271 = vsel %vm1046, %v2254, 0
      %2273 = vmatpush.msra.mxu0 0.0
      %2274 = vmatpush.msra.mxu0 0.0
      %2275 = vmatpush.msra.mxu0 0.0
      %2276 = vmatpush.msra.mxu0 0.0
      %2277 = vmatpush.msra.mxu0 0.0
      %2278 = vmatpush.msra.mxu0 0.0
      %2279 = vmatpush.msra.mxu0 0.0
      %2280 = vmatpush.msra.mxu0 0.0
      %2281 = vmatpush.msra.mxu0 %v2262
      %2282 = vmatpush.msra.mxu0 %v2261
      %2283 = vmatpush.msra.mxu0 %v2260
      %2284 = vmatpush.msra.mxu0 %v2259
      %2285 = vmatpush.msra.mxu0 %v2258
      %2286 = vmatpush.msra.mxu0 %v2257
      %2287 = vmatpush.msra.mxu0 %v2256
      %2288 = vmatpush.msra.mxu0 %v2255
      %2289 = vmatmul.f32.gmra.mxu0 %v2268
      %v2290 = vpop.f32.mrf.mxu0
      %v2291 = vadd.f32 %v2265, %v2290
      %2292 = vmatmul.f32.gmra.mxu0 %v2271
      %v2293 = vpop.f32.mrf.mxu0
      %v2294 = vadd.f32 %v2265, %v2293
      %2295 = vdwg.mxu0
      %v2296 = vadd.f32 %v2118, %v2291
      %v2297 = vadd.f32 %v2119, %v2294
      %s2298 = scalar_lea.vmem %s950, 1
      %v2299 = vld [vmem:[%s2298] sm:$0x1]
      %s2300 = scalar_lea.vmem %s954, 1
      %v2301 = vld [vmem:[%s2300] sm:$0x1]
      %v2302 = vsel %vm1101, %v2296, 0.0
      %2303 = vadd.xlane.f32.xlu0 %v2302
      %v2304 = vpop.xlane.xlu0 %2303
      %v2305 = vsel %vm1105, %v2297, 0.0
      %2306 = vadd.xlane.f32.xlu0 %v2305
      %v2307 = vpop.xlane.xlu0 %2306
      %v2308 = vmul.f32 %v2304, %v1115
      %v2309 = vmul.f32 %v2307, %v1115
      %v2310 = vsub.f32 %v2296, %v2308
      %v2311 = vsub.f32 %v2297, %v2309
      %v2312 = vmul.f32 %v2310, %v2310
      %v2313 = vmul.f32 %v2311, %v2311
      %v2314 = vsel %vm1101, %v2312, 0.0
      %2315 = vadd.xlane.f32.xlu0 %v2314
      %v2316 = vpop.xlane.xlu0 %2315
      %v2317 = vsel %vm1105, %v2313, 0.0
      %2318 = vadd.xlane.f32.xlu0 %v2317
      %v2319 = vpop.xlane.xlu0 %2318
      %v2320 = vmul.f32 %v2316, %v1115
      %v2321 = vmul.f32 %v2319, %v1115
      %v2322 = vadd.f32 %v2320, 1e-05
      %v2323 = vadd.f32 %v2321, 1e-05
      %v2324 = vrsqrt.pop %v2322
      %v2325 = vmul.f32 %v2324, %v2322
      %v2326 = vmul.f32 %v2325, %v2324
      %v2327 = vmul.f32 0.5, %v2326
      %v2328 = vsub.f32 1.5, %v2327
      %v2329 = vmul.f32 %v2324, %v2328
      %vm2330 = vweird.f32 %v2322
      %vm2331 = vweird.f32 %v2324
      %vm2332 = vmor %vm2330, %vm2331
      %v2333 = vsel %vm2332, %v2324, %v2329
      %v2334 = vrsqrt.pop %v2323
      %v2335 = vmul.f32 %v2334, %v2323
      %v2336 = vmul.f32 %v2335, %v2334
      %v2337 = vmul.f32 0.5, %v2336
      %v2338 = vsub.f32 1.5, %v2337
      %v2339 = vmul.f32 %v2334, %v2338
      %vm2340 = vweird.f32 %v2323
      %vm2341 = vweird.f32 %v2334
      %vm2342 = vmor %vm2340, %vm2341
      %v2343 = vsel %vm2342, %v2334, %v2339
      %v2344 = vmul.f32 %v2310, %v2333
      %v2345 = vmul.f32 %v2311, %v2343
      %v2347 = vperm.slane %v2299, 0
      %v2349 = vmul.f32 %v2344, %v2347
      %v2350 = vmul.f32 %v2345, %v2347
      %v2352 = vperm.slane %v2301, 0
      %v2354 = vadd.f32 %v2349, %v2352
      %v2355 = vadd.f32 %v2350, %v2352
      %s2356 = scalar_lea.vmem %s968, 32
      %v2357 = vld [vmem:[%s2356] sm:$0xff]
      %v2358 = vld [vmem:[%s2356 + $0x8] sm:$0xff]
      %v2359 = vld [vmem:[%s2356 + $0x10] sm:$0xff]
      %v2360 = vld [vmem:[%s2356 + $0x18] sm:$0xff]
      %s2361 = scalar_lea.vmem %s959, 384
      %v2362 = vld [vmem:[%s2361] sm:$0xff]
      %v2363 = vld [vmem:[%s2361 + $0x8] sm:$0xff]
      %v2364 = vld [vmem:[%s2361 + $0x10] sm:$0xff]
      %v2365 = vld [vmem:[%s2361 + $0x18] sm:$0xff]
      %s2366 = scalar_lea.vmem %s963, 12
      %v2367 = vld [vmem:[%s2366] sm:$0x1]
      %v2369 = vperm.slane %v2367, 0
      %v2372 = vsel %vm1101, %v2354, 0
      %v2375 = vsel %vm1101, %v2355, 0
      %2377 = vmatpush.msra.mxu0 0.0
      %2378 = vmatpush.msra.mxu0 0.0
      %2379 = vmatpush.msra.mxu0 0.0
      %2380 = vmatpush.msra.mxu0 0.0
      %2381 = vmatpush.msra.mxu0 0.0
      %2382 = vmatpush.msra.mxu0 0.0
      %2383 = vmatpush.msra.mxu0 0.0
      %2384 = vmatpush.msra.mxu0 0.0
      %2385 = vmatpush.msra.mxu0 0.0
      %2386 = vmatpush.msra.mxu0 0.0
      %2387 = vmatpush.msra.mxu0 0.0
      %2388 = vmatpush.msra.mxu0 0.0
      %2389 = vmatpush.msra.mxu0 %v2365
      %2390 = vmatpush.msra.mxu0 %v2364
      %2391 = vmatpush.msra.mxu0 %v2363
      %2392 = vmatpush.msra.mxu0 %v2362
      %2393 = vmatmul.f32.gmra.mxu0 %v2372
      %v2394 = vpop.f32.mrf.mxu0
      %v2395 = vadd.f32 %v2369, %v2394
      %2396 = vmatmul.f32.gmra.mxu0 %v2375
      %v2397 = vpop.f32.mrf.mxu0
      %v2398 = vadd.f32 %v2369, %v2397
      %2399 = vdwg.mxu0
      %v2400 = vmul.f32 %v2395, 0.35355338
      %v2401 = vmul.f32 %v2398, 0.35355338
      %s2402 = scalar_lea.vmem %s959, 512
      %v2403 = vld [vmem:[%s2402] sm:$0xff]
      %v2404 = vld [vmem:[%s2402 + $0x8] sm:$0xff]
      %v2405 = vld [vmem:[%s2402 + $0x10] sm:$0xff]
      %v2406 = vld [vmem:[%s2402 + $0x18] sm:$0xff]
      %s2407 = scalar_lea.vmem %s963, 16
      %v2408 = vld [vmem:[%s2407] sm:$0x1]
      %v2410 = vperm.slane %v2408, 0
      %2412 = vmatpush.msra.mxu0 0.0
      %2413 = vmatpush.msra.mxu0 0.0
      %2414 = vmatpush.msra.mxu0 0.0
      %2415 = vmatpush.msra.mxu0 0.0
      %2416 = vmatpush.msra.mxu0 0.0
      %2417 = vmatpush.msra.mxu0 0.0
      %2418 = vmatpush.msra.mxu0 0.0
      %2419 = vmatpush.msra.mxu0 0.0
      %2420 = vmatpush.msra.mxu0 0.0
      %2421 = vmatpush.msra.mxu0 0.0
      %2422 = vmatpush.msra.mxu0 0.0
      %2423 = vmatpush.msra.mxu0 0.0
      %2424 = vmatpush.msra.mxu0 %v2406
      %2425 = vmatpush.msra.mxu0 %v2405
      %2426 = vmatpush.msra.mxu0 %v2404
      %2427 = vmatpush.msra.mxu0 %v2403
      %2428 = vmatmul.f32.gmra.mxu0 %v2372
      %v2429 = vpop.f32.mrf.mxu0
      %v2430 = vadd.f32 %v2410, %v2429
      %2431 = vmatmul.f32.gmra.mxu0 %v2375
      %v2432 = vpop.f32.mrf.mxu0
      %v2433 = vadd.f32 %v2410, %v2432
      %2434 = vdwg.mxu0
      %s2435 = scalar_lea.vmem %s959, 640
      %v2436 = vld [vmem:[%s2435] sm:$0xff]
      %v2437 = vld [vmem:[%s2435 + $0x8] sm:$0xff]
      %v2438 = vld [vmem:[%s2435 + $0x10] sm:$0xff]
      %v2439 = vld [vmem:[%s2435 + $0x18] sm:$0xff]
      %s2440 = scalar_lea.vmem %s963, 20
      %v2441 = vld [vmem:[%s2440] sm:$0x1]
      %v2443 = vperm.slane %v2441, 0
      %2445 = vmatpush.msra.mxu0 0.0
      %2446 = vmatpush.msra.mxu0 0.0
      %2447 = vmatpush.msra.mxu0 0.0
      %2448 = vmatpush.msra.mxu0 0.0
      %2449 = vmatpush.msra.mxu0 0.0
      %2450 = vmatpush.msra.mxu0 0.0
      %2451 = vmatpush.msra.mxu0 0.0
      %2452 = vmatpush.msra.mxu0 0.0
      %2453 = vmatpush.msra.mxu0 0.0
      %2454 = vmatpush.msra.mxu0 0.0
      %2455 = vmatpush.msra.mxu0 0.0
      %2456 = vmatpush.msra.mxu0 0.0
      %2457 = vmatpush.msra.mxu0 %v2439
      %2458 = vmatpush.msra.mxu0 %v2438
      %2459 = vmatpush.msra.mxu0 %v2437
      %2460 = vmatpush.msra.mxu0 %v2436
      %2461 = vmatmul.f32.gmra.mxu0 %v2372
      %v2462 = vpop.f32.mrf.mxu0
      %v2463 = vadd.f32 %v2443, %v2462
      %2464 = vmatmul.f32.gmra.mxu0 %v2375
      %v2465 = vpop.f32.mrf.mxu0
      %v2466 = vadd.f32 %v2443, %v2465
      %2467 = vdwg.mxu0
      %v2469 = vsel %vm1329, %v2400, 0
      %v2472 = vsel %vm1329, %v2401, 0
      %v2475 = vsel %vm1329, %v2430, 0
      %v2478 = vsel %vm1329, %v2433, 0
      %2480 = vmatpush.xpose.msra.mxu0 0.0
      %2481 = vmatpush.xpose.msra.mxu0 0.0
      %2482 = vmatpush.xpose.msra.mxu0 0.0
      %2483 = vmatpush.xpose.msra.mxu0 0.0
      %2484 = vmatpush.xpose.msra.mxu0 0.0
      %2485 = vmatpush.xpose.msra.mxu0 0.0
      %2486 = vmatpush.xpose.msra.mxu0 0.0
      %2487 = vmatpush.xpose.msra.mxu0 0.0
      %2488 = vmatpush.xpose.msra.mxu0 0.0
      %2489 = vmatpush.xpose.msra.mxu0 0.0
      %2490 = vmatpush.xpose.msra.mxu0 0.0
      %2491 = vmatpush.xpose.msra.mxu0 0.0
      %2492 = vmatpush.xpose.msra.mxu0 0.0
      %2493 = vmatpush.xpose.msra.mxu0 0.0
      %2494 = vmatpush.xpose.msra.mxu0 %v2478
      %2495 = vmatpush.xpose.msra.mxu0 %v2475
      %2496 = vmatmul.f32.gmra.mxu0 %v2469
      %v2497 = vpop.f32.mrf.mxu0
      %v2498 = vadd.f32 %v1014, %v2497
      %2499 = vmatmul.f32.gmra.mxu0 %v2472
      %v2500 = vpop.f32.mrf.mxu0
      %v2501 = vadd.f32 %v1015, %v2500
      %2502 = vdwg.mxu0
      %v2503 = vsel %vm1365, %v2498, -inf
      %2504 = vmax.xlane.f32.xlu0 %v2503
      %v2505 = vpop.xlane.xlu0 %2504
      %v2506 = vsel %vm1369, %v2501, -inf
      %2507 = vmax.xlane.f32.xlu0 %v2506
      %v2508 = vpop.xlane.xlu0 %2507
      %v2509 = vsub.f32 %v2498, %v2505
      %v2510 = vsub.f32 %v2501, %v2508
      %v2511 = vmul.f32 %v2509, 1.442695
      %v2512 = vpow.pop %v2511
      %v2513 = vmul.f32 %v2510, 1.442695
      %v2514 = vpow.pop %v2513
      %v2515 = vsel %vm1365, %v2512, 0.0
      %2516 = vadd.xlane.f32.xlu0 %v2515
      %v2517 = vpop.xlane.xlu0 %2516
      %v2518 = vsel %vm1369, %v2514, 0.0
      %2519 = vadd.xlane.f32.xlu0 %v2518
      %v2520 = vpop.xlane.xlu0 %2519
      %v2521 = vrcp.pop %v2517
      %v2522 = vrcp.pop %v2520
      %v2523 = vmul.f32 %v2512, %v2521
      %v2524 = vmul.f32 %v2514, %v2522
      %v2526 = vsel %vm1365, %v2523, 0
      %v2529 = vsel %vm1365, %v2524, 0
      %v2532 = vsel %vm1395, %v2466, 0
      %2534 = vmatpush.msra.mxu0 0.0
      %2535 = vmatpush.msra.mxu0 0.0
      %2536 = vmatpush.msra.mxu0 0.0
      %2537 = vmatpush.msra.mxu0 0.0
      %2538 = vmatpush.msra.mxu0 0.0
      %2539 = vmatpush.msra.mxu0 0.0
      %2540 = vmatpush.msra.mxu0 0.0
      %2541 = vmatpush.msra.mxu0 0.0
      %2542 = vmatpush.msra.mxu0 0.0
      %2543 = vmatpush.msra.mxu0 0.0
      %2544 = vmatpush.msra.mxu0 0.0
      %2545 = vmatpush.msra.mxu0 0.0
      %2546 = vmatpush.msra.mxu0 0.0
      %2547 = vmatpush.msra.mxu0 0.0
      %2548 = vmatpush.msra.mxu0 %v2532
      %2549 = vmatpush.msra.mxu0 %v2463
      %2550 = vmatmul.f32.gmra.mxu0 %v2526
      %v2551 = vpop.f32.mrf.mxu0
      %v2552 = vadd.f32 0.0, %v2551
      %2553 = vmatmul.f32.gmra.mxu0 %v2529
      %v2554 = vpop.f32.mrf.mxu0
      %v2555 = vadd.f32 0.0, %v2554
      %2556 = vdwg.mxu0
      %s2557 = scalar_lea.vmem %s959, 416
      %v2558 = vld [vmem:[%s2557] sm:$0xff]
      %v2559 = vld [vmem:[%s2557 + $0x8] sm:$0xff]
      %v2560 = vld [vmem:[%s2557 + $0x10] sm:$0xff]
      %v2561 = vld [vmem:[%s2557 + $0x18] sm:$0xff]
      %s2562 = scalar_lea.vmem %s963, 13
      %v2563 = vld [vmem:[%s2562] sm:$0x1]
      %v2565 = vperm.slane %v2563, 0
      %2567 = vmatpush.msra.mxu0 0.0
      %2568 = vmatpush.msra.mxu0 0.0
      %2569 = vmatpush.msra.mxu0 0.0
      %2570 = vmatpush.msra.mxu0 0.0
      %2571 = vmatpush.msra.mxu0 0.0
      %2572 = vmatpush.msra.mxu0 0.0
      %2573 = vmatpush.msra.mxu0 0.0
      %2574 = vmatpush.msra.mxu0 0.0
      %2575 = vmatpush.msra.mxu0 0.0
      %2576 = vmatpush.msra.mxu0 0.0
      %2577 = vmatpush.msra.mxu0 0.0
      %2578 = vmatpush.msra.mxu0 0.0
      %2579 = vmatpush.msra.mxu0 %v2561
      %2580 = vmatpush.msra.mxu0 %v2560
      %2581 = vmatpush.msra.mxu0 %v2559
      %2582 = vmatpush.msra.mxu0 %v2558
      %2583 = vmatmul.f32.gmra.mxu0 %v2372
      %v2584 = vpop.f32.mrf.mxu0
      %v2585 = vadd.f32 %v2565, %v2584
      %2586 = vmatmul.f32.gmra.mxu0 %v2375
      %v2587 = vpop.f32.mrf.mxu0
      %v2588 = vadd.f32 %v2565, %v2587
      %2589 = vdwg.mxu0
      %v2590 = vmul.f32 %v2585, 0.35355338
      %v2591 = vmul.f32 %v2588, 0.35355338
      %s2592 = scalar_lea.vmem %s959, 544
      %v2593 = vld [vmem:[%s2592] sm:$0xff]
      %v2594 = vld [vmem:[%s2592 + $0x8] sm:$0xff]
      %v2595 = vld [vmem:[%s2592 + $0x10] sm:$0xff]
      %v2596 = vld [vmem:[%s2592 + $0x18] sm:$0xff]
      %s2597 = scalar_lea.vmem %s963, 17
      %v2598 = vld [vmem:[%s2597] sm:$0x1]
      %v2600 = vperm.slane %v2598, 0
      %2602 = vmatpush.msra.mxu0 0.0
      %2603 = vmatpush.msra.mxu0 0.0
      %2604 = vmatpush.msra.mxu0 0.0
      %2605 = vmatpush.msra.mxu0 0.0
      %2606 = vmatpush.msra.mxu0 0.0
      %2607 = vmatpush.msra.mxu0 0.0
      %2608 = vmatpush.msra.mxu0 0.0
      %2609 = vmatpush.msra.mxu0 0.0
      %2610 = vmatpush.msra.mxu0 0.0
      %2611 = vmatpush.msra.mxu0 0.0
      %2612 = vmatpush.msra.mxu0 0.0
      %2613 = vmatpush.msra.mxu0 0.0
      %2614 = vmatpush.msra.mxu0 %v2596
      %2615 = vmatpush.msra.mxu0 %v2595
      %2616 = vmatpush.msra.mxu0 %v2594
      %2617 = vmatpush.msra.mxu0 %v2593
      %2618 = vmatmul.f32.gmra.mxu0 %v2372
      %v2619 = vpop.f32.mrf.mxu0
      %v2620 = vadd.f32 %v2600, %v2619
      %2621 = vmatmul.f32.gmra.mxu0 %v2375
      %v2622 = vpop.f32.mrf.mxu0
      %v2623 = vadd.f32 %v2600, %v2622
      %2624 = vdwg.mxu0
      %s2625 = scalar_lea.vmem %s959, 672
      %v2626 = vld [vmem:[%s2625] sm:$0xff]
      %v2627 = vld [vmem:[%s2625 + $0x8] sm:$0xff]
      %v2628 = vld [vmem:[%s2625 + $0x10] sm:$0xff]
      %v2629 = vld [vmem:[%s2625 + $0x18] sm:$0xff]
      %s2630 = scalar_lea.vmem %s963, 21
      %v2631 = vld [vmem:[%s2630] sm:$0x1]
      %v2633 = vperm.slane %v2631, 0
      %2635 = vmatpush.msra.mxu0 0.0
      %2636 = vmatpush.msra.mxu0 0.0
      %2637 = vmatpush.msra.mxu0 0.0
      %2638 = vmatpush.msra.mxu0 0.0
      %2639 = vmatpush.msra.mxu0 0.0
      %2640 = vmatpush.msra.mxu0 0.0
      %2641 = vmatpush.msra.mxu0 0.0
      %2642 = vmatpush.msra.mxu0 0.0
      %2643 = vmatpush.msra.mxu0 0.0
      %2644 = vmatpush.msra.mxu0 0.0
      %2645 = vmatpush.msra.mxu0 0.0
      %2646 = vmatpush.msra.mxu0 0.0
      %2647 = vmatpush.msra.mxu0 %v2629
      %2648 = vmatpush.msra.mxu0 %v2628
      %2649 = vmatpush.msra.mxu0 %v2627
      %2650 = vmatpush.msra.mxu0 %v2626
      %2651 = vmatmul.f32.gmra.mxu0 %v2372
      %v2652 = vpop.f32.mrf.mxu0
      %v2653 = vadd.f32 %v2633, %v2652
      %2654 = vmatmul.f32.gmra.mxu0 %v2375
      %v2655 = vpop.f32.mrf.mxu0
      %v2656 = vadd.f32 %v2633, %v2655
      %2657 = vdwg.mxu0
      %v2659 = vsel %vm1329, %v2590, 0
      %v2662 = vsel %vm1329, %v2591, 0
      %v2665 = vsel %vm1329, %v2620, 0
      %v2668 = vsel %vm1329, %v2623, 0
      %2670 = vmatpush.xpose.msra.mxu0 0.0
      %2671 = vmatpush.xpose.msra.mxu0 0.0
      %2672 = vmatpush.xpose.msra.mxu0 0.0
      %2673 = vmatpush.xpose.msra.mxu0 0.0
      %2674 = vmatpush.xpose.msra.mxu0 0.0
      %2675 = vmatpush.xpose.msra.mxu0 0.0
      %2676 = vmatpush.xpose.msra.mxu0 0.0
      %2677 = vmatpush.xpose.msra.mxu0 0.0
      %2678 = vmatpush.xpose.msra.mxu0 0.0
      %2679 = vmatpush.xpose.msra.mxu0 0.0
      %2680 = vmatpush.xpose.msra.mxu0 0.0
      %2681 = vmatpush.xpose.msra.mxu0 0.0
      %2682 = vmatpush.xpose.msra.mxu0 0.0
      %2683 = vmatpush.xpose.msra.mxu0 0.0
      %2684 = vmatpush.xpose.msra.mxu0 %v2668
      %2685 = vmatpush.xpose.msra.mxu0 %v2665
      %2686 = vmatmul.f32.gmra.mxu0 %v2659
      %v2687 = vpop.f32.mrf.mxu0
      %v2688 = vadd.f32 %v1014, %v2687
      %2689 = vmatmul.f32.gmra.mxu0 %v2662
      %v2690 = vpop.f32.mrf.mxu0
      %v2691 = vadd.f32 %v1015, %v2690
      %2692 = vdwg.mxu0
      %v2693 = vsel %vm1365, %v2688, -inf
      %2694 = vmax.xlane.f32.xlu0 %v2693
      %v2695 = vpop.xlane.xlu0 %2694
      %v2696 = vsel %vm1369, %v2691, -inf
      %2697 = vmax.xlane.f32.xlu0 %v2696
      %v2698 = vpop.xlane.xlu0 %2697
      %v2699 = vsub.f32 %v2688, %v2695
      %v2700 = vsub.f32 %v2691, %v2698
      %v2701 = vmul.f32 %v2699, 1.442695
      %v2702 = vpow.pop %v2701
      %v2703 = vmul.f32 %v2700, 1.442695
      %v2704 = vpow.pop %v2703
      %v2705 = vsel %vm1365, %v2702, 0.0
      %2706 = vadd.xlane.f32.xlu0 %v2705
      %v2707 = vpop.xlane.xlu0 %2706
      %v2708 = vsel %vm1369, %v2704, 0.0
      %2709 = vadd.xlane.f32.xlu0 %v2708
      %v2710 = vpop.xlane.xlu0 %2709
      %v2711 = vrcp.pop %v2707
      %v2712 = vrcp.pop %v2710
      %v2713 = vmul.f32 %v2702, %v2711
      %v2714 = vmul.f32 %v2704, %v2712
      %v2716 = vsel %vm1365, %v2713, 0
      %v2719 = vsel %vm1365, %v2714, 0
      %v2722 = vsel %vm1395, %v2656, 0
      %2724 = vmatpush.msra.mxu0 0.0
      %2725 = vmatpush.msra.mxu0 0.0
      %2726 = vmatpush.msra.mxu0 0.0
      %2727 = vmatpush.msra.mxu0 0.0
      %2728 = vmatpush.msra.mxu0 0.0
      %2729 = vmatpush.msra.mxu0 0.0
      %2730 = vmatpush.msra.mxu0 0.0
      %2731 = vmatpush.msra.mxu0 0.0
      %2732 = vmatpush.msra.mxu0 0.0
      %2733 = vmatpush.msra.mxu0 0.0
      %2734 = vmatpush.msra.mxu0 0.0
      %2735 = vmatpush.msra.mxu0 0.0
      %2736 = vmatpush.msra.mxu0 0.0
      %2737 = vmatpush.msra.mxu0 0.0
      %2738 = vmatpush.msra.mxu0 %v2722
      %2739 = vmatpush.msra.mxu0 %v2653
      %2740 = vmatmul.f32.gmra.mxu0 %v2716
      %v2741 = vpop.f32.mrf.mxu0
      %v2742 = vadd.f32 0.0, %v2741
      %2743 = vmatmul.f32.gmra.mxu0 %v2719
      %v2744 = vpop.f32.mrf.mxu0
      %v2745 = vadd.f32 0.0, %v2744
      %2746 = vdwg.mxu0
      %v2748 = vsel %vm1329, %v2742, 0
      %v2751 = vsel %vm1329, %v2745, 0
      %2753 = vmatpush.msra.mxu0 0.0
      %2754 = vmatpush.msra.mxu0 0.0
      %2755 = vmatpush.msra.mxu0 0.0
      %2756 = vmatpush.msra.mxu0 0.0
      %2757 = vmatpush.msra.mxu0 0.0
      %2758 = vmatpush.msra.mxu0 0.0
      %2759 = vmatpush.msra.mxu0 0.0
      %2760 = vmatpush.msra.mxu0 0.0
      %2761 = vmatpush.msra.mxu0 0.0
      %2762 = vmatpush.msra.mxu0 0.0
      %2763 = vmatpush.msra.mxu0 0.0
      %2764 = vmatpush.msra.mxu0 0.0
      %2765 = vmatpush.msra.mxu0 0.0
      %2766 = vmatpush.msra.mxu0 0.0
      %2767 = vmatpush.msra.mxu0 0.0
      %2768 = vmatpush.msra.mxu0 %v2358
      %2769 = vmatmul.f32.gmra.mxu0 %v2748
      %v2770 = vpop.f32.mrf.mxu0
      %v2771 = vadd.f32 0.0, %v2770
      %2772 = vmatmul.f32.gmra.mxu0 %v2751
      %v2773 = vpop.f32.mrf.mxu0
      %v2774 = vadd.f32 0.0, %v2773
      %2775 = vdwg.mxu0
      %v2777 = vsel %vm1329, %v2552, 0
      %v2780 = vsel %vm1329, %v2555, 0
      %2782 = vmatpush.msra.mxu0 0.0
      %2783 = vmatpush.msra.mxu0 0.0
      %2784 = vmatpush.msra.mxu0 0.0
      %2785 = vmatpush.msra.mxu0 0.0
      %2786 = vmatpush.msra.mxu0 0.0
      %2787 = vmatpush.msra.mxu0 0.0
      %2788 = vmatpush.msra.mxu0 0.0
      %2789 = vmatpush.msra.mxu0 0.0
      %2790 = vmatpush.msra.mxu0 0.0
      %2791 = vmatpush.msra.mxu0 0.0
      %2792 = vmatpush.msra.mxu0 0.0
      %2793 = vmatpush.msra.mxu0 0.0
      %2794 = vmatpush.msra.mxu0 0.0
      %2795 = vmatpush.msra.mxu0 0.0
      %2796 = vmatpush.msra.mxu0 0.0
      %2797 = vmatpush.msra.mxu0 %v2357
      %2798 = vmatmul.f32.gmra.mxu0 %v2777
      %v2799 = vpop.f32.mrf.mxu0
      %v2800 = vadd.f32 %v2771, %v2799
      %2801 = vmatmul.f32.gmra.mxu0 %v2780
      %v2802 = vpop.f32.mrf.mxu0
      %v2803 = vadd.f32 %v2774, %v2802
      %2804 = vdwg.mxu0
      %s2805 = scalar_lea.vmem %s959, 448
      %v2806 = vld [vmem:[%s2805] sm:$0xff]
      %v2807 = vld [vmem:[%s2805 + $0x8] sm:$0xff]
      %v2808 = vld [vmem:[%s2805 + $0x10] sm:$0xff]
      %v2809 = vld [vmem:[%s2805 + $0x18] sm:$0xff]
      %s2810 = scalar_lea.vmem %s963, 14
      %v2811 = vld [vmem:[%s2810] sm:$0x1]
      %v2813 = vperm.slane %v2811, 0
      %2815 = vmatpush.msra.mxu0 0.0
      %2816 = vmatpush.msra.mxu0 0.0
      %2817 = vmatpush.msra.mxu0 0.0
      %2818 = vmatpush.msra.mxu0 0.0
      %2819 = vmatpush.msra.mxu0 0.0
      %2820 = vmatpush.msra.mxu0 0.0
      %2821 = vmatpush.msra.mxu0 0.0
      %2822 = vmatpush.msra.mxu0 0.0
      %2823 = vmatpush.msra.mxu0 0.0
      %2824 = vmatpush.msra.mxu0 0.0
      %2825 = vmatpush.msra.mxu0 0.0
      %2826 = vmatpush.msra.mxu0 0.0
      %2827 = vmatpush.msra.mxu0 %v2809
      %2828 = vmatpush.msra.mxu0 %v2808
      %2829 = vmatpush.msra.mxu0 %v2807
      %2830 = vmatpush.msra.mxu0 %v2806
      %2831 = vmatmul.f32.gmra.mxu0 %v2372
      %v2832 = vpop.f32.mrf.mxu0
      %v2833 = vadd.f32 %v2813, %v2832
      %2834 = vmatmul.f32.gmra.mxu0 %v2375
      %v2835 = vpop.f32.mrf.mxu0
      %v2836 = vadd.f32 %v2813, %v2835
      %2837 = vdwg.mxu0
      %v2838 = vmul.f32 %v2833, 0.35355338
      %v2839 = vmul.f32 %v2836, 0.35355338
      %s2840 = scalar_lea.vmem %s959, 576
      %v2841 = vld [vmem:[%s2840] sm:$0xff]
      %v2842 = vld [vmem:[%s2840 + $0x8] sm:$0xff]
      %v2843 = vld [vmem:[%s2840 + $0x10] sm:$0xff]
      %v2844 = vld [vmem:[%s2840 + $0x18] sm:$0xff]
      %s2845 = scalar_lea.vmem %s963, 18
      %v2846 = vld [vmem:[%s2845] sm:$0x1]
      %v2848 = vperm.slane %v2846, 0
      %2850 = vmatpush.msra.mxu0 0.0
      %2851 = vmatpush.msra.mxu0 0.0
      %2852 = vmatpush.msra.mxu0 0.0
      %2853 = vmatpush.msra.mxu0 0.0
      %2854 = vmatpush.msra.mxu0 0.0
      %2855 = vmatpush.msra.mxu0 0.0
      %2856 = vmatpush.msra.mxu0 0.0
      %2857 = vmatpush.msra.mxu0 0.0
      %2858 = vmatpush.msra.mxu0 0.0
      %2859 = vmatpush.msra.mxu0 0.0
      %2860 = vmatpush.msra.mxu0 0.0
      %2861 = vmatpush.msra.mxu0 0.0
      %2862 = vmatpush.msra.mxu0 %v2844
      %2863 = vmatpush.msra.mxu0 %v2843
      %2864 = vmatpush.msra.mxu0 %v2842
      %2865 = vmatpush.msra.mxu0 %v2841
      %2866 = vmatmul.f32.gmra.mxu0 %v2372
      %v2867 = vpop.f32.mrf.mxu0
      %v2868 = vadd.f32 %v2848, %v2867
      %2869 = vmatmul.f32.gmra.mxu0 %v2375
      %v2870 = vpop.f32.mrf.mxu0
      %v2871 = vadd.f32 %v2848, %v2870
      %2872 = vdwg.mxu0
      %s2873 = scalar_lea.vmem %s959, 704
      %v2874 = vld [vmem:[%s2873] sm:$0xff]
      %v2875 = vld [vmem:[%s2873 + $0x8] sm:$0xff]
      %v2876 = vld [vmem:[%s2873 + $0x10] sm:$0xff]
      %v2877 = vld [vmem:[%s2873 + $0x18] sm:$0xff]
      %s2878 = scalar_lea.vmem %s963, 22
      %v2879 = vld [vmem:[%s2878] sm:$0x1]
      %v2881 = vperm.slane %v2879, 0
      %2883 = vmatpush.msra.mxu0 0.0
      %2884 = vmatpush.msra.mxu0 0.0
      %2885 = vmatpush.msra.mxu0 0.0
      %2886 = vmatpush.msra.mxu0 0.0
      %2887 = vmatpush.msra.mxu0 0.0
      %2888 = vmatpush.msra.mxu0 0.0
      %2889 = vmatpush.msra.mxu0 0.0
      %2890 = vmatpush.msra.mxu0 0.0
      %2891 = vmatpush.msra.mxu0 0.0
      %2892 = vmatpush.msra.mxu0 0.0
      %2893 = vmatpush.msra.mxu0 0.0
      %2894 = vmatpush.msra.mxu0 0.0
      %2895 = vmatpush.msra.mxu0 %v2877
      %2896 = vmatpush.msra.mxu0 %v2876
      %2897 = vmatpush.msra.mxu0 %v2875
      %2898 = vmatpush.msra.mxu0 %v2874
      %2899 = vmatmul.f32.gmra.mxu0 %v2372
      %v2900 = vpop.f32.mrf.mxu0
      %v2901 = vadd.f32 %v2881, %v2900
      %2902 = vmatmul.f32.gmra.mxu0 %v2375
      %v2903 = vpop.f32.mrf.mxu0
      %v2904 = vadd.f32 %v2881, %v2903
      %2905 = vdwg.mxu0
      %v2907 = vsel %vm1329, %v2838, 0
      %v2910 = vsel %vm1329, %v2839, 0
      %v2913 = vsel %vm1329, %v2868, 0
      %v2916 = vsel %vm1329, %v2871, 0
      %2918 = vmatpush.xpose.msra.mxu0 0.0
      %2919 = vmatpush.xpose.msra.mxu0 0.0
      %2920 = vmatpush.xpose.msra.mxu0 0.0
      %2921 = vmatpush.xpose.msra.mxu0 0.0
      %2922 = vmatpush.xpose.msra.mxu0 0.0
      %2923 = vmatpush.xpose.msra.mxu0 0.0
      %2924 = vmatpush.xpose.msra.mxu0 0.0
      %2925 = vmatpush.xpose.msra.mxu0 0.0
      %2926 = vmatpush.xpose.msra.mxu0 0.0
      %2927 = vmatpush.xpose.msra.mxu0 0.0
      %2928 = vmatpush.xpose.msra.mxu0 0.0
      %2929 = vmatpush.xpose.msra.mxu0 0.0
      %2930 = vmatpush.xpose.msra.mxu0 0.0
      %2931 = vmatpush.xpose.msra.mxu0 0.0
      %2932 = vmatpush.xpose.msra.mxu0 %v2916
      %2933 = vmatpush.xpose.msra.mxu0 %v2913
      %2934 = vmatmul.f32.gmra.mxu0 %v2907
      %v2935 = vpop.f32.mrf.mxu0
      %v2936 = vadd.f32 %v1014, %v2935
      %2937 = vmatmul.f32.gmra.mxu0 %v2910
      %v2938 = vpop.f32.mrf.mxu0
      %v2939 = vadd.f32 %v1015, %v2938
      %2940 = vdwg.mxu0
      %v2941 = vsel %vm1365, %v2936, -inf
      %2942 = vmax.xlane.f32.xlu0 %v2941
      %v2943 = vpop.xlane.xlu0 %2942
      %v2944 = vsel %vm1369, %v2939, -inf
      %2945 = vmax.xlane.f32.xlu0 %v2944
      %v2946 = vpop.xlane.xlu0 %2945
      %v2947 = vsub.f32 %v2936, %v2943
      %v2948 = vsub.f32 %v2939, %v2946
      %v2949 = vmul.f32 %v2947, 1.442695
      %v2950 = vpow.pop %v2949
      %v2951 = vmul.f32 %v2948, 1.442695
      %v2952 = vpow.pop %v2951
      %v2953 = vsel %vm1365, %v2950, 0.0
      %2954 = vadd.xlane.f32.xlu0 %v2953
      %v2955 = vpop.xlane.xlu0 %2954
      %v2956 = vsel %vm1369, %v2952, 0.0
      %2957 = vadd.xlane.f32.xlu0 %v2956
      %v2958 = vpop.xlane.xlu0 %2957
      %v2959 = vrcp.pop %v2955
      %v2960 = vrcp.pop %v2958
      %v2961 = vmul.f32 %v2950, %v2959
      %v2962 = vmul.f32 %v2952, %v2960
      %v2964 = vsel %vm1365, %v2961, 0
      %v2967 = vsel %vm1365, %v2962, 0
      %v2970 = vsel %vm1395, %v2904, 0
      %2972 = vmatpush.msra.mxu0 0.0
      %2973 = vmatpush.msra.mxu0 0.0
      %2974 = vmatpush.msra.mxu0 0.0
      %2975 = vmatpush.msra.mxu0 0.0
      %2976 = vmatpush.msra.mxu0 0.0
      %2977 = vmatpush.msra.mxu0 0.0
      %2978 = vmatpush.msra.mxu0 0.0
      %2979 = vmatpush.msra.mxu0 0.0
      %2980 = vmatpush.msra.mxu0 0.0
      %2981 = vmatpush.msra.mxu0 0.0
      %2982 = vmatpush.msra.mxu0 0.0
      %2983 = vmatpush.msra.mxu0 0.0
      %2984 = vmatpush.msra.mxu0 0.0
      %2985 = vmatpush.msra.mxu0 0.0
      %2986 = vmatpush.msra.mxu0 %v2970
      %2987 = vmatpush.msra.mxu0 %v2901
      %2988 = vmatmul.f32.gmra.mxu0 %v2964
      %v2989 = vpop.f32.mrf.mxu0
      %v2990 = vadd.f32 0.0, %v2989
      %2991 = vmatmul.f32.gmra.mxu0 %v2967
      %v2992 = vpop.f32.mrf.mxu0
      %v2993 = vadd.f32 0.0, %v2992
      %2994 = vdwg.mxu0
      %v2996 = vsel %vm1329, %v2990, 0
      %v2999 = vsel %vm1329, %v2993, 0
      %3001 = vmatpush.msra.mxu0 0.0
      %3002 = vmatpush.msra.mxu0 0.0
      %3003 = vmatpush.msra.mxu0 0.0
      %3004 = vmatpush.msra.mxu0 0.0
      %3005 = vmatpush.msra.mxu0 0.0
      %3006 = vmatpush.msra.mxu0 0.0
      %3007 = vmatpush.msra.mxu0 0.0
      %3008 = vmatpush.msra.mxu0 0.0
      %3009 = vmatpush.msra.mxu0 0.0
      %3010 = vmatpush.msra.mxu0 0.0
      %3011 = vmatpush.msra.mxu0 0.0
      %3012 = vmatpush.msra.mxu0 0.0
      %3013 = vmatpush.msra.mxu0 0.0
      %3014 = vmatpush.msra.mxu0 0.0
      %3015 = vmatpush.msra.mxu0 0.0
      %3016 = vmatpush.msra.mxu0 %v2359
      %3017 = vmatmul.f32.gmra.mxu0 %v2996
      %v3018 = vpop.f32.mrf.mxu0
      %v3019 = vadd.f32 0.0, %v3018
      %3020 = vmatmul.f32.gmra.mxu0 %v2999
      %v3021 = vpop.f32.mrf.mxu0
      %v3022 = vadd.f32 0.0, %v3021
      %3023 = vdwg.mxu0
      %v3024 = vadd.f32 %v2800, %v3019
      %v3025 = vadd.f32 %v2803, %v3022
      %s3026 = scalar_lea.vmem %s959, 480
      %v3027 = vld [vmem:[%s3026] sm:$0xff]
      %v3028 = vld [vmem:[%s3026 + $0x8] sm:$0xff]
      %v3029 = vld [vmem:[%s3026 + $0x10] sm:$0xff]
      %v3030 = vld [vmem:[%s3026 + $0x18] sm:$0xff]
      %s3031 = scalar_lea.vmem %s963, 15
      %v3032 = vld [vmem:[%s3031] sm:$0x1]
      %v3034 = vperm.slane %v3032, 0
      %3036 = vmatpush.msra.mxu0 0.0
      %3037 = vmatpush.msra.mxu0 0.0
      %3038 = vmatpush.msra.mxu0 0.0
      %3039 = vmatpush.msra.mxu0 0.0
      %3040 = vmatpush.msra.mxu0 0.0
      %3041 = vmatpush.msra.mxu0 0.0
      %3042 = vmatpush.msra.mxu0 0.0
      %3043 = vmatpush.msra.mxu0 0.0
      %3044 = vmatpush.msra.mxu0 0.0
      %3045 = vmatpush.msra.mxu0 0.0
      %3046 = vmatpush.msra.mxu0 0.0
      %3047 = vmatpush.msra.mxu0 0.0
      %3048 = vmatpush.msra.mxu0 %v3030
      %3049 = vmatpush.msra.mxu0 %v3029
      %3050 = vmatpush.msra.mxu0 %v3028
      %3051 = vmatpush.msra.mxu0 %v3027
      %3052 = vmatmul.f32.gmra.mxu0 %v2372
      %v3053 = vpop.f32.mrf.mxu0
      %v3054 = vadd.f32 %v3034, %v3053
      %3055 = vmatmul.f32.gmra.mxu0 %v2375
      %v3056 = vpop.f32.mrf.mxu0
      %v3057 = vadd.f32 %v3034, %v3056
      %3058 = vdwg.mxu0
      %v3059 = vmul.f32 %v3054, 0.35355338
      %v3060 = vmul.f32 %v3057, 0.35355338
      %s3061 = scalar_lea.vmem %s959, 608
      %v3062 = vld [vmem:[%s3061] sm:$0xff]
      %v3063 = vld [vmem:[%s3061 + $0x8] sm:$0xff]
      %v3064 = vld [vmem:[%s3061 + $0x10] sm:$0xff]
      %v3065 = vld [vmem:[%s3061 + $0x18] sm:$0xff]
      %s3066 = scalar_lea.vmem %s963, 19
      %v3067 = vld [vmem:[%s3066] sm:$0x1]
      %v3069 = vperm.slane %v3067, 0
      %3071 = vmatpush.msra.mxu0 0.0
      %3072 = vmatpush.msra.mxu0 0.0
      %3073 = vmatpush.msra.mxu0 0.0
      %3074 = vmatpush.msra.mxu0 0.0
      %3075 = vmatpush.msra.mxu0 0.0
      %3076 = vmatpush.msra.mxu0 0.0
      %3077 = vmatpush.msra.mxu0 0.0
      %3078 = vmatpush.msra.mxu0 0.0
      %3079 = vmatpush.msra.mxu0 0.0
      %3080 = vmatpush.msra.mxu0 0.0
      %3081 = vmatpush.msra.mxu0 0.0
      %3082 = vmatpush.msra.mxu0 0.0
      %3083 = vmatpush.msra.mxu0 %v3065
      %3084 = vmatpush.msra.mxu0 %v3064
      %3085 = vmatpush.msra.mxu0 %v3063
      %3086 = vmatpush.msra.mxu0 %v3062
      %3087 = vmatmul.f32.gmra.mxu0 %v2372
      %v3088 = vpop.f32.mrf.mxu0
      %v3089 = vadd.f32 %v3069, %v3088
      %3090 = vmatmul.f32.gmra.mxu0 %v2375
      %v3091 = vpop.f32.mrf.mxu0
      %v3092 = vadd.f32 %v3069, %v3091
      %3093 = vdwg.mxu0
      %s3094 = scalar_lea.vmem %s959, 736
      %v3095 = vld [vmem:[%s3094] sm:$0xff]
      %v3096 = vld [vmem:[%s3094 + $0x8] sm:$0xff]
      %v3097 = vld [vmem:[%s3094 + $0x10] sm:$0xff]
      %v3098 = vld [vmem:[%s3094 + $0x18] sm:$0xff]
      %s3099 = scalar_lea.vmem %s963, 23
      %v3100 = vld [vmem:[%s3099] sm:$0x1]
      %v3102 = vperm.slane %v3100, 0
      %3104 = vmatpush.msra.mxu0 0.0
      %3105 = vmatpush.msra.mxu0 0.0
      %3106 = vmatpush.msra.mxu0 0.0
      %3107 = vmatpush.msra.mxu0 0.0
      %3108 = vmatpush.msra.mxu0 0.0
      %3109 = vmatpush.msra.mxu0 0.0
      %3110 = vmatpush.msra.mxu0 0.0
      %3111 = vmatpush.msra.mxu0 0.0
      %3112 = vmatpush.msra.mxu0 0.0
      %3113 = vmatpush.msra.mxu0 0.0
      %3114 = vmatpush.msra.mxu0 0.0
      %3115 = vmatpush.msra.mxu0 0.0
      %3116 = vmatpush.msra.mxu0 %v3098
      %3117 = vmatpush.msra.mxu0 %v3097
      %3118 = vmatpush.msra.mxu0 %v3096
      %3119 = vmatpush.msra.mxu0 %v3095
      %3120 = vmatmul.f32.gmra.mxu0 %v2372
      %v3121 = vpop.f32.mrf.mxu0
      %v3122 = vadd.f32 %v3102, %v3121
      %3123 = vmatmul.f32.gmra.mxu0 %v2375
      %v3124 = vpop.f32.mrf.mxu0
      %v3125 = vadd.f32 %v3102, %v3124
      %3126 = vdwg.mxu0
      %v3128 = vsel %vm1329, %v3059, 0
      %v3131 = vsel %vm1329, %v3060, 0
      %v3134 = vsel %vm1329, %v3089, 0
      %v3137 = vsel %vm1329, %v3092, 0
      %3139 = vmatpush.xpose.msra.mxu0 0.0
      %3140 = vmatpush.xpose.msra.mxu0 0.0
      %3141 = vmatpush.xpose.msra.mxu0 0.0
      %3142 = vmatpush.xpose.msra.mxu0 0.0
      %3143 = vmatpush.xpose.msra.mxu0 0.0
      %3144 = vmatpush.xpose.msra.mxu0 0.0
      %3145 = vmatpush.xpose.msra.mxu0 0.0
      %3146 = vmatpush.xpose.msra.mxu0 0.0
      %3147 = vmatpush.xpose.msra.mxu0 0.0
      %3148 = vmatpush.xpose.msra.mxu0 0.0
      %3149 = vmatpush.xpose.msra.mxu0 0.0
      %3150 = vmatpush.xpose.msra.mxu0 0.0
      %3151 = vmatpush.xpose.msra.mxu0 0.0
      %3152 = vmatpush.xpose.msra.mxu0 0.0
      %3153 = vmatpush.xpose.msra.mxu0 %v3137
      %3154 = vmatpush.xpose.msra.mxu0 %v3134
      %3155 = vmatmul.f32.gmra.mxu0 %v3128
      %v3156 = vpop.f32.mrf.mxu0
      %v3157 = vadd.f32 %v1014, %v3156
      %3158 = vmatmul.f32.gmra.mxu0 %v3131
      %v3159 = vpop.f32.mrf.mxu0
      %v3160 = vadd.f32 %v1015, %v3159
      %3161 = vdwg.mxu0
      %v3162 = vsel %vm1365, %v3157, -inf
      %3163 = vmax.xlane.f32.xlu0 %v3162
      %v3164 = vpop.xlane.xlu0 %3163
      %v3165 = vsel %vm1369, %v3160, -inf
      %3166 = vmax.xlane.f32.xlu0 %v3165
      %v3167 = vpop.xlane.xlu0 %3166
      %v3168 = vsub.f32 %v3157, %v3164
      %v3169 = vsub.f32 %v3160, %v3167
      %v3170 = vmul.f32 %v3168, 1.442695
      %v3171 = vpow.pop %v3170
      %v3172 = vmul.f32 %v3169, 1.442695
      %v3173 = vpow.pop %v3172
      %v3174 = vsel %vm1365, %v3171, 0.0
      %3175 = vadd.xlane.f32.xlu0 %v3174
      %v3176 = vpop.xlane.xlu0 %3175
      %v3177 = vsel %vm1369, %v3173, 0.0
      %3178 = vadd.xlane.f32.xlu0 %v3177
      %v3179 = vpop.xlane.xlu0 %3178
      %v3180 = vrcp.pop %v3176
      %v3181 = vrcp.pop %v3179
      %v3182 = vmul.f32 %v3171, %v3180
      %v3183 = vmul.f32 %v3173, %v3181
      %v3185 = vsel %vm1365, %v3182, 0
      %v3188 = vsel %vm1365, %v3183, 0
      %v3191 = vsel %vm1395, %v3125, 0
      %3193 = vmatpush.msra.mxu0 0.0
      %3194 = vmatpush.msra.mxu0 0.0
      %3195 = vmatpush.msra.mxu0 0.0
      %3196 = vmatpush.msra.mxu0 0.0
      %3197 = vmatpush.msra.mxu0 0.0
      %3198 = vmatpush.msra.mxu0 0.0
      %3199 = vmatpush.msra.mxu0 0.0
      %3200 = vmatpush.msra.mxu0 0.0
      %3201 = vmatpush.msra.mxu0 0.0
      %3202 = vmatpush.msra.mxu0 0.0
      %3203 = vmatpush.msra.mxu0 0.0
      %3204 = vmatpush.msra.mxu0 0.0
      %3205 = vmatpush.msra.mxu0 0.0
      %3206 = vmatpush.msra.mxu0 0.0
      %3207 = vmatpush.msra.mxu0 %v3191
      %3208 = vmatpush.msra.mxu0 %v3122
      %3209 = vmatmul.f32.gmra.mxu0 %v3185
      %v3210 = vpop.f32.mrf.mxu0
      %v3211 = vadd.f32 0.0, %v3210
      %3212 = vmatmul.f32.gmra.mxu0 %v3188
      %v3213 = vpop.f32.mrf.mxu0
      %v3214 = vadd.f32 0.0, %v3213
      %3215 = vdwg.mxu0
      %v3217 = vsel %vm1329, %v3211, 0
      %v3220 = vsel %vm1329, %v3214, 0
      %3222 = vmatpush.msra.mxu0 0.0
      %3223 = vmatpush.msra.mxu0 0.0
      %3224 = vmatpush.msra.mxu0 0.0
      %3225 = vmatpush.msra.mxu0 0.0
      %3226 = vmatpush.msra.mxu0 0.0
      %3227 = vmatpush.msra.mxu0 0.0
      %3228 = vmatpush.msra.mxu0 0.0
      %3229 = vmatpush.msra.mxu0 0.0
      %3230 = vmatpush.msra.mxu0 0.0
      %3231 = vmatpush.msra.mxu0 0.0
      %3232 = vmatpush.msra.mxu0 0.0
      %3233 = vmatpush.msra.mxu0 0.0
      %3234 = vmatpush.msra.mxu0 0.0
      %3235 = vmatpush.msra.mxu0 0.0
      %3236 = vmatpush.msra.mxu0 0.0
      %3237 = vmatpush.msra.mxu0 %v2360
      %3238 = vmatmul.f32.gmra.mxu0 %v3217
      %v3239 = vpop.f32.mrf.mxu0
      %v3240 = vadd.f32 0.0, %v3239
      %3241 = vmatmul.f32.gmra.mxu0 %v3220
      %v3242 = vpop.f32.mrf.mxu0
      %v3243 = vadd.f32 0.0, %v3242
      %3244 = vdwg.mxu0
      %v3245 = vadd.f32 %v3024, %v3240
      %v3246 = vadd.f32 %v3025, %v3243
      %v3247 = vadd.f32 %v2296, %v3245
      %v3248 = vadd.f32 %v2297, %v3246
      %s3249 = scalar_lea.vmem %s972, 1
      %v3250 = vld [vmem:[%s3249] sm:$0x1]
      %v3252 = vperm.slane %v3250, 0
      %v3254 = vadd.f32 %v3247, %v3252
      %v3255 = vadd.f32 %v3248, %v3252
      %s3256 = scalar_lea.vmem %s976, 1
      %v3257 = vld [vmem:[%s3256] sm:$0x1]
      %s3258 = scalar_lea.vmem %s980, 1
      %v3259 = vld [vmem:[%s3258] sm:$0x1]
      %v3260 = vsel %vm1101, %v3254, 0.0
      %3261 = vadd.xlane.f32.xlu0 %v3260
      %v3262 = vpop.xlane.xlu0 %3261
      %v3263 = vsel %vm1105, %v3255, 0.0
      %3264 = vadd.xlane.f32.xlu0 %v3263
      %v3265 = vpop.xlane.xlu0 %3264
      %v3266 = vmul.f32 %v3262, %v1115
      %v3267 = vmul.f32 %v3265, %v1115
      %v3268 = vsub.f32 %v3254, %v3266
      %v3269 = vsub.f32 %v3255, %v3267
      %v3270 = vmul.f32 %v3268, %v3268
      %v3271 = vmul.f32 %v3269, %v3269
      %v3272 = vsel %vm1101, %v3270, 0.0
      %3273 = vadd.xlane.f32.xlu0 %v3272
      %v3274 = vpop.xlane.xlu0 %3273
      %v3275 = vsel %vm1105, %v3271, 0.0
      %3276 = vadd.xlane.f32.xlu0 %v3275
      %v3277 = vpop.xlane.xlu0 %3276
      %v3278 = vmul.f32 %v3274, %v1115
      %v3279 = vmul.f32 %v3277, %v1115
      %v3280 = vadd.f32 %v3278, 1e-05
      %v3281 = vadd.f32 %v3279, 1e-05
      %v3282 = vrsqrt.pop %v3280
      %v3283 = vmul.f32 %v3282, %v3280
      %v3284 = vmul.f32 %v3283, %v3282
      %v3285 = vmul.f32 0.5, %v3284
      %v3286 = vsub.f32 1.5, %v3285
      %v3287 = vmul.f32 %v3282, %v3286
      %vm3288 = vweird.f32 %v3280
      %vm3289 = vweird.f32 %v3282
      %vm3290 = vmor %vm3288, %vm3289
      %v3291 = vsel %vm3290, %v3282, %v3287
      %v3292 = vrsqrt.pop %v3281
      %v3293 = vmul.f32 %v3292, %v3281
      %v3294 = vmul.f32 %v3293, %v3292
      %v3295 = vmul.f32 0.5, %v3294
      %v3296 = vsub.f32 1.5, %v3295
      %v3297 = vmul.f32 %v3292, %v3296
      %vm3298 = vweird.f32 %v3281
      %vm3299 = vweird.f32 %v3292
      %vm3300 = vmor %vm3298, %vm3299
      %v3301 = vsel %vm3300, %v3292, %v3297
      %v3302 = vmul.f32 %v3268, %v3291
      %v3303 = vmul.f32 %v3269, %v3301
      %v3305 = vperm.slane %v3257, 0
      %v3307 = vmul.f32 %v3302, %v3305
      %v3308 = vmul.f32 %v3303, %v3305
      %v3310 = vperm.slane %v3259, 0
      %v3312 = vadd.f32 %v3307, %v3310
      %v3313 = vadd.f32 %v3308, %v3310
      %s3314 = scalar_lea.vmem %s985, 32
      %v3315 = vld [vmem:[%s3314] sm:$0xff]
      %v3316 = vld [vmem:[%s3314 + $0x8] sm:$0xff]
      %v3317 = vld [vmem:[%s3314 + $0x10] sm:$0xff]
      %v3318 = vld [vmem:[%s3314 + $0x18] sm:$0xff]
      %s3319 = scalar_lea.vmem %s989, 1
      %v3320 = vld [vmem:[%s3319] sm:$0x1]
      %v3322 = vperm.slane %v3320, 0
      %v3325 = vsel %vm1101, %v3312, 0
      %v3328 = vsel %vm1101, %v3313, 0
      %3330 = vmatpush.msra.mxu0 0.0
      %3331 = vmatpush.msra.mxu0 0.0
      %3332 = vmatpush.msra.mxu0 0.0
      %3333 = vmatpush.msra.mxu0 0.0
      %3334 = vmatpush.msra.mxu0 0.0
      %3335 = vmatpush.msra.mxu0 0.0
      %3336 = vmatpush.msra.mxu0 0.0
      %3337 = vmatpush.msra.mxu0 0.0
      %3338 = vmatpush.msra.mxu0 0.0
      %3339 = vmatpush.msra.mxu0 0.0
      %3340 = vmatpush.msra.mxu0 0.0
      %3341 = vmatpush.msra.mxu0 0.0
      %3342 = vmatpush.msra.mxu0 %v3318
      %3343 = vmatpush.msra.mxu0 %v3317
      %3344 = vmatpush.msra.mxu0 %v3316
      %3345 = vmatpush.msra.mxu0 %v3315
      %3346 = vmatmul.f32.gmra.mxu0 %v3325
      %v3347 = vpop.f32.mrf.mxu0
      %v3348 = vadd.f32 %v3322, %v3347
      %3349 = vmatmul.f32.gmra.mxu0 %v3328
      %v3350 = vpop.f32.mrf.mxu0
      %v3351 = vadd.f32 %v3322, %v3350
      %3352 = vdwg.mxu0
      %v3353 = vmul.f32 %v3348, 1.702
      %v3354 = vmul.f32 %v3351, 1.702
      %v3355 = vxor.u32 %v3353, 2147483648
      %v3356 = vxor.u32 %v3354, 2147483648
      %v3357 = vmul.f32 %v3355, 1.442695
      %v3358 = vpow.pop %v3357
      %v3359 = vmul.f32 %v3356, 1.442695
      %v3360 = vpow.pop %v3359
      %v3361 = vadd.f32 %v3358, 1.0
      %v3362 = vadd.f32 %v3360, 1.0
      %v3363 = vrcp.pop %v3361
      %v3364 = vmul.f32 %v3361, %v3363
      %v3365 = vsub.f32 1.0, %v3364
      %v3366 = vmul.f32 %v3363, %v3365
      %v3367 = vadd.f32 %v3363, %v3366
      %vm3368 = vweird.f32 %v3361
      %vm3369 = vweird.f32 %v3363
      %vm3370 = vmor %vm3368, %vm3369
      %v3371 = vsel %vm3370, %v3363, %v3367
      %v3372 = vand.u32 2147483647, %v3361
      %vm3373 = vcmp.eq.f32.partialorder %v3372, 8.507059e+37
      %v3374 = vand.u32 %v3361, 2147483648
      %v3375 = vor.u32 1.1754944e-38, %v3374
      %v3376 = vsel %vm3373, %v3375, %v3371
      %v3377 = vmul.f32 1.0, %v3376
      %v3378 = vrcp.pop %v3362
      %v3379 = vmul.f32 %v3362, %v3378
      %v3380 = vsub.f32 1.0, %v3379
      %v3381 = vmul.f32 %v3378, %v3380
      %v3382 = vadd.f32 %v3378, %v3381
      %vm3383 = vweird.f32 %v3362
      %vm3384 = vweird.f32 %v3378
      %vm3385 = vmor %vm3383, %vm3384
      %v3386 = vsel %vm3385, %v3378, %v3382
      %v3387 = vand.u32 2147483647, %v3362
      %vm3388 = vcmp.eq.f32.partialorder %v3387, 8.507059e+37
      %v3389 = vand.u32 %v3362, 2147483648
      %v3390 = vor.u32 1.1754944e-38, %v3389
      %v3391 = vsel %vm3388, %v3390, %v3386
      %v3392 = vmul.f32 1.0, %v3391
      %v3393 = vmul.f32 %v3348, %v3377
      %v3394 = vmul.f32 %v3351, %v3392
      %s3395 = scalar_lea.vmem %s994, 64
      %v3396 = vld [vmem:[%s3395] sm:$0xff]
      %v3397 = vld [vmem:[%s3395 + $0x8] sm:$0xff]
      %v3398 = vld [vmem:[%s3395 + $0x10] sm:$0xff]
      %v3399 = vld [vmem:[%s3395 + $0x18] sm:$0xff]
      %v3400 = vld [vmem:[%s3395 + $0x20] sm:$0xff]
      %v3401 = vld [vmem:[%s3395 + $0x28] sm:$0xff]
      %v3402 = vld [vmem:[%s3395 + $0x30] sm:$0xff]
      %v3403 = vld [vmem:[%s3395 + $0x38] sm:$0xff]
      %s3404 = scalar_lea.vmem %s998, 1
      %v3405 = vld [vmem:[%s3404] sm:$0x1]
      %v3407 = vperm.slane %v3405, 0
      %v3410 = vsel %vm1046, %v3393, 0
      %v3413 = vsel %vm1046, %v3394, 0
      %3415 = vmatpush.msra.mxu0 0.0
      %3416 = vmatpush.msra.mxu0 0.0
      %3417 = vmatpush.msra.mxu0 0.0
      %3418 = vmatpush.msra.mxu0 0.0
      %3419 = vmatpush.msra.mxu0 0.0
      %3420 = vmatpush.msra.mxu0 0.0
      %3421 = vmatpush.msra.mxu0 0.0
      %3422 = vmatpush.msra.mxu0 0.0
      %3423 = vmatpush.msra.mxu0 %v3403
      %3424 = vmatpush.msra.mxu0 %v3402
      %3425 = vmatpush.msra.mxu0 %v3401
      %3426 = vmatpush.msra.mxu0 %v3400
      %3427 = vmatpush.msra.mxu0 %v3399
      %3428 = vmatpush.msra.mxu0 %v3398
      %3429 = vmatpush.msra.mxu0 %v3397
      %3430 = vmatpush.msra.mxu0 %v3396
      %3431 = vmatmul.f32.gmra.mxu0 %v3410
      %v3432 = vpop.f32.mrf.mxu0
      %v3433 = vadd.f32 %v3407, %v3432
      %3434 = vmatmul.f32.gmra.mxu0 %v3413
      %v3435 = vpop.f32.mrf.mxu0
      %v3436 = vadd.f32 %v3407, %v3435
      %3437 = vdwg.mxu0
      %v3438 = vadd.f32 %v3254, %v3433
      %v3439 = vadd.f32 %v3255, %v3436
      %v3440 = vld [vmem:[%s3] sm:$0x3]
      %v3442 = vsel %vm1365, %v3440, 0
      %v3445 = vsel %vm1395, %v3439, 0
      %3447 = vmatpush.msra.mxu0 0.0
      %3448 = vmatpush.msra.mxu0 0.0
      %3449 = vmatpush.msra.mxu0 0.0
      %3450 = vmatpush.msra.mxu0 0.0
      %3451 = vmatpush.msra.mxu0 0.0
      %3452 = vmatpush.msra.mxu0 0.0
      %3453 = vmatpush.msra.mxu0 0.0
      %3454 = vmatpush.msra.mxu0 0.0
      %3455 = vmatpush.msra.mxu0 0.0
      %3456 = vmatpush.msra.mxu0 0.0
      %3457 = vmatpush.msra.mxu0 0.0
      %3458 = vmatpush.msra.mxu0 0.0
      %3459 = vmatpush.msra.mxu0 0.0
      %3460 = vmatpush.msra.mxu0 0.0
      %3461 = vmatpush.msra.mxu0 %v3445
      %3462 = vmatpush.msra.mxu0 %v3438
      %3463 = vmatmul.f32.gmra.mxu0 %v3442
      %v3464 = vpop.f32.mrf.mxu0
      %v3465 = vadd.f32 0.0, %v3464
      %3466 = vdwg.mxu0
      %v3467 = vld [vmem:[%s1001] sm:$0x1]
      %v3468 = vld [vmem:[%s1004] sm:$0x1]
      %v3469 = vsel %vm1105, %v3465, 0.0
      %3470 = vadd.xlane.f32.xlu0 %v3469
      %v3471 = vpop.xlane.xlu0 %3470
      %v3472 = vmul.f32 %v3471, %v1115
      %v3473 = vsub.f32 %v3465, %v3472
      %v3474 = vmul.f32 %v3473, %v3473
      %v3475 = vsel %vm1105, %v3474, 0.0
      %3476 = vadd.xlane.f32.xlu0 %v3475
      %v3477 = vpop.xlane.xlu0 %3476
      %v3478 = vmul.f32 %v3477, %v1115
      %v3479 = vadd.f32 %v3478, 1e-05
      %v3480 = vrsqrt.pop %v3479
      %v3481 = vmul.f32 %v3480, %v3479
      %v3482 = vmul.f32 %v3481, %v3480
      %v3483 = vmul.f32 0.5, %v3482
      %v3484 = vsub.f32 1.5, %v3483
      %v3485 = vmul.f32 %v3480, %v3484
      %vm3486 = vweird.f32 %v3479
      %vm3487 = vweird.f32 %v3480
      %vm3488 = vmor %vm3486, %vm3487
      %v3489 = vsel %vm3488, %v3480, %v3485
      %v3490 = vmul.f32 %v3473, %v3489
      %v3492 = vperm.slane %v3467, 0
      %v3494 = vmul.f32 %v3490, %v3492
      %v3496 = vperm.slane %v3468, 0
      %v3498 = vadd.f32 %v3494, %v3496
      %v3499 = vld [vmem:[%s1009] sm:$0xff]
      %v3500 = vld [vmem:[%s1009 + $0x8] sm:$0xff]
      %v3501 = vld [vmem:[%s1009 + $0x10] sm:$0xff]
      %v3502 = vld [vmem:[%s1009 + $0x18] sm:$0xff]
      %v3504 = vsel %vm1101, %v3498, 0
      %3506 = vmatpush.msra.mxu0 0.0
      %3507 = vmatpush.msra.mxu0 0.0
      %3508 = vmatpush.msra.mxu0 0.0
      %3509 = vmatpush.msra.mxu0 0.0
      %3510 = vmatpush.msra.mxu0 0.0
      %3511 = vmatpush.msra.mxu0 0.0
      %3512 = vmatpush.msra.mxu0 0.0
      %3513 = vmatpush.msra.mxu0 0.0
      %3514 = vmatpush.msra.mxu0 0.0
      %3515 = vmatpush.msra.mxu0 0.0
      %3516 = vmatpush.msra.mxu0 0.0
      %3517 = vmatpush.msra.mxu0 0.0
      %3518 = vmatpush.msra.mxu0 %v3502
      %3519 = vmatpush.msra.mxu0 %v3501
      %3520 = vmatpush.msra.mxu0 %v3500
      %3521 = vmatpush.msra.mxu0 %v3499
      %3522 = vmatmul.f32.gmra.mxu0 %v3504
      %v3523 = vpop.f32.mrf.mxu0
      %v3524 = vadd.f32 0.0, %v3523
      %3525 = vdwg.mxu0
      %vm3526 = vcmask 123904
      %3527 = vst.msk [vmem:[%s1013] sm:$0x3] %vm3526, %v3524
      %p3528 = scmp.lt.s32.totalorder %s33, 1
      %s3529 = scalar_select %p3528, %s33, 1
      %s3530 = smul.addr %s3529, 2
      %s3531 = scalar_lea.vmem %s22, %s3530
      // Predicated region
      $region109: #{vit_for_sketch_matching.2} parent=107 // pred_check
        %p3532 = pneg %p613
      $region110: #{vit_for_sketch_matching.2} parent=107 // pred_check_branch
        %3534 = sbr.rel (%p3532) target = $region112
      $region111: #{vit_for_sketch_matching.2} parent=107 // pred_region
        _
      $region112: #{vit_for_sketch_matching.2} parent=107 // pred_fallthru
        _
    $region108: #{vit_for_sketch_matching.2} parent=5 // pred_fallthru
      _
    %p3535 = scmp.le.s32.totalorder 2, %s28
    // Predicated region
    $region113: #{vit_for_sketch_matching.2} parent=5 // pred_check
      %p3536 = pneg %p3535
    $region114: #{vit_for_sketch_matching.2} parent=5 // pred_check_branch
      %3538 = sbr.rel (%p3536) target = $region116
    $region115: #{vit_for_sketch_matching.2} parent=5 // pred_region
      %s3539 = ssub.s32 %s28, 2
      // Predicated region
      $region117: #{vit_for_sketch_matching.2} parent=115 // pred_check
        %p3540 = pneg %p619
      $region118: #{vit_for_sketch_matching.2} parent=115 // pred_check_branch
        %3542 = sbr.rel (%p3540) target = $region120
      $region119: #{vit_for_sketch_matching.2} parent=115 // pred_region
        %p3543 = scmp.lt.s32.totalorder %s34, 1
        %s3544 = scalar_select %p3543, %s34, 1
        %s3545 = smul.addr %s3544, 2
        %s3546 = scalar_lea.vmem %s22, %s3545
      $region120: #{vit_for_sketch_matching.2} parent=115 // pred_fallthru
        _
    $region116: #{vit_for_sketch_matching.2} parent=5 // pred_fallthru
      _
  $region6: #{vit_for_sketch_matching.2} parent=0 // loop_footer
    %s32 = sadd.s32 1, %s28
  $region7: #{vit_for_sketch_matching.2} parent=0 // loop_footer_branch
    %27 = sbr.rel target = $region3
  $region8: #{vit_for_sketch_matching.2} parent=0 // loop_exit
    _

</llo_original>
